<compile_context>
chip_gen: v6e
topology: v6e:2x2x1
jax: 0.10.0
libtpu: 0.0.40
codegen_flags: <defaults>
</compile_context>

<pallas_src>
import functools

import numpy as np
import jax
import jax.numpy as jnp
from jax.experimental import pallas as pl
from jax.experimental.pallas import tpu as pltpu


def _attention_kernel(x_ref, wqk_ref, bqk_ref, relb_ref, wfin_ref, btot_ref,
                      o_ref, *, num_heads):
    # x_ref:    (TB, N, C)   block of TB windows (f32)
    # wqk_ref:  (C, 2C)      fused [Wq*scale | Wk] (bf16)
    # bqk_ref:  (1, 2C)      fused [bq*scale | bk] (f32)
    # relb_ref: (H, N, N)    relative position bias (f32, pre-gathered)
    # wfin_ref: (H*C, C)     vstack_h(Wv_h @ Wproj_h) (bf16)
    # btot_ref: (1, C)       sum_h bv_h @ Wproj_h + bproj (f32)
    # o_ref:    (TB, N, C)
    TB, N, C = x_ref.shape
    H = num_heads
    hd = C // H

    x = x_ref[...]
    x_bf = x.astype(jnp.bfloat16)                    # (TB, N, C) -- also the "V"
    x2_bf = x_bf.reshape(TB * N, C)

    # One fused Q/K projection dot (scale already folded into Wq / bq).
    qk = jnp.dot(x2_bf, wqk_ref[...], preferred_element_type=jnp.float32)
    qk = qk + bqk_ref[...]                           # (TB*N, 2C), f32

    u_parts = []
    # H is small and static -> fully unrolled.
    for h in range(H):
        q_h = qk[:, h * hd:(h + 1) * hd].reshape(TB, N, hd).astype(jnp.bfloat16)
        k_h = qk[:, C + h * hd:C + (h + 1) * hd].reshape(TB, N, hd).astype(jnp.bfloat16)

        # Per-head scores over all TB windows: (TB, N, N).
        s = jnp.einsum('bnd,bmd->bnm', q_h, k_h,
                       preferred_element_type=jnp.float32)
        s = s + relb_ref[h][None]

        # Softmax in f32 (v5e has no bf16 VPU/EUP path).
        s_max = jnp.max(s, axis=-1, keepdims=True)
        p = jnp.exp(s - s_max)
        denom = jnp.sum(p, axis=-1, keepdims=True)
        attn = p * pl.reciprocal(denom, approx=True)
        # attn_drop / proj_drop are identity at inference (p=0.0) -> skipped.

        # u_h = attn_h @ x : contraction K = N = 64 (Wv/Wproj folded out).
        u_h = jnp.einsum('bnm,bmc->bnc', attn.astype(jnp.bfloat16), x_bf,
                         preferred_element_type=jnp.float32)      # (TB, N, C)
        u_parts.append(u_h)

    # Stack heads on the lane axis -> single K = H*C = 128 projection dot.
    u_cat = jnp.concatenate(u_parts, axis=-1)                      # (TB, N, H*C)
    u2 = u_cat.reshape(TB * N, H * C).astype(jnp.bfloat16)

    out = jnp.dot(u2, wfin_ref[...], preferred_element_type=jnp.float32)
    out = out + btot_ref[...]
    o_ref[...] = out.reshape(TB, N, C).astype(o_ref.dtype)


@functools.lru_cache(maxsize=None)
def _relative_position_index(window_size):
    """Host-side (numpy) Swin-3D relative position index, cached per window size."""
    w = window_size
    coords = np.stack(np.meshgrid(np.arange(w), np.arange(w), np.arange(w),
                                  indexing='ij'))                    # (3, w, w, w)
    cf = coords.reshape(3, -1)                                       # (3, N)
    rel = cf[:, :, None] - cf[:, None, :]                            # (3, N, N)
    rel = rel.transpose(1, 2, 0) + (w - 1)                           # (N, N, 3)
    rel[:, :, 0] *= (2 * w - 1) * (2 * w - 1)
    rel[:, :, 1] *= (2 * w - 1)
    return rel.sum(-1).astype(np.int32)                              # (N, N)


def _choose_tb(B_, cap=32):
    """Pick windows-per-grid-step: amortize per-step overhead, keep grid even
    (v7x has 2 TensorCores on the grid axis), TB a multiple of 4 when padding."""
    if B_ <= cap:
        if B_ >= 8 and B_ % 2 == 0:
            return B_ // 2            # grid of exactly 2 -> both v7x TCs busy
        return B_                     # single step for tiny inputs
    g = -(-B_ // cap)                 # cdiv
    if g % 2 == 1:
        g += 1
    tb = -(-B_ // g)
    tb = min(cap, ((tb + 3) // 4) * 4)
    return max(1, tb)


@functools.partial(jax.jit, static_argnames=("window_size", "num_heads"))
def efficient_window_attention_3d(x, params, *, window_size, num_heads):
    """x: (B_, N, C) with N == window_size**3. Returns (B_, N, C)."""
    B_, N, C = x.shape
    assert N == window_size ** 3
    H = num_heads
    assert C % H == 0
    hd = C // H
    scale = hd ** (-0.5)

    # --- relative position bias: index precomputed on host, gather is one XLA op ---
    rel_index = _relative_position_index(window_size)                    # numpy (N, N)
    rel_bias = params['rel_pos_bias_table'][rel_index.reshape(-1)]       # (N*N, H)
    rel_bias = rel_bias.reshape(N, N, H).transpose(2, 0, 1)              # (H, N, N)
    rel_bias = rel_bias.astype(jnp.float32)

    # --- one-time wrapper-side weight re-layout / folding (parameters only) ---
    w_qkv = params['w_qkv'].astype(jnp.float32)      # (C, 3C), (in, out) layout
    b_qkv = params['b_qkv'][0].astype(jnp.float32)   # (3C,)
    w_proj = params['w_proj'].astype(jnp.float32)    # (C, C), (in, out) layout
    b_proj = params['b_proj'][0].astype(jnp.float32)  # (C,)

    # Fused [Wq*scale | Wk] projection (<=128 output columns -> 1 MXU pass on v5e too).
    wqk = jnp.concatenate([w_qkv[:, 0:C] * scale, w_qkv[:, C:2 * C]],
                          axis=1).astype(jnp.bfloat16)                   # (C, 2C)
    bqk = jnp.concatenate([b_qkv[0:C] * scale,
                           b_qkv[C:2 * C]]).reshape(1, 2 * C)            # (1, 2C) f32

    # Fold V projection and output projection:  Wfin[h*C:(h+1)*C, :] = Wv_h @ Wproj_h
    # (computed in f32 before the bf16 cast).  All biases collapse to one constant.
    wv = w_qkv[:, 2 * C:3 * C]                                           # (C, C)
    bv = b_qkv[2 * C:3 * C]                                              # (C,)
    wfin_blocks = []
    btot = b_proj
    for h in range(H):
        wp_h = w_proj[h * hd:(h + 1) * hd, :]                            # (hd, C)
        wfin_blocks.append(wv[:, h * hd:(h + 1) * hd] @ wp_h)            # (C, C)
        btot = btot + bv[h * hd:(h + 1) * hd] @ wp_h
    wfin = jnp.concatenate(wfin_blocks, axis=0).astype(jnp.bfloat16)     # (H*C, C)
    btot = btot.reshape(1, C).astype(jnp.float32)                        # (1, C)

    # --- batch TB windows per grid step (even grid length when possible) ---
    TB = _choose_tb(B_)
    grid_len = -(-B_ // TB)
    if grid_len > 1 and grid_len % 2 == 1:
        grid_len += 1                                  # keep both v7x TCs loaded
    Bp = grid_len * TB
    x_in = x if Bp == B_ else jnp.pad(x, ((0, Bp - B_), (0, 0), (0, 0)))

    kernel = functools.partial(_attention_kernel, num_heads=H)

    flops_per_win = (2 * N * C * (2 * C)          # fused QK projection
                     + 2 * H * N * N * hd         # scores
                     + 2 * H * N * N * C          # attn @ x
                     + 2 * N * (H * C) * C)       # folded output projection
    cost = pl.CostEstimate(flops=Bp * flops_per_win,
                           transcendentals=Bp * H * N * N,
                           bytes_accessed=2 * Bp * N * C * 4)

    out = pl.pallas_call(
        kernel,
        out_shape=jax.ShapeDtypeStruct((Bp, N, C), x.dtype),
        grid_spec=pltpu.PrefetchScalarGridSpec(
            num_scalar_prefetch=0,
            grid=(grid_len,),
            in_specs=[
                pl.BlockSpec((TB, N, C), lambda b: (b, 0, 0)),       # x block
                pl.BlockSpec((C, 2 * C), lambda b: (0, 0)),          # fused Wq|Wk
                pl.BlockSpec((1, 2 * C), lambda b: (0, 0)),          # fused bq|bk
                pl.BlockSpec((H, N, N), lambda b: (0, 0, 0)),        # rel pos bias
                pl.BlockSpec((H * C, C), lambda b: (0, 0)),          # folded V*proj
                pl.BlockSpec((1, C), lambda b: (0, 0)),              # total bias
            ],
            out_specs=pl.BlockSpec((TB, N, C), lambda b: (b, 0, 0)),
        ),
        compiler_params=pltpu.CompilerParams(
            dimension_semantics=("parallel",),
            vmem_limit_bytes=24 * 1024 * 1024,
        ),
        cost_estimate=cost,
    )(x_in, wqk, bqk, rel_bias, wfin, btot)

    return out[:B_] if Bp != B_ else out


def _reference(x, params, *, window_size, num_heads):
    """Pure-JAX f32 reference mirroring the PyTorch forward (sanity check)."""
    B_, N, C = x.shape
    hd = C // num_heads
    scale = hd ** (-0.5)
    qkv = x @ params['w_qkv'] + params['b_qkv'][0]
    qkv = qkv.reshape(B_, N, 3, num_heads, hd).transpose(2, 0, 3, 1, 4)
    q, k, v = qkv[0] * scale, qkv[1], qkv[2]
    attn = jnp.einsum('bhnd,bhmd->bhnm', q, k)

    idx = _relative_position_index(window_size)
    rb = params['rel_pos_bias_table'][idx.reshape(-1)].reshape(N, N, num_heads)
    rb = rb.transpose(2, 0, 1)
    attn = attn + rb[None]
    attn = jax.nn.softmax(attn, axis=-1)
    out = jnp.einsum('bhnm,bhmd->bhnd', attn, v).transpose(0, 2, 1, 3).reshape(B_, N, C)
    return out @ params['w_proj'] + params['b_proj'][0]


def init_params(key, dim, window_size, num_heads):
    k1, k2, k3, k4, k5 = jax.random.split(key, 5)
    num_rel = (2 * window_size - 1) ** 3
    return {
        # nn.Linear weights stored in (in, out) layout.
        'w_qkv': (jax.random.normal(k1, (dim, 3 * dim), jnp.float32) * 0.02),
        'b_qkv': (jax.random.normal(k2, (1, 3 * dim), jnp.float32) * 0.02),
        'w_proj': (jax.random.normal(k3, (dim, dim), jnp.float32) * 0.02),
        'b_proj': (jax.random.normal(k4, (1, dim), jnp.float32) * 0.02),
        # trunc_normal_(std=0.02) equivalent
        'rel_pos_bias_table': (jax.random.truncated_normal(
            k5, -2.0, 2.0, (num_rel, num_heads), jnp.float32) * 0.02),
    }


if __name__ == "__main__":
    dim = 32
    window_size = 4          # N = 64 tokens per window
    num_heads = 4
    B_ = 8                   # batch * num_windows -> TB=4, grid=2 (even)
    N = window_size ** 3

    key = jax.random.PRNGKey(0)
    kx, kp = jax.random.split(key)
    x = jax.random.normal(kx, (B_, N, dim), jnp.float32)
    params = init_params(kp, dim, window_size, num_heads)

    out = efficient_window_attention_3d(x, params,
                                        window_size=window_size,
                                        num_heads=num_heads)
    out = jax.block_until_ready(out)

    ref = _reference(x, params, window_size=window_size, num_heads=num_heads)
    assert out.shape == (B_, N, dim)

    # Relative-error check (bf16 MXU operands + approx EUP reciprocal; f32 softmax).
    max_err = float(jnp.max(jnp.abs(out - ref)))
    ref_scale = float(jnp.max(jnp.abs(ref))) + 1e-12
    rel_err = max_err / ref_scale
    assert rel_err < 2e-2, f"max abs err {max_err}, rel err {rel_err}"

    print("KERNEL_OK")
</pallas_src>

<mosaic_0001>
module attributes {stable_mosaic.version = 11 : i64} {
  func.func @_attention_kernel(%arg0: i32, %arg1: memref<4x64x32xf32, #tpu.memory_space<vmem>>, %arg2: memref<32x64xbf16, #tpu.memory_space<vmem>>, %arg3: memref<1x64xf32, #tpu.memory_space<vmem>>, %arg4: memref<4x64x64xf32, #tpu.memory_space<vmem>>, %arg5: memref<128x32xbf16, #tpu.memory_space<vmem>>, %arg6: memref<1x32xf32, #tpu.memory_space<vmem>>, %arg7: memref<4x64x32xf32, #tpu.memory_space<vmem>>) attributes {dimension_semantics = [#tpu.dimension_semantics<parallel>], iteration_bounds = array<i64: 2>, scalar_prefetch = 0 : i64, scratch_operands = 0 : i64, tpu.core_type = #tpu.core_type<tc>, window_params = [{transform_indices = @transform_0, window_bounds = array<i64: 4, 64, 32>}, {pipeline_mode = #tpu.pipeline_mode<synchronous>, transform_indices = @transform_1, window_bounds = array<i64: 32, 64>}, {pipeline_mode = #tpu.pipeline_mode<synchronous>, transform_indices = @transform_2, window_bounds = array<i64: 1, 64>}, {pipeline_mode = #tpu.pipeline_mode<synchronous>, transform_indices = @transform_3, window_bounds = array<i64: 4, 64, 64>}, {pipeline_mode = #tpu.pipeline_mode<synchronous>, transform_indices = @transform_4, window_bounds = array<i64: 128, 32>}, {pipeline_mode = #tpu.pipeline_mode<synchronous>, transform_indices = @transform_5, window_bounds = array<i64: 1, 32>}, {transform_indices = @transform_6, window_bounds = array<i64: 4, 64, 32>}]} {
    %c0 = arith.constant 0 : index
    %c0_0 = arith.constant 0 : index
    %c0_1 = arith.constant 0 : index
    %0 = vector.load %arg1[%c0, %c0_0, %c0_1] : memref<4x64x32xf32, #tpu.memory_space<vmem>>, vector<4x64x32xf32>
    %1 = arith.truncf %0 : vector<4x64x32xf32> to vector<4x64x32xbf16>
    %2 = vector.shape_cast %1 : vector<4x64x32xbf16> to vector<256x32xbf16>
    %c0_2 = arith.constant 0 : index
    %c0_3 = arith.constant 0 : index
    %3 = vector.load %arg2[%c0_2, %c0_3] : memref<32x64xbf16, #tpu.memory_space<vmem>>, vector<32x64xbf16>
    %cst = arith.constant dense<0.000000e+00> : vector<256x64xf32>
    %4 = tpu.matmul %2, %3, %cst {dimension_numbers = #tpu.dot_dimension_numbers<[1], [0], [0], [1], [0, 0, 1, 1], [], []>} : vector<256x32xbf16>, vector<32x64xbf16>, vector<256x64xf32> -> vector<256x64xf32>
    %c0_4 = arith.constant 0 : index
    %c0_5 = arith.constant 0 : index
    %5 = vector.load %arg3[%c0_4, %c0_5] : memref<1x64xf32, #tpu.memory_space<vmem>>, vector<1x64xf32>
    %6 = vector.broadcast %5 : vector<1x64xf32> to vector<256x64xf32>
    %7 = arith.addf %4, %6 : vector<256x64xf32>
    %8 = vector.extract_strided_slice %7 {offsets = [0, 0], sizes = [256, 8], strides = [1, 1]} : vector<256x64xf32> to vector<256x8xf32>
    %9 = vector.shape_cast %8 : vector<256x8xf32> to vector<4x64x8xf32>
    %10 = arith.truncf %9 : vector<4x64x8xf32> to vector<4x64x8xbf16>
    %11 = vector.extract_strided_slice %7 {offsets = [0, 32], sizes = [256, 8], strides = [1, 1]} : vector<256x64xf32> to vector<256x8xf32>
    %12 = vector.shape_cast %11 : vector<256x8xf32> to vector<4x64x8xf32>
    %13 = arith.truncf %12 : vector<4x64x8xf32> to vector<4x64x8xbf16>
    "tpu.trace_start"() <{level = 10 : i32, message = "bnd,bmd->bnm"}> : () -> ()
    %cst_6 = arith.constant dense<0.000000e+00> : vector<4x64x64xf32>
    %14 = tpu.matmul %10, %13, %cst_6 {dimension_numbers = #tpu.dot_dimension_numbers<[2], [2], [1], [1], [0, 0, 0, 1, 1, 1], [0], [0]>} : vector<4x64x8xbf16>, vector<4x64x8xbf16>, vector<4x64x64xf32> -> vector<4x64x64xf32>
    "tpu.trace_stop"() : () -> ()
    %c0_7 = arith.constant 0 : index
    %c0_8 = arith.constant 0 : index
    %c0_9 = arith.constant 0 : index
    %15 = vector.load %arg4[%c0_7, %c0_8, %c0_9] : memref<4x64x64xf32, #tpu.memory_space<vmem>>, vector<1x64x64xf32>
    %16 = vector.shape_cast %15 : vector<1x64x64xf32> to vector<64x64xf32>
    %17 = vector.shape_cast %16 : vector<64x64xf32> to vector<1x64x64xf32>
    %18 = vector.broadcast %17 : vector<1x64x64xf32> to vector<4x64x64xf32>
    %19 = arith.addf %14, %18 : vector<4x64x64xf32>
    %cst_10 = arith.constant dense<0xFF800000> : vector<4x64xf32>
    %20 = vector.multi_reduction <maximumf>, %19, %cst_10 [2] : vector<4x64x64xf32> to vector<4x64xf32>
    %21 = vector.shape_cast %20 : vector<4x64xf32> to vector<4x64x1xf32>
    %22 = vector.broadcast %21 : vector<4x64x1xf32> to vector<4x64x64xf32>
    %23 = arith.subf %19, %22 : vector<4x64x64xf32>
    %24 = math.exp %23 : vector<4x64x64xf32>
    %cst_11 = arith.constant dense<0.000000e+00> : vector<4x64xf32>
    %25 = vector.multi_reduction <add>, %24, %cst_11 [2] : vector<4x64x64xf32> to vector<4x64xf32>
    %26 = vector.shape_cast %25 : vector<4x64xf32> to vector<4x64x1xf32>
    %27 = tpu.reciprocal %26 {approx = true} : vector<4x64x1xf32> -> vector<4x64x1xf32>
    %28 = vector.broadcast %27 : vector<4x64x1xf32> to vector<4x64x64xf32>
    %29 = arith.mulf %24, %28 : vector<4x64x64xf32>
    %30 = arith.truncf %29 : vector<4x64x64xf32> to vector<4x64x64xbf16>
    "tpu.trace_start"() <{level = 10 : i32, message = "bnm,bmc->bnc"}> : () -> ()
    %cst_12 = arith.constant dense<0.000000e+00> : vector<4x64x32xf32>
    %31 = tpu.matmul %30, %1, %cst_12 {dimension_numbers = #tpu.dot_dimension_numbers<[2], [1], [1], [2], [0, 0, 0, 1, 1, 2], [0], [0]>} : vector<4x64x64xbf16>, vector<4x64x32xbf16>, vector<4x64x32xf32> -> vector<4x64x32xf32>
    "tpu.trace_stop"() : () -> ()
    %32 = vector.extract_strided_slice %7 {offsets = [0, 8], sizes = [256, 8], strides = [1, 1]} : vector<256x64xf32> to vector<256x8xf32>
    %33 = vector.shape_cast %32 : vector<256x8xf32> to vector<4x64x8xf32>
    %34 = arith.truncf %33 : vector<4x64x8xf32> to vector<4x64x8xbf16>
    %35 = vector.extract_strided_slice %7 {offsets = [0, 40], sizes = [256, 8], strides = [1, 1]} : vector<256x64xf32> to vector<256x8xf32>
    %36 = vector.shape_cast %35 : vector<256x8xf32> to vector<4x64x8xf32>
    %37 = arith.truncf %36 : vector<4x64x8xf32> to vector<4x64x8xbf16>
    "tpu.trace_start"() <{level = 10 : i32, message = "bnd,bmd->bnm"}> : () -> ()
    %cst_13 = arith.constant dense<0.000000e+00> : vector<4x64x64xf32>
    %38 = tpu.matmul %34, %37, %cst_13 {dimension_numbers = #tpu.dot_dimension_numbers<[2], [2], [1], [1], [0, 0, 0, 1, 1, 1], [0], [0]>} : vector<4x64x8xbf16>, vector<4x64x8xbf16>, vector<4x64x64xf32> -> vector<4x64x64xf32>
    "tpu.trace_stop"() : () -> ()
    %c1 = arith.constant 1 : index
    %c0_14 = arith.constant 0 : index
    %c0_15 = arith.constant 0 : index
    %39 = vector.load %arg4[%c1, %c0_14, %c0_15] : memref<4x64x64xf32, #tpu.memory_space<vmem>>, vector<1x64x64xf32>
    %40 = vector.shape_cast %39 : vector<1x64x64xf32> to vector<64x64xf32>
    %41 = vector.shape_cast %40 : vector<64x64xf32> to vector<1x64x64xf32>
    %42 = vector.broadcast %41 : vector<1x64x64xf32> to vector<4x64x64xf32>
    %43 = arith.addf %38, %42 : vector<4x64x64xf32>
    %cst_16 = arith.constant dense<0xFF800000> : vector<4x64xf32>
    %44 = vector.multi_reduction <maximumf>, %43, %cst_16 [2] : vector<4x64x64xf32> to vector<4x64xf32>
    %45 = vector.shape_cast %44 : vector<4x64xf32> to vector<4x64x1xf32>
    %46 = vector.broadcast %45 : vector<4x64x1xf32> to vector<4x64x64xf32>
    %47 = arith.subf %43, %46 : vector<4x64x64xf32>
    %48 = math.exp %47 : vector<4x64x64xf32>
    %cst_17 = arith.constant dense<0.000000e+00> : vector<4x64xf32>
    %49 = vector.multi_reduction <add>, %48, %cst_17 [2] : vector<4x64x64xf32> to vector<4x64xf32>
    %50 = vector.shape_cast %49 : vector<4x64xf32> to vector<4x64x1xf32>
    %51 = tpu.reciprocal %50 {approx = true} : vector<4x64x1xf32> -> vector<4x64x1xf32>
    %52 = vector.broadcast %51 : vector<4x64x1xf32> to vector<4x64x64xf32>
    %53 = arith.mulf %48, %52 : vector<4x64x64xf32>
    %54 = arith.truncf %53 : vector<4x64x64xf32> to vector<4x64x64xbf16>
    "tpu.trace_start"() <{level = 10 : i32, message = "bnm,bmc->bnc"}> : () -> ()
    %cst_18 = arith.constant dense<0.000000e+00> : vector<4x64x32xf32>
    %55 = tpu.matmul %54, %1, %cst_18 {dimension_numbers = #tpu.dot_dimension_numbers<[2], [1], [1], [2], [0, 0, 0, 1, 1, 2], [0], [0]>} : vector<4x64x64xbf16>, vector<4x64x32xbf16>, vector<4x64x32xf32> -> vector<4x64x32xf32>
    "tpu.trace_stop"() : () -> ()
    %56 = vector.extract_strided_slice %7 {offsets = [0, 16], sizes = [256, 8], strides = [1, 1]} : vector<256x64xf32> to vector<256x8xf32>
    %57 = vector.shape_cast %56 : vector<256x8xf32> to vector<4x64x8xf32>
    %58 = arith.truncf %57 : vector<4x64x8xf32> to vector<4x64x8xbf16>
    %59 = vector.extract_strided_slice %7 {offsets = [0, 48], sizes = [256, 8], strides = [1, 1]} : vector<256x64xf32> to vector<256x8xf32>
    %60 = vector.shape_cast %59 : vector<256x8xf32> to vector<4x64x8xf32>
    %61 = arith.truncf %60 : vector<4x64x8xf32> to vector<4x64x8xbf16>
    "tpu.trace_start"() <{level = 10 : i32, message = "bnd,bmd->bnm"}> : () -> ()
    %cst_19 = arith.constant dense<0.000000e+00> : vector<4x64x64xf32>
    %62 = tpu.matmul %58, %61, %cst_19 {dimension_numbers = #tpu.dot_dimension_numbers<[2], [2], [1], [1], [0, 0, 0, 1, 1, 1], [0], [0]>} : vector<4x64x8xbf16>, vector<4x64x8xbf16>, vector<4x64x64xf32> -> vector<4x64x64xf32>
    "tpu.trace_stop"() : () -> ()
    %c2 = arith.constant 2 : index
    %c0_20 = arith.constant 0 : index
    %c0_21 = arith.constant 0 : index
    %63 = vector.load %arg4[%c2, %c0_20, %c0_21] : memref<4x64x64xf32, #tpu.memory_space<vmem>>, vector<1x64x64xf32>
    %64 = vector.shape_cast %63 : vector<1x64x64xf32> to vector<64x64xf32>
    %65 = vector.shape_cast %64 : vector<64x64xf32> to vector<1x64x64xf32>
    %66 = vector.broadcast %65 : vector<1x64x64xf32> to vector<4x64x64xf32>
    %67 = arith.addf %62, %66 : vector<4x64x64xf32>
    %cst_22 = arith.constant dense<0xFF800000> : vector<4x64xf32>
    %68 = vector.multi_reduction <maximumf>, %67, %cst_22 [2] : vector<4x64x64xf32> to vector<4x64xf32>
    %69 = vector.shape_cast %68 : vector<4x64xf32> to vector<4x64x1xf32>
    %70 = vector.broadcast %69 : vector<4x64x1xf32> to vector<4x64x64xf32>
    %71 = arith.subf %67, %70 : vector<4x64x64xf32>
    %72 = math.exp %71 : vector<4x64x64xf32>
    %cst_23 = arith.constant dense<0.000000e+00> : vector<4x64xf32>
    %73 = vector.multi_reduction <add>, %72, %cst_23 [2] : vector<4x64x64xf32> to vector<4x64xf32>
    %74 = vector.shape_cast %73 : vector<4x64xf32> to vector<4x64x1xf32>
    %75 = tpu.reciprocal %74 {approx = true} : vector<4x64x1xf32> -> vector<4x64x1xf32>
    %76 = vector.broadcast %75 : vector<4x64x1xf32> to vector<4x64x64xf32>
    %77 = arith.mulf %72, %76 : vector<4x64x64xf32>
    %78 = arith.truncf %77 : vector<4x64x64xf32> to vector<4x64x64xbf16>
    "tpu.trace_start"() <{level = 10 : i32, message = "bnm,bmc->bnc"}> : () -> ()
    %cst_24 = arith.constant dense<0.000000e+00> : vector<4x64x32xf32>
    %79 = tpu.matmul %78, %1, %cst_24 {dimension_numbers = #tpu.dot_dimension_numbers<[2], [1], [1], [2], [0, 0, 0, 1, 1, 2], [0], [0]>} : vector<4x64x64xbf16>, vector<4x64x32xbf16>, vector<4x64x32xf32> -> vector<4x64x32xf32>
    "tpu.trace_stop"() : () -> ()
    %80 = vector.extract_strided_slice %7 {offsets = [0, 24], sizes = [256, 8], strides = [1, 1]} : vector<256x64xf32> to vector<256x8xf32>
    %81 = vector.shape_cast %80 : vector<256x8xf32> to vector<4x64x8xf32>
    %82 = arith.truncf %81 : vector<4x64x8xf32> to vector<4x64x8xbf16>
    %83 = vector.extract_strided_slice %7 {offsets = [0, 56], sizes = [256, 8], strides = [1, 1]} : vector<256x64xf32> to vector<256x8xf32>
    %84 = vector.shape_cast %83 : vector<256x8xf32> to vector<4x64x8xf32>
    %85 = arith.truncf %84 : vector<4x64x8xf32> to vector<4x64x8xbf16>
    "tpu.trace_start"() <{level = 10 : i32, message = "bnd,bmd->bnm"}> : () -> ()
    %cst_25 = arith.constant dense<0.000000e+00> : vector<4x64x64xf32>
    %86 = tpu.matmul %82, %85, %cst_25 {dimension_numbers = #tpu.dot_dimension_numbers<[2], [2], [1], [1], [0, 0, 0, 1, 1, 1], [0], [0]>} : vector<4x64x8xbf16>, vector<4x64x8xbf16>, vector<4x64x64xf32> -> vector<4x64x64xf32>
    "tpu.trace_stop"() : () -> ()
    %c3 = arith.constant 3 : index
    %c0_26 = arith.constant 0 : index
    %c0_27 = arith.constant 0 : index
    %87 = vector.load %arg4[%c3, %c0_26, %c0_27] : memref<4x64x64xf32, #tpu.memory_space<vmem>>, vector<1x64x64xf32>
    %88 = vector.shape_cast %87 : vector<1x64x64xf32> to vector<64x64xf32>
    %89 = vector.shape_cast %88 : vector<64x64xf32> to vector<1x64x64xf32>
    %90 = vector.broadcast %89 : vector<1x64x64xf32> to vector<4x64x64xf32>
    %91 = arith.addf %86, %90 : vector<4x64x64xf32>
    %cst_28 = arith.constant dense<0xFF800000> : vector<4x64xf32>
    %92 = vector.multi_reduction <maximumf>, %91, %cst_28 [2] : vector<4x64x64xf32> to vector<4x64xf32>
    %93 = vector.shape_cast %92 : vector<4x64xf32> to vector<4x64x1xf32>
    %94 = vector.broadcast %93 : vector<4x64x1xf32> to vector<4x64x64xf32>
    %95 = arith.subf %91, %94 : vector<4x64x64xf32>
    %96 = math.exp %95 : vector<4x64x64xf32>
    %cst_29 = arith.constant dense<0.000000e+00> : vector<4x64xf32>
    %97 = vector.multi_reduction <add>, %96, %cst_29 [2] : vector<4x64x64xf32> to vector<4x64xf32>
    %98 = vector.shape_cast %97 : vector<4x64xf32> to vector<4x64x1xf32>
    %99 = tpu.reciprocal %98 {approx = true} : vector<4x64x1xf32> -> vector<4x64x1xf32>
    %100 = vector.broadcast %99 : vector<4x64x1xf32> to vector<4x64x64xf32>
    %101 = arith.mulf %96, %100 : vector<4x64x64xf32>
    %102 = arith.truncf %101 : vector<4x64x64xf32> to vector<4x64x64xbf16>
    "tpu.trace_start"() <{level = 10 : i32, message = "bnm,bmc->bnc"}> : () -> ()
    %cst_30 = arith.constant dense<0.000000e+00> : vector<4x64x32xf32>
    %103 = tpu.matmul %102, %1, %cst_30 {dimension_numbers = #tpu.dot_dimension_numbers<[2], [1], [1], [2], [0, 0, 0, 1, 1, 2], [0], [0]>} : vector<4x64x64xbf16>, vector<4x64x32xbf16>, vector<4x64x32xf32> -> vector<4x64x32xf32>
    "tpu.trace_stop"() : () -> ()
    %104 = tpu.concatenate %31, %55, %79, %103 in 2 : vector<4x64x32xf32>, vector<4x64x32xf32>, vector<4x64x32xf32>, vector<4x64x32xf32> -> vector<4x64x128xf32>
    %105 = vector.shape_cast %104 : vector<4x64x128xf32> to vector<256x128xf32>
    %106 = arith.truncf %105 : vector<256x128xf32> to vector<256x128xbf16>
    %c0_31 = arith.constant 0 : index
    %c0_32 = arith.constant 0 : index
    %107 = vector.load %arg5[%c0_31, %c0_32] : memref<128x32xbf16, #tpu.memory_space<vmem>>, vector<128x32xbf16>
    %cst_33 = arith.constant dense<0.000000e+00> : vector<256x32xf32>
    %108 = tpu.matmul %106, %107, %cst_33 {dimension_numbers = #tpu.dot_dimension_numbers<[1], [0], [0], [1], [0, 0, 1, 1], [], []>} : vector<256x128xbf16>, vector<128x32xbf16>, vector<256x32xf32> -> vector<256x32xf32>
    %c0_34 = arith.constant 0 : index
    %c0_35 = arith.constant 0 : index
    %109 = vector.load %arg6[%c0_34, %c0_35] : memref<1x32xf32, #tpu.memory_space<vmem>>, vector<1x32xf32>
    %110 = vector.broadcast %109 : vector<1x32xf32> to vector<256x32xf32>
    %111 = arith.addf %108, %110 : vector<256x32xf32>
    %112 = vector.shape_cast %111 : vector<256x32xf32> to vector<4x64x32xf32>
    %c0_36 = arith.constant 0 : index
    %c0_37 = arith.constant 0 : index
    %c0_38 = arith.constant 0 : index
    %113 = vector.load %arg7[%c0_36, %c0_37, %c0_38] : memref<4x64x32xf32, #tpu.memory_space<vmem>>, vector<4x64x32xf32>
    tpu.vector_store %arg7[%c0_36, %c0_37, %c0_38], %112 {strides = array<i32>} : memref<4x64x32xf32, #tpu.memory_space<vmem>>, vector<4x64x32xf32>,
    return
  }
  func.func @transform_0(%arg0: i32) -> (i32, i32, i32) {
    %c0_i32 = arith.constant 0 : i32
    %c0_i32_0 = arith.constant 0 : i32
    %c0_i32_1 = arith.constant 0 : i32
    return %arg0, %c0_i32, %c0_i32_0 : i32, i32, i32
  }
  func.func @transform_1(%arg0: i32) -> (i32, i32) {
    %c0_i32 = arith.constant 0 : i32
    %c0_i32_0 = arith.constant 0 : i32
    %c0_i32_1 = arith.constant 0 : i32
    return %c0_i32, %c0_i32_0 : i32, i32
  }
  func.func @transform_2(%arg0: i32) -> (i32, i32) {
    %c0_i32 = arith.constant 0 : i32
    %c0_i32_0 = arith.constant 0 : i32
    %c0_i32_1 = arith.constant 0 : i32
    return %c0_i32, %c0_i32_0 : i32, i32
  }
  func.func @transform_3(%arg0: i32) -> (i32, i32, i32) {
    %c0_i32 = arith.constant 0 : i32
    %c0_i32_0 = arith.constant 0 : i32
    %c0_i32_1 = arith.constant 0 : i32
    %c0_i32_2 = arith.constant 0 : i32
    return %c0_i32, %c0_i32_0, %c0_i32_1 : i32, i32, i32
  }
  func.func @transform_4(%arg0: i32) -> (i32, i32) {
    %c0_i32 = arith.constant 0 : i32
    %c0_i32_0 = arith.constant 0 : i32
    %c0_i32_1 = arith.constant 0 : i32
    return %c0_i32, %c0_i32_0 : i32, i32
  }
  func.func @transform_5(%arg0: i32) -> (i32, i32) {
    %c0_i32 = arith.constant 0 : i32
    %c0_i32_0 = arith.constant 0 : i32
    %c0_i32_1 = arith.constant 0 : i32
    return %c0_i32, %c0_i32_0 : i32, i32
  }
  func.func @transform_6(%arg0: i32) -> (i32, i32, i32) {
    %c0_i32 = arith.constant 0 : i32
    %c0_i32_0 = arith.constant 0 : i32
    %c0_i32_1 = arith.constant 0 : i32
    return %arg0, %c0_i32, %c0_i32_0 : i32, i32, i32
  }
}

</mosaic_0001>

<llo_original>
// kernel: efficient_window_attention_3d.1
$region0: #{efficient_window_attention_3d.1}
  #allocation0 [shape = 'u32[]', space=smem, size = 0x4, offset = 0x4, fixed_abs, tag = 'smem constant byte address 0x4 - core index']
  #allocation1 [shape = 'u32[144,128]{1,0:T(1,128)}', space=vmem, size = 0x12000, scoped, tag = 'internal scratch']
  %s0 = inlined_call_operand.vmem [shape: f32[8,64,32], index: 0, kind: input, shape index: {}]
  %s1 = inlined_call_operand.vmem [shape: bf16[32,64], index: 1, kind: input, shape index: {}]
  %s2 = inlined_call_operand.vmem [shape: f32[1,64], index: 2, kind: input, shape index: {}]
  %s3 = inlined_call_operand.vmem [shape: f32[4,64,64], index: 3, kind: input, shape index: {}]
  %s4 = inlined_call_operand.vmem [shape: bf16[128,32], index: 4, kind: input, shape index: {}]
  %s5 = inlined_call_operand.vmem [shape: f32[1,32], index: 5, kind: input, shape index: {}]
  %s6 = inlined_call_operand.vmem [shape: f32[8,64,32], index: 6, kind: output, shape index: {}]
  %s7 = sld [smem:[#allocation0]]
  $region57: #{efficient_window_attention_3d.1} parent=0
    _
  %s9 = ssub.s32 1, %s7
  %s10 = scalar_select 0, %s9, %s7
  loop: start=0, step=1, limit=4
  $region2: #{efficient_window_attention_3d.1} parent=0 // loop_pre_header
    _
  $region3: #{efficient_window_attention_3d.1} parent=0 // loop_header
    %s12 = sphi 0, %s16
    %p13 = scmp.ge.s32.totalorder %s12, 4
    %s22 = sphi 0, %s24
    %s25 = sphi 0, %s22
    %s26 = sphi 0, %s25
    %s42 = sphi 0, %s26
    %s46 = sphi 0, %s46
    %s48 = sphi 0, %s46
    %s49 = sphi 0, %s48
    %s63 = sphi 0, %s49
    %s67 = sphi 0, %s67
    %s69 = sphi 0, %s67
    %s70 = sphi 0, %s69
    %s84 = sphi 0, %s70
    %s88 = sphi 0, %s88
    %s90 = sphi 0, %s88
    %s91 = sphi 0, %s90
    %s105 = sphi 0, %s91
    %s109 = sphi 0, %s109
    %s111 = sphi 0, %s109
    %s112 = sphi 0, %s111
    %s126 = sphi 0, %s112
    %s130 = sphi 0, %s130
    %s132 = sphi 0, %s130
    %s133 = sphi 0, %s132
    %s147 = sphi 0, %s133
    %s153 = sphi 0, %s155
    %s156 = sphi 0, %s153
    %s157 = sphi 0, %s156
    %s173 = sphi 0, %s157
  $region4: #{efficient_window_attention_3d.1} parent=0 // loop_header_branch
    %15 = sbr.rel (%p13) target = $region8
  $region5: #{efficient_window_attention_3d.1} parent=0 // loop_body
    %s17 = ssub.s32 %s12, 1
    %s18 = ssub.s32 %s12, 2
    %s19 = sadd.s32 %s12, 1
    %s20 = ssub.s32 %s12, %s19
    %p21 = scmp.eq.s32.totalorder %s20, 0
    %s23 = sadd.s32 %s22, 1
    %s24 = scalar_select %p21, %s22, %s23
    %p27 = pneg %p21
    %p28 = scmp.eq.s32.totalorder %s12, 1
    %p29 = por %p27, %p28
    %p30 = scmp.ne.s32.totalorder %s22, %s25
    %p31 = scmp.eq.s32.totalorder %s12, 0
    %p32 = por %p30, %p31
    %p33 = scmp.ne.s32.totalorder %s22, %s25
    %p34 = scmp.eq.s32.totalorder %s17, 1
    %p35 = por %p33, %p34
    %p36 = scmp.ne.s32.totalorder %s25, %s26
    %p37 = scmp.eq.s32.totalorder %s17, 0
    %p38 = por %p36, %p37
    %p39 = scmp.ne.s32.totalorder %s25, %s26
    %p40 = scmp.eq.s32.totalorder %s18, 1
    %p41 = por %p39, %p40
    %p43 = scmp.ne.s32.totalorder %s26, %s42
    %p44 = scmp.eq.s32.totalorder %s18, 0
    %p45 = por %p43, %p44
    %s47 = sadd.s32 %s46, 1
    %p50 = scmp.eq.s32.totalorder %s12, 1
    %p51 = scmp.ne.s32.totalorder %s46, %s48
    %p52 = scmp.eq.s32.totalorder %s12, 0
    %p53 = por %p51, %p52
    %p54 = scmp.ne.s32.totalorder %s46, %s48
    %p55 = scmp.eq.s32.totalorder %s17, 1
    %p56 = por %p54, %p55
    %p57 = scmp.ne.s32.totalorder %s48, %s49
    %p58 = scmp.eq.s32.totalorder %s17, 0
    %p59 = por %p57, %p58
    %p60 = scmp.ne.s32.totalorder %s48, %s49
    %p61 = scmp.eq.s32.totalorder %s18, 1
    %p62 = por %p60, %p61
    %p64 = scmp.ne.s32.totalorder %s49, %s63
    %p65 = scmp.eq.s32.totalorder %s18, 0
    %p66 = por %p64, %p65
    %s68 = sadd.s32 %s67, 1
    %p71 = scmp.eq.s32.totalorder %s12, 1
    %p72 = scmp.ne.s32.totalorder %s67, %s69
    %p73 = scmp.eq.s32.totalorder %s12, 0
    %p74 = por %p72, %p73
    %p75 = scmp.ne.s32.totalorder %s67, %s69
    %p76 = scmp.eq.s32.totalorder %s17, 1
    %p77 = por %p75, %p76
    %p78 = scmp.ne.s32.totalorder %s69, %s70
    %p79 = scmp.eq.s32.totalorder %s17, 0
    %p80 = por %p78, %p79
    %p81 = scmp.ne.s32.totalorder %s69, %s70
    %p82 = scmp.eq.s32.totalorder %s18, 1
    %p83 = por %p81, %p82
    %p85 = scmp.ne.s32.totalorder %s70, %s84
    %p86 = scmp.eq.s32.totalorder %s18, 0
    %p87 = por %p85, %p86
    %s89 = sadd.s32 %s88, 1
    %p92 = scmp.eq.s32.totalorder %s12, 1
    %p93 = scmp.ne.s32.totalorder %s88, %s90
    %p94 = scmp.eq.s32.totalorder %s12, 0
    %p95 = por %p93, %p94
    %p96 = scmp.ne.s32.totalorder %s88, %s90
    %p97 = scmp.eq.s32.totalorder %s17, 1
    %p98 = por %p96, %p97
    %p99 = scmp.ne.s32.totalorder %s90, %s91
    %p100 = scmp.eq.s32.totalorder %s17, 0
    %p101 = por %p99, %p100
    %p102 = scmp.ne.s32.totalorder %s90, %s91
    %p103 = scmp.eq.s32.totalorder %s18, 1
    %p104 = por %p102, %p103
    %p106 = scmp.ne.s32.totalorder %s91, %s105
    %p107 = scmp.eq.s32.totalorder %s18, 0
    %p108 = por %p106, %p107
    %s110 = sadd.s32 %s109, 1
    %p113 = scmp.eq.s32.totalorder %s12, 1
    %p114 = scmp.ne.s32.totalorder %s109, %s111
    %p115 = scmp.eq.s32.totalorder %s12, 0
    %p116 = por %p114, %p115
    %p117 = scmp.ne.s32.totalorder %s109, %s111
    %p118 = scmp.eq.s32.totalorder %s17, 1
    %p119 = por %p117, %p118
    %p120 = scmp.ne.s32.totalorder %s111, %s112
    %p121 = scmp.eq.s32.totalorder %s17, 0
    %p122 = por %p120, %p121
    %p123 = scmp.ne.s32.totalorder %s111, %s112
    %p124 = scmp.eq.s32.totalorder %s18, 1
    %p125 = por %p123, %p124
    %p127 = scmp.ne.s32.totalorder %s112, %s126
    %p128 = scmp.eq.s32.totalorder %s18, 0
    %p129 = por %p127, %p128
    %s131 = sadd.s32 %s130, 1
    %p134 = scmp.eq.s32.totalorder %s12, 1
    %p135 = scmp.ne.s32.totalorder %s130, %s132
    %p136 = scmp.eq.s32.totalorder %s12, 0
    %p137 = por %p135, %p136
    %p138 = scmp.ne.s32.totalorder %s130, %s132
    %p139 = scmp.eq.s32.totalorder %s17, 1
    %p140 = por %p138, %p139
    %p141 = scmp.ne.s32.totalorder %s132, %s133
    %p142 = scmp.eq.s32.totalorder %s17, 0
    %p143 = por %p141, %p142
    %p144 = scmp.ne.s32.totalorder %s132, %s133
    %p145 = scmp.eq.s32.totalorder %s18, 1
    %p146 = por %p144, %p145
    %p148 = scmp.ne.s32.totalorder %s133, %s147
    %p149 = scmp.eq.s32.totalorder %s18, 0
    %p150 = por %p148, %p149
    %s151 = ssub.s32 %s12, %s19
    %p152 = scmp.eq.s32.totalorder %s151, 0
    %s154 = sadd.s32 %s153, 1
    %s155 = scalar_select %p152, %s153, %s154
    %p158 = pneg %p152
    %p159 = scmp.eq.s32.totalorder %s12, 1
    %p160 = por %p158, %p159
    %p161 = scmp.ne.s32.totalorder %s153, %s156
    %p162 = scmp.eq.s32.totalorder %s12, 0
    %p163 = por %p161, %p162
    %p164 = scmp.ne.s32.totalorder %s153, %s156
    %p165 = scmp.eq.s32.totalorder %s17, 1
    %p166 = por %p164, %p165
    %p167 = scmp.ne.s32.totalorder %s156, %s157
    %p168 = scmp.eq.s32.totalorder %s17, 0
    %p169 = por %p167, %p168
    %p170 = scmp.ne.s32.totalorder %s156, %s157
    %p171 = scmp.eq.s32.totalorder %s18, 1
    %p172 = por %p170, %p171
    %p174 = scmp.ne.s32.totalorder %s157, %s173
    %p175 = scmp.eq.s32.totalorder %s18, 0
    %p176 = por %p174, %p175
    %p177 = scmp.le.s32.totalorder 1, %s12
    %p178 = scmp.lt.s32.totalorder %s12, 3
    %p179 = pnand %p177, %p178
    %p180 = pneg %p179
    // Predicated region
    $region9: #{efficient_window_attention_3d.1} parent=5 // pred_check
      _
    $region10: #{efficient_window_attention_3d.1} parent=5 // pred_check_branch
      %182 = sbr.rel (%p179) target = $region12
    $region11: #{efficient_window_attention_3d.1} parent=5 // pred_region
      %s183 = ssub.s32 %s12, 1
      // Predicated region
      $region13: #{efficient_window_attention_3d.1} parent=11 // pred_check
        %p184 = pneg %p59
      $region14: #{efficient_window_attention_3d.1} parent=11 // pred_check_branch
        %186 = sbr.rel (%p184) target = $region16
      $region15: #{efficient_window_attention_3d.1} parent=11 // pred_region
        _
      $region16: #{efficient_window_attention_3d.1} parent=11 // pred_fallthru
        _
      // Predicated region
      $region17: #{efficient_window_attention_3d.1} parent=11 // pred_check
        %p187 = pneg %p80
      $region18: #{efficient_window_attention_3d.1} parent=11 // pred_check_branch
        %189 = sbr.rel (%p187) target = $region20
      $region19: #{efficient_window_attention_3d.1} parent=11 // pred_region
        _
      $region20: #{efficient_window_attention_3d.1} parent=11 // pred_fallthru
        _
      // Predicated region
      $region21: #{efficient_window_attention_3d.1} parent=11 // pred_check
        %p190 = pneg %p101
      $region22: #{efficient_window_attention_3d.1} parent=11 // pred_check_branch
        %192 = sbr.rel (%p190) target = $region24
      $region23: #{efficient_window_attention_3d.1} parent=11 // pred_region
        _
      $region24: #{efficient_window_attention_3d.1} parent=11 // pred_fallthru
        _
      // Predicated region
      $region25: #{efficient_window_attention_3d.1} parent=11 // pred_check
        %p193 = pneg %p122
      $region26: #{efficient_window_attention_3d.1} parent=11 // pred_check_branch
        %195 = sbr.rel (%p193) target = $region28
      $region27: #{efficient_window_attention_3d.1} parent=11 // pred_region
        _
      $region28: #{efficient_window_attention_3d.1} parent=11 // pred_fallthru
        _
      // Predicated region
      $region29: #{efficient_window_attention_3d.1} parent=11 // pred_check
        %p196 = pneg %p143
      $region30: #{efficient_window_attention_3d.1} parent=11 // pred_check_branch
        %198 = sbr.rel (%p196) target = $region32
      $region31: #{efficient_window_attention_3d.1} parent=11 // pred_region
        _
      $region32: #{efficient_window_attention_3d.1} parent=11 // pred_fallthru
        _
    $region12: #{efficient_window_attention_3d.1} parent=5 // pred_fallthru
      _
    %p199 = scmp.lt.s32.totalorder %s12, 2
    // Predicated region
    $region33: #{efficient_window_attention_3d.1} parent=5 // pred_check
      %p200 = pneg %p199
    $region34: #{efficient_window_attention_3d.1} parent=5 // pred_check_branch
      %202 = sbr.rel (%p200) target = $region36
    $region35: #{efficient_window_attention_3d.1} parent=5 // pred_region
      // Predicated region
      $region37: #{efficient_window_attention_3d.1} parent=35 // pred_check
        %p203 = pneg %p32
      $region38: #{efficient_window_attention_3d.1} parent=35 // pred_check_branch
        %205 = sbr.rel (%p203) target = $region40
      $region39: #{efficient_window_attention_3d.1} parent=35 // pred_region
        %s206 = smul.u32 4, %s12
        %p207 = scmp.lt.s32.totalorder %s206, 7
        %s208 = scalar_select %p207, %s206, 7
        %s209 = smul.addr %s208, 8
        %s210 = smul.addr %s209, 8
        %s211 = scalar_lea.vmem %s0, %s210
        %s212 = smul.u32 4, %s12
      $region40: #{efficient_window_attention_3d.1} parent=35 // pred_fallthru
        _
    $region36: #{efficient_window_attention_3d.1} parent=5 // pred_fallthru
      _
    %p213 = scmp.le.s32.totalorder 1, %s12
    %p214 = scmp.lt.s32.totalorder %s12, 3
    %p215 = pnand %p213, %p214
    %p216 = pneg %p215
    // Predicated region
    $region41: #{efficient_window_attention_3d.1} parent=5 // pred_check
      _
    $region42: #{efficient_window_attention_3d.1} parent=5 // pred_check_branch
      %218 = sbr.rel (%p215) target = $region44
    $region43: #{efficient_window_attention_3d.1} parent=5 // pred_region
      %s219 = ssub.s32 %s12, 1
      %s220 = smul.u32 4, %s17
      %p221 = scmp.lt.s32.totalorder %s220, 7
      %s222 = scalar_select %p221, %s220, 7
      %s223 = smul.addr %s222, 8
      %s224 = smul.addr %s223, 8
      %s225 = scalar_lea.vmem %s0, %s224
      %p226 = pneg %p38
      %p227 = pneg %p35
      %p228 = pneg %p59
      %p229 = pneg %p56
      %p230 = pneg %p80
      %p231 = pneg %p77
      %p232 = pneg %p101
      %p233 = pneg %p98
      %p234 = pneg %p122
      %p235 = pneg %p119
      %p236 = pneg %p143
      %p237 = pneg %p140
      %p238 = pneg %p169
      %p239 = pneg %p166
      %s240 = smul.u32 4, %s17
      %p241 = scmp.lt.s32.totalorder %s240, 7
      %s242 = scalar_select %p241, %s240, 7
      %s243 = smul.addr %s242, 8
      %s244 = smul.addr %s243, 8
      %s245 = scalar_lea.vmem %s6, %s244
      %s246 = smul.u32 4, %s17
      %p247 = scmp.lt.s32.totalorder %s246, 7
      %s248 = scalar_select %p247, %s246, 7
      %s249 = smul.addr %s248, 8
      %s250 = smul.addr %s249, 8
      %s251 = scalar_lea.vmem %s0, %s250
      %s252 = smul.u32 4, %s17
      %s253 = smul.u32 4, %s17
      %p254 = scmp.lt.s32.totalorder %s253, 7
      %s255 = scalar_select %p254, %s253, 7
      %s256 = smul.addr %s255, 8
      %s257 = smul.addr %s256, 8
      %s258 = scalar_lea.vmem %s6, %s257
      %s259 = smul.u32 4, %s17
      %v261 = vld [vmem:[%s251] sm:$0xff]
      %v262 = vld [vmem:[%s251 + $0x8] sm:$0xff]
      %v263 = vld [vmem:[%s251 + $0x10] sm:$0xff]
      %v264 = vld [vmem:[%s251 + $0x18] sm:$0xff]
      %v265 = vld [vmem:[%s251 + $0x20] sm:$0xff]
      %v266 = vld [vmem:[%s251 + $0x28] sm:$0xff]
      %v267 = vld [vmem:[%s251 + $0x30] sm:$0xff]
      %v268 = vld [vmem:[%s251 + $0x38] sm:$0xff]
      %v269 = vld [vmem:[%s251 + $0x40] sm:$0xff]
      %v270 = vld [vmem:[%s251 + $0x48] sm:$0xff]
      %v271 = vld [vmem:[%s251 + $0x50] sm:$0xff]
      %v272 = vld [vmem:[%s251 + $0x58] sm:$0xff]
      %v273 = vld [vmem:[%s251 + $0x60] sm:$0xff]
      %v274 = vld [vmem:[%s251 + $0x68] sm:$0xff]
      %v275 = vld [vmem:[%s251 + $0x70] sm:$0xff]
      %v276 = vld [vmem:[%s251 + $0x78] sm:$0xff]
      %v277 = vld [vmem:[%s251 + $0x80] sm:$0xff]
      %v278 = vld [vmem:[%s251 + $0x88] sm:$0xff]
      %v279 = vld [vmem:[%s251 + $0x90] sm:$0xff]
      %v280 = vld [vmem:[%s251 + $0x98] sm:$0xff]
      %v281 = vld [vmem:[%s251 + $0xa0] sm:$0xff]
      %v282 = vld [vmem:[%s251 + $0xa8] sm:$0xff]
      %v283 = vld [vmem:[%s251 + $0xb0] sm:$0xff]
      %v284 = vld [vmem:[%s251 + $0xb8] sm:$0xff]
      %v285 = vld [vmem:[%s251 + $0xc0] sm:$0xff]
      %v286 = vld [vmem:[%s251 + $0xc8] sm:$0xff]
      %v287 = vld [vmem:[%s251 + $0xd0] sm:$0xff]
      %v288 = vld [vmem:[%s251 + $0xd8] sm:$0xff]
      %v289 = vld [vmem:[%s251 + $0xe0] sm:$0xff]
      %v290 = vld [vmem:[%s251 + $0xe8] sm:$0xff]
      %v291 = vld [vmem:[%s251 + $0xf0] sm:$0xff]
      %v292 = vld [vmem:[%s251 + $0xf8] sm:$0xff]
      %v293 = vpack.c.bf16 %v262, %v261
      %v294 = vpack.c.bf16 %v264, %v263
      %v295 = vpack.c.bf16 %v266, %v265
      %v296 = vpack.c.bf16 %v268, %v267
      %v297 = vpack.c.bf16 %v270, %v269
      %v298 = vpack.c.bf16 %v272, %v271
      %v299 = vpack.c.bf16 %v274, %v273
      %v300 = vpack.c.bf16 %v276, %v275
      %v301 = vpack.c.bf16 %v278, %v277
      %v302 = vpack.c.bf16 %v280, %v279
      %v303 = vpack.c.bf16 %v282, %v281
      %v304 = vpack.c.bf16 %v284, %v283
      %v305 = vpack.c.bf16 %v286, %v285
      %v306 = vpack.c.bf16 %v288, %v287
      %v307 = vpack.c.bf16 %v290, %v289
      %v308 = vpack.c.bf16 %v292, %v291
      %v309 = vld [vmem:[%s1] sm:$0xf]
      %v310 = vld [vmem:[%s1 + $0x4] sm:$0xf]
      %v311 = vld [vmem:[%s1 + $0x8] sm:$0xf]
      %v312 = vld [vmem:[%s1 + $0xc] sm:$0xf]
      %v313 = vld [vmem:[%s2] sm:$0x1]
      %v315 = vlaneseq
      %v316 = vshrl.u32 %v315, 7
      %v317 = vsub.s32 0, %v316
      %v318 = vrot.slane %v313, %v317
      %v324 = vunpack.c.l.b16 %v309
      %v325 = vunpack.c.l.b16 %v310
      %v326 = vunpack.c.l.b16 %v311
      %v327 = vunpack.c.l.b16 %v312
      %v328 = vpack.c.b16 %v325, %v324
      %v329 = vpack.c.b16 %v327, %v326
      %vm332 = vcmask 261120
      %v334 = vsel %vm332, %v293, 0
      %v337 = vsel %vm332, %v294, 0
      %v340 = vsel %vm332, %v295, 0
      %v343 = vsel %vm332, %v296, 0
      %v346 = vsel %vm332, %v297, 0
      %v349 = vsel %vm332, %v298, 0
      %v352 = vsel %vm332, %v299, 0
      %v355 = vsel %vm332, %v300, 0
      %v358 = vsel %vm332, %v301, 0
      %v361 = vsel %vm332, %v302, 0
      %v364 = vsel %vm332, %v303, 0
      %v367 = vsel %vm332, %v304, 0
      %v370 = vsel %vm332, %v305, 0
      %v373 = vsel %vm332, %v306, 0
      %v376 = vsel %vm332, %v307, 0
      %v379 = vsel %vm332, %v308, 0
      %381 = vmatprep.subr.bf16.mxu0 0
      %382 = vmatpush1.bf16.msra.mxu0 0
      %383 = vmatprep.subr.bf16.mxu0 0
      %384 = vmatpush1.bf16.msra.mxu0 0
      %385 = vmatprep.subr.bf16.mxu0 0
      %386 = vmatpush1.bf16.msra.mxu0 0
      %387 = vmatprep.subr.bf16.mxu0 0
      %388 = vmatpush1.bf16.msra.mxu0 0
      %389 = vmatprep.subr.bf16.mxu0 0
      %390 = vmatpush1.bf16.msra.mxu0 0
      %391 = vmatprep.subr.bf16.mxu0 0
      %392 = vmatpush1.bf16.msra.mxu0 0
      %393 = vmatprep.subr.bf16.mxu0 0
      %394 = vmatpush1.bf16.msra.mxu0 %v329
      %395 = vmatprep.subr.bf16.mxu0 0
      %396 = vmatpush1.bf16.msra.mxu0 %v328
      %397 = vmatprep.subr.bf16.mxu0 0
      %398 = vmatpush2.bf16.msra.mxu0 0
      %399 = vmatprep.subr.bf16.mxu0 0
      %400 = vmatpush2.bf16.msra.mxu0 0
      %401 = vmatprep.subr.bf16.mxu0 0
      %402 = vmatpush2.bf16.msra.mxu0 0
      %403 = vmatprep.subr.bf16.mxu0 0
      %404 = vmatpush2.bf16.msra.mxu0 0
      %405 = vmatprep.subr.bf16.mxu0 0
      %406 = vmatpush2.bf16.msra.mxu0 0
      %407 = vmatprep.subr.bf16.mxu0 0
      %408 = vmatpush2.bf16.msra.mxu0 0
      %409 = vmatprep.subr.bf16.mxu0 0
      %410 = vmatpush2.bf16.msra.mxu0 0
      %411 = vmatprep.subr.bf16.mxu0 0
      %412 = vmatpush2.bf16.msra.mxu0 0
      %413 = vmatprep.mubr.bf16.mxu0 0
      %414 = vmatmul.mubr.bf16.gmra.mxu0 %v334
      %v415 = vpop.f32.mrf.mxu0
      %v416 = vadd.f32 %v318, %v415
      %v417 = vpop.f32.mrf.mxu0
      %v418 = vpop.f32.mrf.mxu0
      %v419 = vadd.f32 %v318, %v418
      %v420 = vpop.f32.mrf.mxu0
      %421 = vmatprep.mubr.bf16.mxu0 0
      %422 = vmatmul.mubr.bf16.gmra.mxu0 %v337
      %v423 = vpop.f32.mrf.mxu0
      %v424 = vadd.f32 %v318, %v423
      %v425 = vpop.f32.mrf.mxu0
      %v426 = vpop.f32.mrf.mxu0
      %v427 = vadd.f32 %v318, %v426
      %v428 = vpop.f32.mrf.mxu0
      %429 = vmatprep.mubr.bf16.mxu0 0
      %430 = vmatmul.mubr.bf16.gmra.mxu0 %v340
      %v431 = vpop.f32.mrf.mxu0
      %v432 = vadd.f32 %v318, %v431
      %v433 = vpop.f32.mrf.mxu0
      %v434 = vpop.f32.mrf.mxu0
      %v435 = vadd.f32 %v318, %v434
      %v436 = vpop.f32.mrf.mxu0
      %437 = vmatprep.mubr.bf16.mxu0 0
      %438 = vmatmul.mubr.bf16.gmra.mxu0 %v343
      %v439 = vpop.f32.mrf.mxu0
      %v440 = vadd.f32 %v318, %v439
      %v441 = vpop.f32.mrf.mxu0
      %v442 = vpop.f32.mrf.mxu0
      %v443 = vadd.f32 %v318, %v442
      %v444 = vpop.f32.mrf.mxu0
      %445 = vmatprep.mubr.bf16.mxu0 0
      %446 = vmatmul.mubr.bf16.gmra.mxu0 %v346
      %v447 = vpop.f32.mrf.mxu0
      %v448 = vadd.f32 %v318, %v447
      %v449 = vpop.f32.mrf.mxu0
      %v450 = vpop.f32.mrf.mxu0
      %v451 = vadd.f32 %v318, %v450
      %v452 = vpop.f32.mrf.mxu0
      %453 = vmatprep.mubr.bf16.mxu0 0
      %454 = vmatmul.mubr.bf16.gmra.mxu0 %v349
      %v455 = vpop.f32.mrf.mxu0
      %v456 = vadd.f32 %v318, %v455
      %v457 = vpop.f32.mrf.mxu0
      %v458 = vpop.f32.mrf.mxu0
      %v459 = vadd.f32 %v318, %v458
      %v460 = vpop.f32.mrf.mxu0
      %461 = vmatprep.mubr.bf16.mxu0 0
      %462 = vmatmul.mubr.bf16.gmra.mxu0 %v352
      %v463 = vpop.f32.mrf.mxu0
      %v464 = vadd.f32 %v318, %v463
      %v465 = vpop.f32.mrf.mxu0
      %v466 = vpop.f32.mrf.mxu0
      %v467 = vadd.f32 %v318, %v466
      %v468 = vpop.f32.mrf.mxu0
      %469 = vmatprep.mubr.bf16.mxu0 0
      %470 = vmatmul.mubr.bf16.gmra.mxu0 %v355
      %v471 = vpop.f32.mrf.mxu0
      %v472 = vadd.f32 %v318, %v471
      %v473 = vpop.f32.mrf.mxu0
      %v474 = vpop.f32.mrf.mxu0
      %v475 = vadd.f32 %v318, %v474
      %v476 = vpop.f32.mrf.mxu0
      %477 = vmatprep.mubr.bf16.mxu0 0
      %478 = vmatmul.mubr.bf16.gmra.mxu0 %v358
      %v479 = vpop.f32.mrf.mxu0
      %v480 = vadd.f32 %v318, %v479
      %v481 = vpop.f32.mrf.mxu0
      %v482 = vpop.f32.mrf.mxu0
      %v483 = vadd.f32 %v318, %v482
      %v484 = vpop.f32.mrf.mxu0
      %485 = vmatprep.mubr.bf16.mxu0 0
      %486 = vmatmul.mubr.bf16.gmra.mxu0 %v361
      %v487 = vpop.f32.mrf.mxu0
      %v488 = vadd.f32 %v318, %v487
      %v489 = vpop.f32.mrf.mxu0
      %v490 = vpop.f32.mrf.mxu0
      %v491 = vadd.f32 %v318, %v490
      %v492 = vpop.f32.mrf.mxu0
      %493 = vmatprep.mubr.bf16.mxu0 0
      %494 = vmatmul.mubr.bf16.gmra.mxu0 %v364
      %v495 = vpop.f32.mrf.mxu0
      %v496 = vadd.f32 %v318, %v495
      %v497 = vpop.f32.mrf.mxu0
      %v498 = vpop.f32.mrf.mxu0
      %v499 = vadd.f32 %v318, %v498
      %v500 = vpop.f32.mrf.mxu0
      %501 = vmatprep.mubr.bf16.mxu0 0
      %502 = vmatmul.mubr.bf16.gmra.mxu0 %v367
      %v503 = vpop.f32.mrf.mxu0
      %v504 = vadd.f32 %v318, %v503
      %v505 = vpop.f32.mrf.mxu0
      %v506 = vpop.f32.mrf.mxu0
      %v507 = vadd.f32 %v318, %v506
      %v508 = vpop.f32.mrf.mxu0
      %509 = vmatprep.mubr.bf16.mxu0 0
      %510 = vmatmul.mubr.bf16.gmra.mxu0 %v370
      %v511 = vpop.f32.mrf.mxu0
      %v512 = vadd.f32 %v318, %v511
      %v513 = vpop.f32.mrf.mxu0
      %v514 = vpop.f32.mrf.mxu0
      %v515 = vadd.f32 %v318, %v514
      %v516 = vpop.f32.mrf.mxu0
      %517 = vmatprep.mubr.bf16.mxu0 0
      %518 = vmatmul.mubr.bf16.gmra.mxu0 %v373
      %v519 = vpop.f32.mrf.mxu0
      %v520 = vadd.f32 %v318, %v519
      %v521 = vpop.f32.mrf.mxu0
      %v522 = vpop.f32.mrf.mxu0
      %v523 = vadd.f32 %v318, %v522
      %v524 = vpop.f32.mrf.mxu0
      %525 = vmatprep.mubr.bf16.mxu0 0
      %526 = vmatmul.mubr.bf16.gmra.mxu0 %v376
      %v527 = vpop.f32.mrf.mxu0
      %v528 = vadd.f32 %v318, %v527
      %v529 = vpop.f32.mrf.mxu0
      %v530 = vpop.f32.mrf.mxu0
      %v531 = vadd.f32 %v318, %v530
      %v532 = vpop.f32.mrf.mxu0
      %533 = vmatprep.mubr.bf16.mxu0 0
      %534 = vmatmul.mubr.bf16.gmra.mxu0 %v379
      %v535 = vpop.f32.mrf.mxu0
      %v536 = vadd.f32 %v318, %v535
      %v537 = vpop.f32.mrf.mxu0
      %v538 = vpop.f32.mrf.mxu0
      %v539 = vadd.f32 %v318, %v538
      %v540 = vpop.f32.mrf.mxu0
      %541 = vdwg.mxu0
      %v542 = vpack.c.bf16 %v419, %v416
      %v543 = vpack.c.bf16 %v427, %v424
      %v544 = vpack.c.bf16 %v435, %v432
      %v545 = vpack.c.bf16 %v443, %v440
      %v546 = vpack.c.bf16 %v451, %v448
      %v547 = vpack.c.bf16 %v459, %v456
      %v548 = vpack.c.bf16 %v467, %v464
      %v549 = vpack.c.bf16 %v475, %v472
      %v550 = vpack.c.bf16 %v483, %v480
      %v551 = vpack.c.bf16 %v491, %v488
      %v552 = vpack.c.bf16 %v499, %v496
      %v553 = vpack.c.bf16 %v507, %v504
      %v554 = vpack.c.bf16 %v515, %v512
      %v555 = vpack.c.bf16 %v523, %v520
      %v556 = vpack.c.bf16 %v531, %v528
      %v557 = vpack.c.bf16 %v539, %v536
      %v558 = vld [vmem:[%s3] sm:$0xff]
      %v559 = vld [vmem:[%s3 + $0x8] sm:$0xff]
      %v560 = vld [vmem:[%s3 + $0x10] sm:$0xff]
      %v561 = vld [vmem:[%s3 + $0x18] sm:$0xff]
      %v562 = vld [vmem:[%s3 + $0x20] sm:$0xff]
      %v563 = vld [vmem:[%s3 + $0x28] sm:$0xff]
      %v564 = vld [vmem:[%s3 + $0x30] sm:$0xff]
      %v565 = vld [vmem:[%s3 + $0x38] sm:$0xff]
      %570 = vrot.lane.b32.xlu0 %v542, 96
      %v571 = vpop.permute.xlu0 %570
      %572 = vrot.lane.b32.xlu0 %v543, 96
      %v573 = vpop.permute.xlu0 %572
      %574 = vrot.lane.b32.xlu0 %v544, 96
      %v575 = vpop.permute.xlu0 %574
      %576 = vrot.lane.b32.xlu0 %v545, 96
      %v577 = vpop.permute.xlu0 %576
      %vm578 = vcmask 64512
      %v580 = vsel %vm578, %v542, 0
      %v583 = vsel %vm578, %v543, 0
      %v586 = vsel %vm578, %v544, 0
      %v589 = vsel %vm578, %v545, 0
      %v592 = vsel %vm578, %v571, 0
      %v595 = vsel %vm578, %v573, 0
      %v598 = vsel %vm578, %v575, 0
      %v601 = vsel %vm578, %v577, 0
      %603 = vmatprep.subr.bf16.mxu0 0
      %604 = vmatpush1.bf16.xpose.msra.mxu0 0
      %605 = vmatprep.subr.bf16.mxu0 0
      %606 = vmatpush1.bf16.xpose.msra.mxu0 0
      %607 = vmatprep.subr.bf16.mxu0 0
      %608 = vmatpush1.bf16.xpose.msra.mxu0 0
      %609 = vmatprep.subr.bf16.mxu0 0
      %610 = vmatpush1.bf16.xpose.msra.mxu0 0
      %611 = vmatprep.subr.bf16.mxu0 0
      %612 = vmatpush1.bf16.xpose.msra.mxu0 %v601
      %613 = vmatprep.subr.bf16.mxu0 0
      %614 = vmatpush1.bf16.xpose.msra.mxu0 %v598
      %615 = vmatprep.subr.bf16.mxu0 0
      %616 = vmatpush1.bf16.xpose.msra.mxu0 %v595
      %617 = vmatprep.subr.bf16.mxu0 0
      %618 = vmatpush1.bf16.xpose.msra.mxu0 %v592
      %619 = vmatprep.subr.bf16.mxu0 0
      %620 = vmatpush2.bf16.xpose.msra.mxu0 0
      %621 = vmatprep.subr.bf16.mxu0 0
      %622 = vmatpush2.bf16.xpose.msra.mxu0 0
      %623 = vmatprep.subr.bf16.mxu0 0
      %624 = vmatpush2.bf16.xpose.msra.mxu0 0
      %625 = vmatprep.subr.bf16.mxu0 0
      %626 = vmatpush2.bf16.xpose.msra.mxu0 0
      %627 = vmatprep.subr.bf16.mxu0 0
      %628 = vmatpush2.bf16.xpose.msra.mxu0 0
      %629 = vmatprep.subr.bf16.mxu0 0
      %630 = vmatpush2.bf16.xpose.msra.mxu0 0
      %631 = vmatprep.subr.bf16.mxu0 0
      %632 = vmatpush2.bf16.xpose.msra.mxu0 0
      %633 = vmatprep.subr.bf16.mxu0 0
      %634 = vmatpush2.bf16.xpose.msra.mxu0 0
      %635 = vmatprep.mubr.bf16.mxu0 0
      %636 = vmatmul.mubr.bf16.gmra.mxu0 %v580
      %v637 = vpop.f32.mrf.mxu0
      %v638 = vadd.f32 %v558, %v637
      %v639 = vpop.f32.mrf.mxu0
      %v640 = vpop.f32.mrf.mxu0
      %v641 = vadd.f32 %v559, %v640
      %v642 = vpop.f32.mrf.mxu0
      %643 = vmatprep.mubr.bf16.mxu0 0
      %644 = vmatmul.mubr.bf16.gmra.mxu0 %v583
      %v645 = vpop.f32.mrf.mxu0
      %v646 = vadd.f32 %v560, %v645
      %v647 = vpop.f32.mrf.mxu0
      %v648 = vpop.f32.mrf.mxu0
      %v649 = vadd.f32 %v561, %v648
      %v650 = vpop.f32.mrf.mxu0
      %651 = vmatprep.mubr.bf16.mxu0 0
      %652 = vmatmul.mubr.bf16.gmra.mxu0 %v586
      %v653 = vpop.f32.mrf.mxu0
      %v654 = vadd.f32 %v562, %v653
      %v655 = vpop.f32.mrf.mxu0
      %v656 = vpop.f32.mrf.mxu0
      %v657 = vadd.f32 %v563, %v656
      %v658 = vpop.f32.mrf.mxu0
      %659 = vmatprep.mubr.bf16.mxu0 0
      %660 = vmatmul.mubr.bf16.gmra.mxu0 %v589
      %v661 = vpop.f32.mrf.mxu0
      %v662 = vadd.f32 %v564, %v661
      %v663 = vpop.f32.mrf.mxu0
      %v664 = vpop.f32.mrf.mxu0
      %v665 = vadd.f32 %v565, %v664
      %v666 = vpop.f32.mrf.mxu0
      %667 = vdwg.mxu0
      %672 = vrot.lane.b32.xlu0 %v546, 96
      %v673 = vpop.permute.xlu0 %672
      %674 = vrot.lane.b32.xlu0 %v547, 96
      %v675 = vpop.permute.xlu0 %674
      %676 = vrot.lane.b32.xlu0 %v548, 96
      %v677 = vpop.permute.xlu0 %676
      %678 = vrot.lane.b32.xlu0 %v549, 96
      %v679 = vpop.permute.xlu0 %678
      %v681 = vsel %vm578, %v546, 0
      %v684 = vsel %vm578, %v547, 0
      %v687 = vsel %vm578, %v548, 0
      %v690 = vsel %vm578, %v549, 0
      %v693 = vsel %vm578, %v673, 0
      %v696 = vsel %vm578, %v675, 0
      %v699 = vsel %vm578, %v677, 0
      %v702 = vsel %vm578, %v679, 0
      %704 = vmatprep.subr.bf16.mxu0 0
      %705 = vmatpush1.bf16.xpose.msra.mxu0 0
      %706 = vmatprep.subr.bf16.mxu0 0
      %707 = vmatpush1.bf16.xpose.msra.mxu0 0
      %708 = vmatprep.subr.bf16.mxu0 0
      %709 = vmatpush1.bf16.xpose.msra.mxu0 0
      %710 = vmatprep.subr.bf16.mxu0 0
      %711 = vmatpush1.bf16.xpose.msra.mxu0 0
      %712 = vmatprep.subr.bf16.mxu0 0
      %713 = vmatpush1.bf16.xpose.msra.mxu0 %v702
      %714 = vmatprep.subr.bf16.mxu0 0
      %715 = vmatpush1.bf16.xpose.msra.mxu0 %v699
      %716 = vmatprep.subr.bf16.mxu0 0
      %717 = vmatpush1.bf16.xpose.msra.mxu0 %v696
      %718 = vmatprep.subr.bf16.mxu0 0
      %719 = vmatpush1.bf16.xpose.msra.mxu0 %v693
      %720 = vmatprep.subr.bf16.mxu0 0
      %721 = vmatpush2.bf16.xpose.msra.mxu0 0
      %722 = vmatprep.subr.bf16.mxu0 0
      %723 = vmatpush2.bf16.xpose.msra.mxu0 0
      %724 = vmatprep.subr.bf16.mxu0 0
      %725 = vmatpush2.bf16.xpose.msra.mxu0 0
      %726 = vmatprep.subr.bf16.mxu0 0
      %727 = vmatpush2.bf16.xpose.msra.mxu0 0
      %728 = vmatprep.subr.bf16.mxu0 0
      %729 = vmatpush2.bf16.xpose.msra.mxu0 0
      %730 = vmatprep.subr.bf16.mxu0 0
      %731 = vmatpush2.bf16.xpose.msra.mxu0 0
      %732 = vmatprep.subr.bf16.mxu0 0
      %733 = vmatpush2.bf16.xpose.msra.mxu0 0
      %734 = vmatprep.subr.bf16.mxu0 0
      %735 = vmatpush2.bf16.xpose.msra.mxu0 0
      %736 = vmatprep.mubr.bf16.mxu0 0
      %737 = vmatmul.mubr.bf16.gmra.mxu0 %v681
      %v738 = vpop.f32.mrf.mxu0
      %v739 = vadd.f32 %v558, %v738
      %v740 = vpop.f32.mrf.mxu0
      %v741 = vpop.f32.mrf.mxu0
      %v742 = vadd.f32 %v559, %v741
      %v743 = vpop.f32.mrf.mxu0
      %744 = vmatprep.mubr.bf16.mxu0 0
      %745 = vmatmul.mubr.bf16.gmra.mxu0 %v684
      %v746 = vpop.f32.mrf.mxu0
      %v747 = vadd.f32 %v560, %v746
      %v748 = vpop.f32.mrf.mxu0
      %v749 = vpop.f32.mrf.mxu0
      %v750 = vadd.f32 %v561, %v749
      %v751 = vpop.f32.mrf.mxu0
      %752 = vmatprep.mubr.bf16.mxu0 0
      %753 = vmatmul.mubr.bf16.gmra.mxu0 %v687
      %v754 = vpop.f32.mrf.mxu0
      %v755 = vadd.f32 %v562, %v754
      %v756 = vpop.f32.mrf.mxu0
      %v757 = vpop.f32.mrf.mxu0
      %v758 = vadd.f32 %v563, %v757
      %v759 = vpop.f32.mrf.mxu0
      %760 = vmatprep.mubr.bf16.mxu0 0
      %761 = vmatmul.mubr.bf16.gmra.mxu0 %v690
      %v762 = vpop.f32.mrf.mxu0
      %v763 = vadd.f32 %v564, %v762
      %v764 = vpop.f32.mrf.mxu0
      %v765 = vpop.f32.mrf.mxu0
      %v766 = vadd.f32 %v565, %v765
      %v767 = vpop.f32.mrf.mxu0
      %768 = vdwg.mxu0
      %773 = vrot.lane.b32.xlu0 %v550, 96
      %v774 = vpop.permute.xlu0 %773
      %775 = vrot.lane.b32.xlu0 %v551, 96
      %v776 = vpop.permute.xlu0 %775
      %777 = vrot.lane.b32.xlu0 %v552, 96
      %v778 = vpop.permute.xlu0 %777
      %779 = vrot.lane.b32.xlu0 %v553, 96
      %v780 = vpop.permute.xlu0 %779
      %v782 = vsel %vm578, %v550, 0
      %v785 = vsel %vm578, %v551, 0
      %v788 = vsel %vm578, %v552, 0
      %v791 = vsel %vm578, %v553, 0
      %v794 = vsel %vm578, %v774, 0
      %v797 = vsel %vm578, %v776, 0
      %v800 = vsel %vm578, %v778, 0
      %v803 = vsel %vm578, %v780, 0
      %805 = vmatprep.subr.bf16.mxu0 0
      %806 = vmatpush1.bf16.xpose.msra.mxu0 0
      %807 = vmatprep.subr.bf16.mxu0 0
      %808 = vmatpush1.bf16.xpose.msra.mxu0 0
      %809 = vmatprep.subr.bf16.mxu0 0
      %810 = vmatpush1.bf16.xpose.msra.mxu0 0
      %811 = vmatprep.subr.bf16.mxu0 0
      %812 = vmatpush1.bf16.xpose.msra.mxu0 0
      %813 = vmatprep.subr.bf16.mxu0 0
      %814 = vmatpush1.bf16.xpose.msra.mxu0 %v803
      %815 = vmatprep.subr.bf16.mxu0 0
      %816 = vmatpush1.bf16.xpose.msra.mxu0 %v800
      %817 = vmatprep.subr.bf16.mxu0 0
      %818 = vmatpush1.bf16.xpose.msra.mxu0 %v797
      %819 = vmatprep.subr.bf16.mxu0 0
      %820 = vmatpush1.bf16.xpose.msra.mxu0 %v794
      %821 = vmatprep.subr.bf16.mxu0 0
      %822 = vmatpush2.bf16.xpose.msra.mxu0 0
      %823 = vmatprep.subr.bf16.mxu0 0
      %824 = vmatpush2.bf16.xpose.msra.mxu0 0
      %825 = vmatprep.subr.bf16.mxu0 0
      %826 = vmatpush2.bf16.xpose.msra.mxu0 0
      %827 = vmatprep.subr.bf16.mxu0 0
      %828 = vmatpush2.bf16.xpose.msra.mxu0 0
      %829 = vmatprep.subr.bf16.mxu0 0
      %830 = vmatpush2.bf16.xpose.msra.mxu0 0
      %831 = vmatprep.subr.bf16.mxu0 0
      %832 = vmatpush2.bf16.xpose.msra.mxu0 0
      %833 = vmatprep.subr.bf16.mxu0 0
      %834 = vmatpush2.bf16.xpose.msra.mxu0 0
      %835 = vmatprep.subr.bf16.mxu0 0
      %836 = vmatpush2.bf16.xpose.msra.mxu0 0
      %837 = vmatprep.mubr.bf16.mxu0 0
      %838 = vmatmul.mubr.bf16.gmra.mxu0 %v782
      %v839 = vpop.f32.mrf.mxu0
      %v840 = vadd.f32 %v558, %v839
      %v841 = vpop.f32.mrf.mxu0
      %v842 = vpop.f32.mrf.mxu0
      %v843 = vadd.f32 %v559, %v842
      %v844 = vpop.f32.mrf.mxu0
      %845 = vmatprep.mubr.bf16.mxu0 0
      %846 = vmatmul.mubr.bf16.gmra.mxu0 %v785
      %v847 = vpop.f32.mrf.mxu0
      %v848 = vadd.f32 %v560, %v847
      %v849 = vpop.f32.mrf.mxu0
      %v850 = vpop.f32.mrf.mxu0
      %v851 = vadd.f32 %v561, %v850
      %v852 = vpop.f32.mrf.mxu0
      %853 = vmatprep.mubr.bf16.mxu0 0
      %854 = vmatmul.mubr.bf16.gmra.mxu0 %v788
      %v855 = vpop.f32.mrf.mxu0
      %v856 = vadd.f32 %v562, %v855
      %v857 = vpop.f32.mrf.mxu0
      %v858 = vpop.f32.mrf.mxu0
      %v859 = vadd.f32 %v563, %v858
      %v860 = vpop.f32.mrf.mxu0
      %861 = vmatprep.mubr.bf16.mxu0 0
      %862 = vmatmul.mubr.bf16.gmra.mxu0 %v791
      %v863 = vpop.f32.mrf.mxu0
      %v864 = vadd.f32 %v564, %v863
      %v865 = vpop.f32.mrf.mxu0
      %v866 = vpop.f32.mrf.mxu0
      %v867 = vadd.f32 %v565, %v866
      %v868 = vpop.f32.mrf.mxu0
      %869 = vdwg.mxu0
      %874 = vrot.lane.b32.xlu0 %v554, 96
      %v875 = vpop.permute.xlu0 %874
      %876 = vrot.lane.b32.xlu0 %v555, 96
      %v877 = vpop.permute.xlu0 %876
      %878 = vrot.lane.b32.xlu0 %v556, 96
      %v879 = vpop.permute.xlu0 %878
      %880 = vrot.lane.b32.xlu0 %v557, 96
      %v881 = vpop.permute.xlu0 %880
      %v883 = vsel %vm578, %v554, 0
      %v886 = vsel %vm578, %v555, 0
      %v889 = vsel %vm578, %v556, 0
      %v892 = vsel %vm578, %v557, 0
      %v895 = vsel %vm578, %v875, 0
      %v898 = vsel %vm578, %v877, 0
      %v901 = vsel %vm578, %v879, 0
      %v904 = vsel %vm578, %v881, 0
      %906 = vmatprep.subr.bf16.mxu0 0
      %907 = vmatpush1.bf16.xpose.msra.mxu0 0
      %908 = vmatprep.subr.bf16.mxu0 0
      %909 = vmatpush1.bf16.xpose.msra.mxu0 0
      %910 = vmatprep.subr.bf16.mxu0 0
      %911 = vmatpush1.bf16.xpose.msra.mxu0 0
      %912 = vmatprep.subr.bf16.mxu0 0
      %913 = vmatpush1.bf16.xpose.msra.mxu0 0
      %914 = vmatprep.subr.bf16.mxu0 0
      %915 = vmatpush1.bf16.xpose.msra.mxu0 %v904
      %916 = vmatprep.subr.bf16.mxu0 0
      %917 = vmatpush1.bf16.xpose.msra.mxu0 %v901
      %918 = vmatprep.subr.bf16.mxu0 0
      %919 = vmatpush1.bf16.xpose.msra.mxu0 %v898
      %920 = vmatprep.subr.bf16.mxu0 0
      %921 = vmatpush1.bf16.xpose.msra.mxu0 %v895
      %922 = vmatprep.subr.bf16.mxu0 0
      %923 = vmatpush2.bf16.xpose.msra.mxu0 0
      %924 = vmatprep.subr.bf16.mxu0 0
      %925 = vmatpush2.bf16.xpose.msra.mxu0 0
      %926 = vmatprep.subr.bf16.mxu0 0
      %927 = vmatpush2.bf16.xpose.msra.mxu0 0
      %928 = vmatprep.subr.bf16.mxu0 0
      %929 = vmatpush2.bf16.xpose.msra.mxu0 0
      %930 = vmatprep.subr.bf16.mxu0 0
      %931 = vmatpush2.bf16.xpose.msra.mxu0 0
      %932 = vmatprep.subr.bf16.mxu0 0
      %933 = vmatpush2.bf16.xpose.msra.mxu0 0
      %934 = vmatprep.subr.bf16.mxu0 0
      %935 = vmatpush2.bf16.xpose.msra.mxu0 0
      %936 = vmatprep.subr.bf16.mxu0 0
      %937 = vmatpush2.bf16.xpose.msra.mxu0 0
      %938 = vmatprep.mubr.bf16.mxu0 0
      %939 = vmatmul.mubr.bf16.gmra.mxu0 %v883
      %v940 = vpop.f32.mrf.mxu0
      %v941 = vadd.f32 %v558, %v940
      %v942 = vpop.f32.mrf.mxu0
      %v943 = vpop.f32.mrf.mxu0
      %v944 = vadd.f32 %v559, %v943
      %v945 = vpop.f32.mrf.mxu0
      %946 = vmatprep.mubr.bf16.mxu0 0
      %947 = vmatmul.mubr.bf16.gmra.mxu0 %v886
      %v948 = vpop.f32.mrf.mxu0
      %v949 = vadd.f32 %v560, %v948
      %v950 = vpop.f32.mrf.mxu0
      %v951 = vpop.f32.mrf.mxu0
      %v952 = vadd.f32 %v561, %v951
      %v953 = vpop.f32.mrf.mxu0
      %954 = vmatprep.mubr.bf16.mxu0 0
      %955 = vmatmul.mubr.bf16.gmra.mxu0 %v889
      %v956 = vpop.f32.mrf.mxu0
      %v957 = vadd.f32 %v562, %v956
      %v958 = vpop.f32.mrf.mxu0
      %v959 = vpop.f32.mrf.mxu0
      %v960 = vadd.f32 %v563, %v959
      %v961 = vpop.f32.mrf.mxu0
      %962 = vmatprep.mubr.bf16.mxu0 0
      %963 = vmatmul.mubr.bf16.gmra.mxu0 %v892
      %v964 = vpop.f32.mrf.mxu0
      %v965 = vadd.f32 %v564, %v964
      %v966 = vpop.f32.mrf.mxu0
      %v967 = vpop.f32.mrf.mxu0
      %v968 = vadd.f32 %v565, %v967
      %v969 = vpop.f32.mrf.mxu0
      %970 = vdwg.mxu0
      %vm971 = vcmask 523264
      %v972 = vsel %vm971, %v638, -inf
      %973 = vmax.xlane.f32.xlu0 %v972
      %v974 = vpop.xlane.xlu0 %973
      %v975 = vsel %vm971, %v641, -inf
      %976 = vmax.xlane.f32.xlu0 %v975
      %v977 = vpop.xlane.xlu0 %976
      %v978 = vsel %vm971, %v646, -inf
      %979 = vmax.xlane.f32.xlu0 %v978
      %v980 = vpop.xlane.xlu0 %979
      %v981 = vsel %vm971, %v649, -inf
      %982 = vmax.xlane.f32.xlu0 %v981
      %v983 = vpop.xlane.xlu0 %982
      %v984 = vsel %vm971, %v654, -inf
      %985 = vmax.xlane.f32.xlu0 %v984
      %v986 = vpop.xlane.xlu0 %985
      %v987 = vsel %vm971, %v657, -inf
      %988 = vmax.xlane.f32.xlu0 %v987
      %v989 = vpop.xlane.xlu0 %988
      %v990 = vsel %vm971, %v662, -inf
      %991 = vmax.xlane.f32.xlu0 %v990
      %v992 = vpop.xlane.xlu0 %991
      %v993 = vsel %vm971, %v665, -inf
      %994 = vmax.xlane.f32.xlu0 %v993
      %v995 = vpop.xlane.xlu0 %994
      %v996 = vsel %vm971, %v739, -inf
      %997 = vmax.xlane.f32.xlu0 %v996
      %v998 = vpop.xlane.xlu0 %997
      %v999 = vsel %vm971, %v742, -inf
      %1000 = vmax.xlane.f32.xlu0 %v999
      %v1001 = vpop.xlane.xlu0 %1000
      %v1002 = vsel %vm971, %v747, -inf
      %1003 = vmax.xlane.f32.xlu0 %v1002
      %v1004 = vpop.xlane.xlu0 %1003
      %v1005 = vsel %vm971, %v750, -inf
      %1006 = vmax.xlane.f32.xlu0 %v1005
      %v1007 = vpop.xlane.xlu0 %1006
      %v1008 = vsel %vm971, %v755, -inf
      %1009 = vmax.xlane.f32.xlu0 %v1008
      %v1010 = vpop.xlane.xlu0 %1009
      %v1011 = vsel %vm971, %v758, -inf
      %1012 = vmax.xlane.f32.xlu0 %v1011
      %v1013 = vpop.xlane.xlu0 %1012
      %v1014 = vsel %vm971, %v763, -inf
      %1015 = vmax.xlane.f32.xlu0 %v1014
      %v1016 = vpop.xlane.xlu0 %1015
      %v1017 = vsel %vm971, %v766, -inf
      %1018 = vmax.xlane.f32.xlu0 %v1017
      %v1019 = vpop.xlane.xlu0 %1018
      %v1020 = vsel %vm971, %v840, -inf
      %1021 = vmax.xlane.f32.xlu0 %v1020
      %v1022 = vpop.xlane.xlu0 %1021
      %v1023 = vsel %vm971, %v843, -inf
      %1024 = vmax.xlane.f32.xlu0 %v1023
      %v1025 = vpop.xlane.xlu0 %1024
      %v1026 = vsel %vm971, %v848, -inf
      %1027 = vmax.xlane.f32.xlu0 %v1026
      %v1028 = vpop.xlane.xlu0 %1027
      %v1029 = vsel %vm971, %v851, -inf
      %1030 = vmax.xlane.f32.xlu0 %v1029
      %v1031 = vpop.xlane.xlu0 %1030
      %v1032 = vsel %vm971, %v856, -inf
      %1033 = vmax.xlane.f32.xlu0 %v1032
      %v1034 = vpop.xlane.xlu0 %1033
      %v1035 = vsel %vm971, %v859, -inf
      %1036 = vmax.xlane.f32.xlu0 %v1035
      %v1037 = vpop.xlane.xlu0 %1036
      %v1038 = vsel %vm971, %v864, -inf
      %1039 = vmax.xlane.f32.xlu0 %v1038
      %v1040 = vpop.xlane.xlu0 %1039
      %v1041 = vsel %vm971, %v867, -inf
      %1042 = vmax.xlane.f32.xlu0 %v1041
      %v1043 = vpop.xlane.xlu0 %1042
      %v1044 = vsel %vm971, %v941, -inf
      %1045 = vmax.xlane.f32.xlu0 %v1044
      %v1046 = vpop.xlane.xlu0 %1045
      %v1047 = vsel %vm971, %v944, -inf
      %1048 = vmax.xlane.f32.xlu0 %v1047
      %v1049 = vpop.xlane.xlu0 %1048
      %v1050 = vsel %vm971, %v949, -inf
      %1051 = vmax.xlane.f32.xlu0 %v1050
      %v1052 = vpop.xlane.xlu0 %1051
      %v1053 = vsel %vm971, %v952, -inf
      %1054 = vmax.xlane.f32.xlu0 %v1053
      %v1055 = vpop.xlane.xlu0 %1054
      %v1056 = vsel %vm971, %v957, -inf
      %1057 = vmax.xlane.f32.xlu0 %v1056
      %v1058 = vpop.xlane.xlu0 %1057
      %v1059 = vsel %vm971, %v960, -inf
      %1060 = vmax.xlane.f32.xlu0 %v1059
      %v1061 = vpop.xlane.xlu0 %1060
      %v1062 = vsel %vm971, %v965, -inf
      %1063 = vmax.xlane.f32.xlu0 %v1062
      %v1064 = vpop.xlane.xlu0 %1063
      %v1065 = vsel %vm971, %v968, -inf
      %1066 = vmax.xlane.f32.xlu0 %v1065
      %v1067 = vpop.xlane.xlu0 %1066
      %v1068 = vsub.f32 %v638, %v974
      %v1069 = vsub.f32 %v641, %v977
      %v1070 = vsub.f32 %v646, %v980
      %v1071 = vsub.f32 %v649, %v983
      %v1072 = vsub.f32 %v654, %v986
      %v1073 = vsub.f32 %v657, %v989
      %v1074 = vsub.f32 %v662, %v992
      %v1075 = vsub.f32 %v665, %v995
      %v1076 = vsub.f32 %v739, %v998
      %v1077 = vsub.f32 %v742, %v1001
      %v1078 = vsub.f32 %v747, %v1004
      %v1079 = vsub.f32 %v750, %v1007
      %v1080 = vsub.f32 %v755, %v1010
      %v1081 = vsub.f32 %v758, %v1013
      %v1082 = vsub.f32 %v763, %v1016
      %v1083 = vsub.f32 %v766, %v1019
      %v1084 = vsub.f32 %v840, %v1022
      %v1085 = vsub.f32 %v843, %v1025
      %v1086 = vsub.f32 %v848, %v1028
      %v1087 = vsub.f32 %v851, %v1031
      %v1088 = vsub.f32 %v856, %v1034
      %v1089 = vsub.f32 %v859, %v1037
      %v1090 = vsub.f32 %v864, %v1040
      %v1091 = vsub.f32 %v867, %v1043
      %v1092 = vsub.f32 %v941, %v1046
      %v1093 = vsub.f32 %v944, %v1049
      %v1094 = vsub.f32 %v949, %v1052
      %v1095 = vsub.f32 %v952, %v1055
      %v1096 = vsub.f32 %v957, %v1058
      %v1097 = vsub.f32 %v960, %v1061
      %v1098 = vsub.f32 %v965, %v1064
      %v1099 = vsub.f32 %v968, %v1067
      %v1100 = vmul.f32 %v1068, 1.442695
      %v1101 = vpow.pop %v1100
      %v1102 = vmul.f32 %v1069, 1.442695
      %v1103 = vpow.pop %v1102
      %v1104 = vmul.f32 %v1070, 1.442695
      %v1105 = vpow.pop %v1104
      %v1106 = vmul.f32 %v1071, 1.442695
      %v1107 = vpow.pop %v1106
      %v1108 = vmul.f32 %v1072, 1.442695
      %v1109 = vpow.pop %v1108
      %v1110 = vmul.f32 %v1073, 1.442695
      %v1111 = vpow.pop %v1110
      %v1112 = vmul.f32 %v1074, 1.442695
      %v1113 = vpow.pop %v1112
      %v1114 = vmul.f32 %v1075, 1.442695
      %v1115 = vpow.pop %v1114
      %v1116 = vmul.f32 %v1076, 1.442695
      %v1117 = vpow.pop %v1116
      %v1118 = vmul.f32 %v1077, 1.442695
      %v1119 = vpow.pop %v1118
      %v1120 = vmul.f32 %v1078, 1.442695
      %v1121 = vpow.pop %v1120
      %v1122 = vmul.f32 %v1079, 1.442695
      %v1123 = vpow.pop %v1122
      %v1124 = vmul.f32 %v1080, 1.442695
      %v1125 = vpow.pop %v1124
      %v1126 = vmul.f32 %v1081, 1.442695
      %v1127 = vpow.pop %v1126
      %v1128 = vmul.f32 %v1082, 1.442695
      %v1129 = vpow.pop %v1128
      %v1130 = vmul.f32 %v1083, 1.442695
      %v1131 = vpow.pop %v1130
      %v1132 = vmul.f32 %v1084, 1.442695
      %v1133 = vpow.pop %v1132
      %v1134 = vmul.f32 %v1085, 1.442695
      %v1135 = vpow.pop %v1134
      %v1136 = vmul.f32 %v1086, 1.442695
      %v1137 = vpow.pop %v1136
      %v1138 = vmul.f32 %v1087, 1.442695
      %v1139 = vpow.pop %v1138
      %v1140 = vmul.f32 %v1088, 1.442695
      %v1141 = vpow.pop %v1140
      %v1142 = vmul.f32 %v1089, 1.442695
      %v1143 = vpow.pop %v1142
      %v1144 = vmul.f32 %v1090, 1.442695
      %v1145 = vpow.pop %v1144
      %v1146 = vmul.f32 %v1091, 1.442695
      %v1147 = vpow.pop %v1146
      %v1148 = vmul.f32 %v1092, 1.442695
      %v1149 = vpow.pop %v1148
      %v1150 = vmul.f32 %v1093, 1.442695
      %v1151 = vpow.pop %v1150
      %v1152 = vmul.f32 %v1094, 1.442695
      %v1153 = vpow.pop %v1152
      %v1154 = vmul.f32 %v1095, 1.442695
      %v1155 = vpow.pop %v1154
      %v1156 = vmul.f32 %v1096, 1.442695
      %v1157 = vpow.pop %v1156
      %v1158 = vmul.f32 %v1097, 1.442695
      %v1159 = vpow.pop %v1158
      %v1160 = vmul.f32 %v1098, 1.442695
      %v1161 = vpow.pop %v1160
      %v1162 = vmul.f32 %v1099, 1.442695
      %v1163 = vpow.pop %v1162
      %v1164 = vsel %vm971, %v1101, 0.0
      %1165 = vadd.xlane.f32.xlu0 %v1164
      %v1166 = vpop.xlane.xlu0 %1165
      %v1167 = vsel %vm971, %v1103, 0.0
      %1168 = vadd.xlane.f32.xlu0 %v1167
      %v1169 = vpop.xlane.xlu0 %1168
      %v1170 = vsel %vm971, %v1105, 0.0
      %1171 = vadd.xlane.f32.xlu0 %v1170
      %v1172 = vpop.xlane.xlu0 %1171
      %v1173 = vsel %vm971, %v1107, 0.0
      %1174 = vadd.xlane.f32.xlu0 %v1173
      %v1175 = vpop.xlane.xlu0 %1174
      %v1176 = vsel %vm971, %v1109, 0.0
      %1177 = vadd.xlane.f32.xlu0 %v1176
      %v1178 = vpop.xlane.xlu0 %1177
      %v1179 = vsel %vm971, %v1111, 0.0
      %1180 = vadd.xlane.f32.xlu0 %v1179
      %v1181 = vpop.xlane.xlu0 %1180
      %v1182 = vsel %vm971, %v1113, 0.0
      %1183 = vadd.xlane.f32.xlu0 %v1182
      %v1184 = vpop.xlane.xlu0 %1183
      %v1185 = vsel %vm971, %v1115, 0.0
      %1186 = vadd.xlane.f32.xlu0 %v1185
      %v1187 = vpop.xlane.xlu0 %1186
      %v1188 = vsel %vm971, %v1117, 0.0
      %1189 = vadd.xlane.f32.xlu0 %v1188
      %v1190 = vpop.xlane.xlu0 %1189
      %v1191 = vsel %vm971, %v1119, 0.0
      %1192 = vadd.xlane.f32.xlu0 %v1191
      %v1193 = vpop.xlane.xlu0 %1192
      %v1194 = vsel %vm971, %v1121, 0.0
      %1195 = vadd.xlane.f32.xlu0 %v1194
      %v1196 = vpop.xlane.xlu0 %1195
      %v1197 = vsel %vm971, %v1123, 0.0
      %1198 = vadd.xlane.f32.xlu0 %v1197
      %v1199 = vpop.xlane.xlu0 %1198
      %v1200 = vsel %vm971, %v1125, 0.0
      %1201 = vadd.xlane.f32.xlu0 %v1200
      %v1202 = vpop.xlane.xlu0 %1201
      %v1203 = vsel %vm971, %v1127, 0.0
      %1204 = vadd.xlane.f32.xlu0 %v1203
      %v1205 = vpop.xlane.xlu0 %1204
      %v1206 = vsel %vm971, %v1129, 0.0
      %1207 = vadd.xlane.f32.xlu0 %v1206
      %v1208 = vpop.xlane.xlu0 %1207
      %v1209 = vsel %vm971, %v1131, 0.0
      %1210 = vadd.xlane.f32.xlu0 %v1209
      %v1211 = vpop.xlane.xlu0 %1210
      %v1212 = vsel %vm971, %v1133, 0.0
      %1213 = vadd.xlane.f32.xlu0 %v1212
      %v1214 = vpop.xlane.xlu0 %1213
      %v1215 = vsel %vm971, %v1135, 0.0
      %1216 = vadd.xlane.f32.xlu0 %v1215
      %v1217 = vpop.xlane.xlu0 %1216
      %v1218 = vsel %vm971, %v1137, 0.0
      %1219 = vadd.xlane.f32.xlu0 %v1218
      %v1220 = vpop.xlane.xlu0 %1219
      %v1221 = vsel %vm971, %v1139, 0.0
      %1222 = vadd.xlane.f32.xlu0 %v1221
      %v1223 = vpop.xlane.xlu0 %1222
      %v1224 = vsel %vm971, %v1141, 0.0
      %1225 = vadd.xlane.f32.xlu0 %v1224
      %v1226 = vpop.xlane.xlu0 %1225
      %v1227 = vsel %vm971, %v1143, 0.0
      %1228 = vadd.xlane.f32.xlu0 %v1227
      %v1229 = vpop.xlane.xlu0 %1228
      %v1230 = vsel %vm971, %v1145, 0.0
      %1231 = vadd.xlane.f32.xlu0 %v1230
      %v1232 = vpop.xlane.xlu0 %1231
      %v1233 = vsel %vm971, %v1147, 0.0
      %1234 = vadd.xlane.f32.xlu0 %v1233
      %v1235 = vpop.xlane.xlu0 %1234
      %v1236 = vsel %vm971, %v1149, 0.0
      %1237 = vadd.xlane.f32.xlu0 %v1236
      %v1238 = vpop.xlane.xlu0 %1237
      %v1239 = vsel %vm971, %v1151, 0.0
      %1240 = vadd.xlane.f32.xlu0 %v1239
      %v1241 = vpop.xlane.xlu0 %1240
      %v1242 = vsel %vm971, %v1153, 0.0
      %1243 = vadd.xlane.f32.xlu0 %v1242
      %v1244 = vpop.xlane.xlu0 %1243
      %v1245 = vsel %vm971, %v1155, 0.0
      %1246 = vadd.xlane.f32.xlu0 %v1245
      %v1247 = vpop.xlane.xlu0 %1246
      %v1248 = vsel %vm971, %v1157, 0.0
      %1249 = vadd.xlane.f32.xlu0 %v1248
      %v1250 = vpop.xlane.xlu0 %1249
      %v1251 = vsel %vm971, %v1159, 0.0
      %1252 = vadd.xlane.f32.xlu0 %v1251
      %v1253 = vpop.xlane.xlu0 %1252
      %v1254 = vsel %vm971, %v1161, 0.0
      %1255 = vadd.xlane.f32.xlu0 %v1254
      %v1256 = vpop.xlane.xlu0 %1255
      %v1257 = vsel %vm971, %v1163, 0.0
      %1258 = vadd.xlane.f32.xlu0 %v1257
      %v1259 = vpop.xlane.xlu0 %1258
      %v1260 = vrcp.pop %v1166
      %v1261 = vrcp.pop %v1169
      %v1262 = vrcp.pop %v1172
      %v1263 = vrcp.pop %v1175
      %v1264 = vrcp.pop %v1178
      %v1265 = vrcp.pop %v1181
      %v1266 = vrcp.pop %v1184
      %v1267 = vrcp.pop %v1187
      %v1268 = vrcp.pop %v1190
      %v1269 = vrcp.pop %v1193
      %v1270 = vrcp.pop %v1196
      %v1271 = vrcp.pop %v1199
      %v1272 = vrcp.pop %v1202
      %v1273 = vrcp.pop %v1205
      %v1274 = vrcp.pop %v1208
      %v1275 = vrcp.pop %v1211
      %v1276 = vrcp.pop %v1214
      %v1277 = vrcp.pop %v1217
      %v1278 = vrcp.pop %v1220
      %v1279 = vrcp.pop %v1223
      %v1280 = vrcp.pop %v1226
      %v1281 = vrcp.pop %v1229
      %v1282 = vrcp.pop %v1232
      %v1283 = vrcp.pop %v1235
      %v1284 = vrcp.pop %v1238
      %v1285 = vrcp.pop %v1241
      %v1286 = vrcp.pop %v1244
      %v1287 = vrcp.pop %v1247
      %v1288 = vrcp.pop %v1250
      %v1289 = vrcp.pop %v1253
      %v1290 = vrcp.pop %v1256
      %v1291 = vrcp.pop %v1259
      %v1292 = vmul.f32 %v1101, %v1260
      %v1293 = vmul.f32 %v1103, %v1261
      %v1294 = vmul.f32 %v1105, %v1262
      %v1295 = vmul.f32 %v1107, %v1263
      %v1296 = vmul.f32 %v1109, %v1264
      %v1297 = vmul.f32 %v1111, %v1265
      %v1298 = vmul.f32 %v1113, %v1266
      %v1299 = vmul.f32 %v1115, %v1267
      %v1300 = vmul.f32 %v1117, %v1268
      %v1301 = vmul.f32 %v1119, %v1269
      %v1302 = vmul.f32 %v1121, %v1270
      %v1303 = vmul.f32 %v1123, %v1271
      %v1304 = vmul.f32 %v1125, %v1272
      %v1305 = vmul.f32 %v1127, %v1273
      %v1306 = vmul.f32 %v1129, %v1274
      %v1307 = vmul.f32 %v1131, %v1275
      %v1308 = vmul.f32 %v1133, %v1276
      %v1309 = vmul.f32 %v1135, %v1277
      %v1310 = vmul.f32 %v1137, %v1278
      %v1311 = vmul.f32 %v1139, %v1279
      %v1312 = vmul.f32 %v1141, %v1280
      %v1313 = vmul.f32 %v1143, %v1281
      %v1314 = vmul.f32 %v1145, %v1282
      %v1315 = vmul.f32 %v1147, %v1283
      %v1316 = vmul.f32 %v1149, %v1284
      %v1317 = vmul.f32 %v1151, %v1285
      %v1318 = vmul.f32 %v1153, %v1286
      %v1319 = vmul.f32 %v1155, %v1287
      %v1320 = vmul.f32 %v1157, %v1288
      %v1321 = vmul.f32 %v1159, %v1289
      %v1322 = vmul.f32 %v1161, %v1290
      %v1323 = vmul.f32 %v1163, %v1291
      %v1324 = vpack.c.bf16 %v1293, %v1292
      %v1325 = vpack.c.bf16 %v1295, %v1294
      %v1326 = vpack.c.bf16 %v1297, %v1296
      %v1327 = vpack.c.bf16 %v1299, %v1298
      %v1328 = vpack.c.bf16 %v1301, %v1300
      %v1329 = vpack.c.bf16 %v1303, %v1302
      %v1330 = vpack.c.bf16 %v1305, %v1304
      %v1331 = vpack.c.bf16 %v1307, %v1306
      %v1332 = vpack.c.bf16 %v1309, %v1308
      %v1333 = vpack.c.bf16 %v1311, %v1310
      %v1334 = vpack.c.bf16 %v1313, %v1312
      %v1335 = vpack.c.bf16 %v1315, %v1314
      %v1336 = vpack.c.bf16 %v1317, %v1316
      %v1337 = vpack.c.bf16 %v1319, %v1318
      %v1338 = vpack.c.bf16 %v1321, %v1320
      %v1339 = vpack.c.bf16 %v1323, %v1322
      %v1341 = vsel %vm971, %v1324, 0
      %v1344 = vsel %vm971, %v1325, 0
      %v1347 = vsel %vm971, %v1326, 0
      %v1350 = vsel %vm971, %v1327, 0
      %1352 = vmatprep.subr.bf16.mxu0 0
      %1353 = vmatpush1.bf16.msra.mxu0 0
      %1354 = vmatprep.subr.bf16.mxu0 0
      %1355 = vmatpush1.bf16.msra.mxu0 0
      %1356 = vmatprep.subr.bf16.mxu0 0
      %1357 = vmatpush1.bf16.msra.mxu0 0
      %1358 = vmatprep.subr.bf16.mxu0 0
      %1359 = vmatpush1.bf16.msra.mxu0 0
      %1360 = vmatprep.subr.bf16.mxu0 0
      %1361 = vmatpush1.bf16.msra.mxu0 %v296
      %1362 = vmatprep.subr.bf16.mxu0 0
      %1363 = vmatpush1.bf16.msra.mxu0 %v295
      %1364 = vmatprep.subr.bf16.mxu0 0
      %1365 = vmatpush1.bf16.msra.mxu0 %v294
      %1366 = vmatprep.subr.bf16.mxu0 0
      %1367 = vmatpush1.bf16.msra.mxu0 %v293
      %1368 = vmatprep.subr.bf16.mxu0 0
      %1369 = vmatpush2.bf16.msra.mxu0 0
      %1370 = vmatprep.subr.bf16.mxu0 0
      %1371 = vmatpush2.bf16.msra.mxu0 0
      %1372 = vmatprep.subr.bf16.mxu0 0
      %1373 = vmatpush2.bf16.msra.mxu0 0
      %1374 = vmatprep.subr.bf16.mxu0 0
      %1375 = vmatpush2.bf16.msra.mxu0 0
      %1376 = vmatprep.subr.bf16.mxu0 0
      %1377 = vmatpush2.bf16.msra.mxu0 0
      %1378 = vmatprep.subr.bf16.mxu0 0
      %1379 = vmatpush2.bf16.msra.mxu0 0
      %1380 = vmatprep.subr.bf16.mxu0 0
      %1381 = vmatpush2.bf16.msra.mxu0 0
      %1382 = vmatprep.subr.bf16.mxu0 0
      %1383 = vmatpush2.bf16.msra.mxu0 0
      %1384 = vmatprep.mubr.bf16.mxu0 0
      %1385 = vmatmul.mubr.bf16.gmra.mxu0 %v1341
      %v1386 = vpop.f32.mrf.mxu0
      %v1387 = vadd.f32 0.0, %v1386
      %v1388 = vpop.f32.mrf.mxu0
      %v1389 = vpop.f32.mrf.mxu0
      %v1390 = vadd.f32 0.0, %v1389
      %v1391 = vpop.f32.mrf.mxu0
      %1392 = vmatprep.mubr.bf16.mxu0 0
      %1393 = vmatmul.mubr.bf16.gmra.mxu0 %v1344
      %v1394 = vpop.f32.mrf.mxu0
      %v1395 = vadd.f32 0.0, %v1394
      %v1396 = vpop.f32.mrf.mxu0
      %v1397 = vpop.f32.mrf.mxu0
      %v1398 = vadd.f32 0.0, %v1397
      %v1399 = vpop.f32.mrf.mxu0
      %1400 = vmatprep.mubr.bf16.mxu0 0
      %1401 = vmatmul.mubr.bf16.gmra.mxu0 %v1347
      %v1402 = vpop.f32.mrf.mxu0
      %v1403 = vadd.f32 0.0, %v1402
      %v1404 = vpop.f32.mrf.mxu0
      %v1405 = vpop.f32.mrf.mxu0
      %v1406 = vadd.f32 0.0, %v1405
      %v1407 = vpop.f32.mrf.mxu0
      %1408 = vmatprep.mubr.bf16.mxu0 0
      %1409 = vmatmul.mubr.bf16.gmra.mxu0 %v1350
      %v1410 = vpop.f32.mrf.mxu0
      %v1411 = vadd.f32 0.0, %v1410
      %v1412 = vpop.f32.mrf.mxu0
      %v1413 = vpop.f32.mrf.mxu0
      %v1414 = vadd.f32 0.0, %v1413
      %v1415 = vpop.f32.mrf.mxu0
      %1416 = vdwg.mxu0
      %v1418 = vsel %vm971, %v1328, 0
      %v1421 = vsel %vm971, %v1329, 0
      %v1424 = vsel %vm971, %v1330, 0
      %v1427 = vsel %vm971, %v1331, 0
      %1429 = vmatprep.subr.bf16.mxu0 0
      %1430 = vmatpush1.bf16.msra.mxu0 0
      %1431 = vmatprep.subr.bf16.mxu0 0
      %1432 = vmatpush1.bf16.msra.mxu0 0
      %1433 = vmatprep.subr.bf16.mxu0 0
      %1434 = vmatpush1.bf16.msra.mxu0 0
      %1435 = vmatprep.subr.bf16.mxu0 0
      %1436 = vmatpush1.bf16.msra.mxu0 0
      %1437 = vmatprep.subr.bf16.mxu0 0
      %1438 = vmatpush1.bf16.msra.mxu0 %v300
      %1439 = vmatprep.subr.bf16.mxu0 0
      %1440 = vmatpush1.bf16.msra.mxu0 %v299
      %1441 = vmatprep.subr.bf16.mxu0 0
      %1442 = vmatpush1.bf16.msra.mxu0 %v298
      %1443 = vmatprep.subr.bf16.mxu0 0
      %1444 = vmatpush1.bf16.msra.mxu0 %v297
      %1445 = vmatprep.subr.bf16.mxu0 0
      %1446 = vmatpush2.bf16.msra.mxu0 0
      %1447 = vmatprep.subr.bf16.mxu0 0
      %1448 = vmatpush2.bf16.msra.mxu0 0
      %1449 = vmatprep.subr.bf16.mxu0 0
      %1450 = vmatpush2.bf16.msra.mxu0 0
      %1451 = vmatprep.subr.bf16.mxu0 0
      %1452 = vmatpush2.bf16.msra.mxu0 0
      %1453 = vmatprep.subr.bf16.mxu0 0
      %1454 = vmatpush2.bf16.msra.mxu0 0
      %1455 = vmatprep.subr.bf16.mxu0 0
      %1456 = vmatpush2.bf16.msra.mxu0 0
      %1457 = vmatprep.subr.bf16.mxu0 0
      %1458 = vmatpush2.bf16.msra.mxu0 0
      %1459 = vmatprep.subr.bf16.mxu0 0
      %1460 = vmatpush2.bf16.msra.mxu0 0
      %1461 = vmatprep.mubr.bf16.mxu0 0
      %1462 = vmatmul.mubr.bf16.gmra.mxu0 %v1418
      %v1463 = vpop.f32.mrf.mxu0
      %v1464 = vadd.f32 0.0, %v1463
      %v1465 = vpop.f32.mrf.mxu0
      %v1466 = vpop.f32.mrf.mxu0
      %v1467 = vadd.f32 0.0, %v1466
      %v1468 = vpop.f32.mrf.mxu0
      %1469 = vmatprep.mubr.bf16.mxu0 0
      %1470 = vmatmul.mubr.bf16.gmra.mxu0 %v1421
      %v1471 = vpop.f32.mrf.mxu0
      %v1472 = vadd.f32 0.0, %v1471
      %v1473 = vpop.f32.mrf.mxu0
      %v1474 = vpop.f32.mrf.mxu0
      %v1475 = vadd.f32 0.0, %v1474
      %v1476 = vpop.f32.mrf.mxu0
      %1477 = vmatprep.mubr.bf16.mxu0 0
      %1478 = vmatmul.mubr.bf16.gmra.mxu0 %v1424
      %v1479 = vpop.f32.mrf.mxu0
      %v1480 = vadd.f32 0.0, %v1479
      %v1481 = vpop.f32.mrf.mxu0
      %v1482 = vpop.f32.mrf.mxu0
      %v1483 = vadd.f32 0.0, %v1482
      %v1484 = vpop.f32.mrf.mxu0
      %1485 = vmatprep.mubr.bf16.mxu0 0
      %1486 = vmatmul.mubr.bf16.gmra.mxu0 %v1427
      %v1487 = vpop.f32.mrf.mxu0
      %v1488 = vadd.f32 0.0, %v1487
      %v1489 = vpop.f32.mrf.mxu0
      %v1490 = vpop.f32.mrf.mxu0
      %v1491 = vadd.f32 0.0, %v1490
      %v1492 = vpop.f32.mrf.mxu0
      %1493 = vdwg.mxu0
      %v1495 = vsel %vm971, %v1332, 0
      %v1498 = vsel %vm971, %v1333, 0
      %v1501 = vsel %vm971, %v1334, 0
      %v1504 = vsel %vm971, %v1335, 0
      %1506 = vmatprep.subr.bf16.mxu0 0
      %1507 = vmatpush1.bf16.msra.mxu0 0
      %1508 = vmatprep.subr.bf16.mxu0 0
      %1509 = vmatpush1.bf16.msra.mxu0 0
      %1510 = vmatprep.subr.bf16.mxu0 0
      %1511 = vmatpush1.bf16.msra.mxu0 0
      %1512 = vmatprep.subr.bf16.mxu0 0
      %1513 = vmatpush1.bf16.msra.mxu0 0
      %1514 = vmatprep.subr.bf16.mxu0 0
      %1515 = vmatpush1.bf16.msra.mxu0 %v304
      %1516 = vmatprep.subr.bf16.mxu0 0
      %1517 = vmatpush1.bf16.msra.mxu0 %v303
      %1518 = vmatprep.subr.bf16.mxu0 0
      %1519 = vmatpush1.bf16.msra.mxu0 %v302
      %1520 = vmatprep.subr.bf16.mxu0 0
      %1521 = vmatpush1.bf16.msra.mxu0 %v301
      %1522 = vmatprep.subr.bf16.mxu0 0
      %1523 = vmatpush2.bf16.msra.mxu0 0
      %1524 = vmatprep.subr.bf16.mxu0 0
      %1525 = vmatpush2.bf16.msra.mxu0 0
      %1526 = vmatprep.subr.bf16.mxu0 0
      %1527 = vmatpush2.bf16.msra.mxu0 0
      %1528 = vmatprep.subr.bf16.mxu0 0
      %1529 = vmatpush2.bf16.msra.mxu0 0
      %1530 = vmatprep.subr.bf16.mxu0 0
      %1531 = vmatpush2.bf16.msra.mxu0 0
      %1532 = vmatprep.subr.bf16.mxu0 0
      %1533 = vmatpush2.bf16.msra.mxu0 0
      %1534 = vmatprep.subr.bf16.mxu0 0
      %1535 = vmatpush2.bf16.msra.mxu0 0
      %1536 = vmatprep.subr.bf16.mxu0 0
      %1537 = vmatpush2.bf16.msra.mxu0 0
      %1538 = vmatprep.mubr.bf16.mxu0 0
      %1539 = vmatmul.mubr.bf16.gmra.mxu0 %v1495
      %v1540 = vpop.f32.mrf.mxu0
      %v1541 = vadd.f32 0.0, %v1540
      %v1542 = vpop.f32.mrf.mxu0
      %v1543 = vpop.f32.mrf.mxu0
      %v1544 = vadd.f32 0.0, %v1543
      %v1545 = vpop.f32.mrf.mxu0
      %1546 = vmatprep.mubr.bf16.mxu0 0
      %1547 = vmatmul.mubr.bf16.gmra.mxu0 %v1498
      %v1548 = vpop.f32.mrf.mxu0
      %v1549 = vadd.f32 0.0, %v1548
      %v1550 = vpop.f32.mrf.mxu0
      %v1551 = vpop.f32.mrf.mxu0
      %v1552 = vadd.f32 0.0, %v1551
      %v1553 = vpop.f32.mrf.mxu0
      %1554 = vmatprep.mubr.bf16.mxu0 0
      %1555 = vmatmul.mubr.bf16.gmra.mxu0 %v1501
      %v1556 = vpop.f32.mrf.mxu0
      %v1557 = vadd.f32 0.0, %v1556
      %v1558 = vpop.f32.mrf.mxu0
      %v1559 = vpop.f32.mrf.mxu0
      %v1560 = vadd.f32 0.0, %v1559
      %v1561 = vpop.f32.mrf.mxu0
      %1562 = vmatprep.mubr.bf16.mxu0 0
      %1563 = vmatmul.mubr.bf16.gmra.mxu0 %v1504
      %v1564 = vpop.f32.mrf.mxu0
      %v1565 = vadd.f32 0.0, %v1564
      %v1566 = vpop.f32.mrf.mxu0
      %v1567 = vpop.f32.mrf.mxu0
      %v1568 = vadd.f32 0.0, %v1567
      %v1569 = vpop.f32.mrf.mxu0
      %1570 = vdwg.mxu0
      %v1572 = vsel %vm971, %v1336, 0
      %v1575 = vsel %vm971, %v1337, 0
      %v1578 = vsel %vm971, %v1338, 0
      %v1581 = vsel %vm971, %v1339, 0
      %1583 = vmatprep.subr.bf16.mxu0 0
      %1584 = vmatpush1.bf16.msra.mxu0 0
      %1585 = vmatprep.subr.bf16.mxu0 0
      %1586 = vmatpush1.bf16.msra.mxu0 0
      %1587 = vmatprep.subr.bf16.mxu0 0
      %1588 = vmatpush1.bf16.msra.mxu0 0
      %1589 = vmatprep.subr.bf16.mxu0 0
      %1590 = vmatpush1.bf16.msra.mxu0 0
      %1591 = vmatprep.subr.bf16.mxu0 0
      %1592 = vmatpush1.bf16.msra.mxu0 %v308
      %1593 = vmatprep.subr.bf16.mxu0 0
      %1594 = vmatpush1.bf16.msra.mxu0 %v307
      %1595 = vmatprep.subr.bf16.mxu0 0
      %1596 = vmatpush1.bf16.msra.mxu0 %v306
      %1597 = vmatprep.subr.bf16.mxu0 0
      %1598 = vmatpush1.bf16.msra.mxu0 %v305
      %1599 = vmatprep.subr.bf16.mxu0 0
      %1600 = vmatpush2.bf16.msra.mxu0 0
      %1601 = vmatprep.subr.bf16.mxu0 0
      %1602 = vmatpush2.bf16.msra.mxu0 0
      %1603 = vmatprep.subr.bf16.mxu0 0
      %1604 = vmatpush2.bf16.msra.mxu0 0
      %1605 = vmatprep.subr.bf16.mxu0 0
      %1606 = vmatpush2.bf16.msra.mxu0 0
      %1607 = vmatprep.subr.bf16.mxu0 0
      %1608 = vmatpush2.bf16.msra.mxu0 0
      %1609 = vmatprep.subr.bf16.mxu0 0
      %1610 = vmatpush2.bf16.msra.mxu0 0
      %1611 = vmatprep.subr.bf16.mxu0 0
      %1612 = vmatpush2.bf16.msra.mxu0 0
      %1613 = vmatprep.subr.bf16.mxu0 0
      %1614 = vmatpush2.bf16.msra.mxu0 0
      %1615 = vmatprep.mubr.bf16.mxu0 0
      %1616 = vmatmul.mubr.bf16.gmra.mxu0 %v1572
      %v1617 = vpop.f32.mrf.mxu0
      %v1618 = vadd.f32 0.0, %v1617
      %v1619 = vpop.f32.mrf.mxu0
      %v1620 = vpop.f32.mrf.mxu0
      %v1621 = vadd.f32 0.0, %v1620
      %v1622 = vpop.f32.mrf.mxu0
      %1623 = vmatprep.mubr.bf16.mxu0 0
      %1624 = vmatmul.mubr.bf16.gmra.mxu0 %v1575
      %v1625 = vpop.f32.mrf.mxu0
      %v1626 = vadd.f32 0.0, %v1625
      %v1627 = vpop.f32.mrf.mxu0
      %v1628 = vpop.f32.mrf.mxu0
      %v1629 = vadd.f32 0.0, %v1628
      %v1630 = vpop.f32.mrf.mxu0
      %1631 = vmatprep.mubr.bf16.mxu0 0
      %1632 = vmatmul.mubr.bf16.gmra.mxu0 %v1578
      %v1633 = vpop.f32.mrf.mxu0
      %v1634 = vadd.f32 0.0, %v1633
      %v1635 = vpop.f32.mrf.mxu0
      %v1636 = vpop.f32.mrf.mxu0
      %v1637 = vadd.f32 0.0, %v1636
      %v1638 = vpop.f32.mrf.mxu0
      %1639 = vmatprep.mubr.bf16.mxu0 0
      %1640 = vmatmul.mubr.bf16.gmra.mxu0 %v1581
      %v1641 = vpop.f32.mrf.mxu0
      %v1642 = vadd.f32 0.0, %v1641
      %v1643 = vpop.f32.mrf.mxu0
      %v1644 = vpop.f32.mrf.mxu0
      %v1645 = vadd.f32 0.0, %v1644
      %v1646 = vpop.f32.mrf.mxu0
      %1647 = vdwg.mxu0
      %s1648 = scalar_lea.vmem %s3, 64
      %v1649 = vld [vmem:[%s1648] sm:$0xff]
      %v1650 = vld [vmem:[%s1648 + $0x8] sm:$0xff]
      %v1651 = vld [vmem:[%s1648 + $0x10] sm:$0xff]
      %v1652 = vld [vmem:[%s1648 + $0x18] sm:$0xff]
      %v1653 = vld [vmem:[%s1648 + $0x20] sm:$0xff]
      %v1654 = vld [vmem:[%s1648 + $0x28] sm:$0xff]
      %v1655 = vld [vmem:[%s1648 + $0x30] sm:$0xff]
      %v1656 = vld [vmem:[%s1648 + $0x38] sm:$0xff]
      %1657 = vrot.lane.b32.xlu0 %v542, 120
      %v1658 = vpop.permute.xlu0 %1657
      %1659 = vrot.lane.b32.xlu0 %v543, 120
      %v1660 = vpop.permute.xlu0 %1659
      %1661 = vrot.lane.b32.xlu0 %v544, 120
      %v1662 = vpop.permute.xlu0 %1661
      %1663 = vrot.lane.b32.xlu0 %v545, 120
      %v1664 = vpop.permute.xlu0 %1663
      %1665 = vrot.lane.b32.xlu0 %v542, 88
      %v1666 = vpop.permute.xlu0 %1665
      %1667 = vrot.lane.b32.xlu0 %v543, 88
      %v1668 = vpop.permute.xlu0 %1667
      %1669 = vrot.lane.b32.xlu0 %v544, 88
      %v1670 = vpop.permute.xlu0 %1669
      %1671 = vrot.lane.b32.xlu0 %v545, 88
      %v1672 = vpop.permute.xlu0 %1671
      %v1674 = vsel %vm578, %v1658, 0
      %v1677 = vsel %vm578, %v1660, 0
      %v1680 = vsel %vm578, %v1662, 0
      %v1683 = vsel %vm578, %v1664, 0
      %v1686 = vsel %vm578, %v1666, 0
      %v1689 = vsel %vm578, %v1668, 0
      %v1692 = vsel %vm578, %v1670, 0
      %v1695 = vsel %vm578, %v1672, 0
      %1697 = vmatprep.subr.bf16.mxu0 0
      %1698 = vmatpush1.bf16.xpose.msra.mxu0 0
      %1699 = vmatprep.subr.bf16.mxu0 0
      %1700 = vmatpush1.bf16.xpose.msra.mxu0 0
      %1701 = vmatprep.subr.bf16.mxu0 0
      %1702 = vmatpush1.bf16.xpose.msra.mxu0 0
      %1703 = vmatprep.subr.bf16.mxu0 0
      %1704 = vmatpush1.bf16.xpose.msra.mxu0 0
      %1705 = vmatprep.subr.bf16.mxu0 0
      %1706 = vmatpush1.bf16.xpose.msra.mxu0 %v1695
      %1707 = vmatprep.subr.bf16.mxu0 0
      %1708 = vmatpush1.bf16.xpose.msra.mxu0 %v1692
      %1709 = vmatprep.subr.bf16.mxu0 0
      %1710 = vmatpush1.bf16.xpose.msra.mxu0 %v1689
      %1711 = vmatprep.subr.bf16.mxu0 0
      %1712 = vmatpush1.bf16.xpose.msra.mxu0 %v1686
      %1713 = vmatprep.subr.bf16.mxu0 0
      %1714 = vmatpush2.bf16.xpose.msra.mxu0 0
      %1715 = vmatprep.subr.bf16.mxu0 0
      %1716 = vmatpush2.bf16.xpose.msra.mxu0 0
      %1717 = vmatprep.subr.bf16.mxu0 0
      %1718 = vmatpush2.bf16.xpose.msra.mxu0 0
      %1719 = vmatprep.subr.bf16.mxu0 0
      %1720 = vmatpush2.bf16.xpose.msra.mxu0 0
      %1721 = vmatprep.subr.bf16.mxu0 0
      %1722 = vmatpush2.bf16.xpose.msra.mxu0 0
      %1723 = vmatprep.subr.bf16.mxu0 0
      %1724 = vmatpush2.bf16.xpose.msra.mxu0 0
      %1725 = vmatprep.subr.bf16.mxu0 0
      %1726 = vmatpush2.bf16.xpose.msra.mxu0 0
      %1727 = vmatprep.subr.bf16.mxu0 0
      %1728 = vmatpush2.bf16.xpose.msra.mxu0 0
      %1729 = vmatprep.mubr.bf16.mxu0 0
      %1730 = vmatmul.mubr.bf16.gmra.mxu0 %v1674
      %v1731 = vpop.f32.mrf.mxu0
      %v1732 = vadd.f32 %v1649, %v1731
      %v1733 = vpop.f32.mrf.mxu0
      %v1734 = vpop.f32.mrf.mxu0
      %v1735 = vadd.f32 %v1650, %v1734
      %v1736 = vpop.f32.mrf.mxu0
      %1737 = vmatprep.mubr.bf16.mxu0 0
      %1738 = vmatmul.mubr.bf16.gmra.mxu0 %v1677
      %v1739 = vpop.f32.mrf.mxu0
      %v1740 = vadd.f32 %v1651, %v1739
      %v1741 = vpop.f32.mrf.mxu0
      %v1742 = vpop.f32.mrf.mxu0
      %v1743 = vadd.f32 %v1652, %v1742
      %v1744 = vpop.f32.mrf.mxu0
      %1745 = vmatprep.mubr.bf16.mxu0 0
      %1746 = vmatmul.mubr.bf16.gmra.mxu0 %v1680
      %v1747 = vpop.f32.mrf.mxu0
      %v1748 = vadd.f32 %v1653, %v1747
      %v1749 = vpop.f32.mrf.mxu0
      %v1750 = vpop.f32.mrf.mxu0
      %v1751 = vadd.f32 %v1654, %v1750
      %v1752 = vpop.f32.mrf.mxu0
      %1753 = vmatprep.mubr.bf16.mxu0 0
      %1754 = vmatmul.mubr.bf16.gmra.mxu0 %v1683
      %v1755 = vpop.f32.mrf.mxu0
      %v1756 = vadd.f32 %v1655, %v1755
      %v1757 = vpop.f32.mrf.mxu0
      %v1758 = vpop.f32.mrf.mxu0
      %v1759 = vadd.f32 %v1656, %v1758
      %v1760 = vpop.f32.mrf.mxu0
      %1761 = vdwg.mxu0
      %1762 = vrot.lane.b32.xlu0 %v546, 120
      %v1763 = vpop.permute.xlu0 %1762
      %1764 = vrot.lane.b32.xlu0 %v547, 120
      %v1765 = vpop.permute.xlu0 %1764
      %1766 = vrot.lane.b32.xlu0 %v548, 120
      %v1767 = vpop.permute.xlu0 %1766
      %1768 = vrot.lane.b32.xlu0 %v549, 120
      %v1769 = vpop.permute.xlu0 %1768
      %1770 = vrot.lane.b32.xlu0 %v546, 88
      %v1771 = vpop.permute.xlu0 %1770
      %1772 = vrot.lane.b32.xlu0 %v547, 88
      %v1773 = vpop.permute.xlu0 %1772
      %1774 = vrot.lane.b32.xlu0 %v548, 88
      %v1775 = vpop.permute.xlu0 %1774
      %1776 = vrot.lane.b32.xlu0 %v549, 88
      %v1777 = vpop.permute.xlu0 %1776
      %v1779 = vsel %vm578, %v1763, 0
      %v1782 = vsel %vm578, %v1765, 0
      %v1785 = vsel %vm578, %v1767, 0
      %v1788 = vsel %vm578, %v1769, 0
      %v1791 = vsel %vm578, %v1771, 0
      %v1794 = vsel %vm578, %v1773, 0
      %v1797 = vsel %vm578, %v1775, 0
      %v1800 = vsel %vm578, %v1777, 0
      %1802 = vmatprep.subr.bf16.mxu0 0
      %1803 = vmatpush1.bf16.xpose.msra.mxu0 0
      %1804 = vmatprep.subr.bf16.mxu0 0
      %1805 = vmatpush1.bf16.xpose.msra.mxu0 0
      %1806 = vmatprep.subr.bf16.mxu0 0
      %1807 = vmatpush1.bf16.xpose.msra.mxu0 0
      %1808 = vmatprep.subr.bf16.mxu0 0
      %1809 = vmatpush1.bf16.xpose.msra.mxu0 0
      %1810 = vmatprep.subr.bf16.mxu0 0
      %1811 = vmatpush1.bf16.xpose.msra.mxu0 %v1800
      %1812 = vmatprep.subr.bf16.mxu0 0
      %1813 = vmatpush1.bf16.xpose.msra.mxu0 %v1797
      %1814 = vmatprep.subr.bf16.mxu0 0
      %1815 = vmatpush1.bf16.xpose.msra.mxu0 %v1794
      %1816 = vmatprep.subr.bf16.mxu0 0
      %1817 = vmatpush1.bf16.xpose.msra.mxu0 %v1791
      %1818 = vmatprep.subr.bf16.mxu0 0
      %1819 = vmatpush2.bf16.xpose.msra.mxu0 0
      %1820 = vmatprep.subr.bf16.mxu0 0
      %1821 = vmatpush2.bf16.xpose.msra.mxu0 0
      %1822 = vmatprep.subr.bf16.mxu0 0
      %1823 = vmatpush2.bf16.xpose.msra.mxu0 0
      %1824 = vmatprep.subr.bf16.mxu0 0
      %1825 = vmatpush2.bf16.xpose.msra.mxu0 0
      %1826 = vmatprep.subr.bf16.mxu0 0
      %1827 = vmatpush2.bf16.xpose.msra.mxu0 0
      %1828 = vmatprep.subr.bf16.mxu0 0
      %1829 = vmatpush2.bf16.xpose.msra.mxu0 0
      %1830 = vmatprep.subr.bf16.mxu0 0
      %1831 = vmatpush2.bf16.xpose.msra.mxu0 0
      %1832 = vmatprep.subr.bf16.mxu0 0
      %1833 = vmatpush2.bf16.xpose.msra.mxu0 0
      %1834 = vmatprep.mubr.bf16.mxu0 0
      %1835 = vmatmul.mubr.bf16.gmra.mxu0 %v1779
      %v1836 = vpop.f32.mrf.mxu0
      %v1837 = vadd.f32 %v1649, %v1836
      %v1838 = vpop.f32.mrf.mxu0
      %v1839 = vpop.f32.mrf.mxu0
      %v1840 = vadd.f32 %v1650, %v1839
      %v1841 = vpop.f32.mrf.mxu0
      %1842 = vmatprep.mubr.bf16.mxu0 0
      %1843 = vmatmul.mubr.bf16.gmra.mxu0 %v1782
      %v1844 = vpop.f32.mrf.mxu0
      %v1845 = vadd.f32 %v1651, %v1844
      %v1846 = vpop.f32.mrf.mxu0
      %v1847 = vpop.f32.mrf.mxu0
      %v1848 = vadd.f32 %v1652, %v1847
      %v1849 = vpop.f32.mrf.mxu0
      %1850 = vmatprep.mubr.bf16.mxu0 0
      %1851 = vmatmul.mubr.bf16.gmra.mxu0 %v1785
      %v1852 = vpop.f32.mrf.mxu0
      %v1853 = vadd.f32 %v1653, %v1852
      %v1854 = vpop.f32.mrf.mxu0
      %v1855 = vpop.f32.mrf.mxu0
      %v1856 = vadd.f32 %v1654, %v1855
      %v1857 = vpop.f32.mrf.mxu0
      %1858 = vmatprep.mubr.bf16.mxu0 0
      %1859 = vmatmul.mubr.bf16.gmra.mxu0 %v1788
      %v1860 = vpop.f32.mrf.mxu0
      %v1861 = vadd.f32 %v1655, %v1860
      %v1862 = vpop.f32.mrf.mxu0
      %v1863 = vpop.f32.mrf.mxu0
      %v1864 = vadd.f32 %v1656, %v1863
      %v1865 = vpop.f32.mrf.mxu0
      %1866 = vdwg.mxu0
      %1867 = vrot.lane.b32.xlu0 %v550, 120
      %v1868 = vpop.permute.xlu0 %1867
      %1869 = vrot.lane.b32.xlu0 %v551, 120
      %v1870 = vpop.permute.xlu0 %1869
      %1871 = vrot.lane.b32.xlu0 %v552, 120
      %v1872 = vpop.permute.xlu0 %1871
      %1873 = vrot.lane.b32.xlu0 %v553, 120
      %v1874 = vpop.permute.xlu0 %1873
      %1875 = vrot.lane.b32.xlu0 %v550, 88
      %v1876 = vpop.permute.xlu0 %1875
      %1877 = vrot.lane.b32.xlu0 %v551, 88
      %v1878 = vpop.permute.xlu0 %1877
      %1879 = vrot.lane.b32.xlu0 %v552, 88
      %v1880 = vpop.permute.xlu0 %1879
      %1881 = vrot.lane.b32.xlu0 %v553, 88
      %v1882 = vpop.permute.xlu0 %1881
      %v1884 = vsel %vm578, %v1868, 0
      %v1887 = vsel %vm578, %v1870, 0
      %v1890 = vsel %vm578, %v1872, 0
      %v1893 = vsel %vm578, %v1874, 0
      %v1896 = vsel %vm578, %v1876, 0
      %v1899 = vsel %vm578, %v1878, 0
      %v1902 = vsel %vm578, %v1880, 0
      %v1905 = vsel %vm578, %v1882, 0
      %1907 = vmatprep.subr.bf16.mxu0 0
      %1908 = vmatpush1.bf16.xpose.msra.mxu0 0
      %1909 = vmatprep.subr.bf16.mxu0 0
      %1910 = vmatpush1.bf16.xpose.msra.mxu0 0
      %1911 = vmatprep.subr.bf16.mxu0 0
      %1912 = vmatpush1.bf16.xpose.msra.mxu0 0
      %1913 = vmatprep.subr.bf16.mxu0 0
      %1914 = vmatpush1.bf16.xpose.msra.mxu0 0
      %1915 = vmatprep.subr.bf16.mxu0 0
      %1916 = vmatpush1.bf16.xpose.msra.mxu0 %v1905
      %1917 = vmatprep.subr.bf16.mxu0 0
      %1918 = vmatpush1.bf16.xpose.msra.mxu0 %v1902
      %1919 = vmatprep.subr.bf16.mxu0 0
      %1920 = vmatpush1.bf16.xpose.msra.mxu0 %v1899
      %1921 = vmatprep.subr.bf16.mxu0 0
      %1922 = vmatpush1.bf16.xpose.msra.mxu0 %v1896
      %1923 = vmatprep.subr.bf16.mxu0 0
      %1924 = vmatpush2.bf16.xpose.msra.mxu0 0
      %1925 = vmatprep.subr.bf16.mxu0 0
      %1926 = vmatpush2.bf16.xpose.msra.mxu0 0
      %1927 = vmatprep.subr.bf16.mxu0 0
      %1928 = vmatpush2.bf16.xpose.msra.mxu0 0
      %1929 = vmatprep.subr.bf16.mxu0 0
      %1930 = vmatpush2.bf16.xpose.msra.mxu0 0
      %1931 = vmatprep.subr.bf16.mxu0 0
      %1932 = vmatpush2.bf16.xpose.msra.mxu0 0
      %1933 = vmatprep.subr.bf16.mxu0 0
      %1934 = vmatpush2.bf16.xpose.msra.mxu0 0
      %1935 = vmatprep.subr.bf16.mxu0 0
      %1936 = vmatpush2.bf16.xpose.msra.mxu0 0
      %1937 = vmatprep.subr.bf16.mxu0 0
      %1938 = vmatpush2.bf16.xpose.msra.mxu0 0
      %1939 = vmatprep.mubr.bf16.mxu0 0
      %1940 = vmatmul.mubr.bf16.gmra.mxu0 %v1884
      %v1941 = vpop.f32.mrf.mxu0
      %v1942 = vadd.f32 %v1649, %v1941
      %v1943 = vpop.f32.mrf.mxu0
      %v1944 = vpop.f32.mrf.mxu0
      %v1945 = vadd.f32 %v1650, %v1944
      %v1946 = vpop.f32.mrf.mxu0
      %1947 = vmatprep.mubr.bf16.mxu0 0
      %1948 = vmatmul.mubr.bf16.gmra.mxu0 %v1887
      %v1949 = vpop.f32.mrf.mxu0
      %v1950 = vadd.f32 %v1651, %v1949
      %v1951 = vpop.f32.mrf.mxu0
      %v1952 = vpop.f32.mrf.mxu0
      %v1953 = vadd.f32 %v1652, %v1952
      %v1954 = vpop.f32.mrf.mxu0
      %1955 = vmatprep.mubr.bf16.mxu0 0
      %1956 = vmatmul.mubr.bf16.gmra.mxu0 %v1890
      %v1957 = vpop.f32.mrf.mxu0
      %v1958 = vadd.f32 %v1653, %v1957
      %v1959 = vpop.f32.mrf.mxu0
      %v1960 = vpop.f32.mrf.mxu0
      %v1961 = vadd.f32 %v1654, %v1960
      %v1962 = vpop.f32.mrf.mxu0
      %1963 = vmatprep.mubr.bf16.mxu0 0
      %1964 = vmatmul.mubr.bf16.gmra.mxu0 %v1893
      %v1965 = vpop.f32.mrf.mxu0
      %v1966 = vadd.f32 %v1655, %v1965
      %v1967 = vpop.f32.mrf.mxu0
      %v1968 = vpop.f32.mrf.mxu0
      %v1969 = vadd.f32 %v1656, %v1968
      %v1970 = vpop.f32.mrf.mxu0
      %1971 = vdwg.mxu0
      %1972 = vrot.lane.b32.xlu0 %v554, 120
      %v1973 = vpop.permute.xlu0 %1972
      %1974 = vrot.lane.b32.xlu0 %v555, 120
      %v1975 = vpop.permute.xlu0 %1974
      %1976 = vrot.lane.b32.xlu0 %v556, 120
      %v1977 = vpop.permute.xlu0 %1976
      %1978 = vrot.lane.b32.xlu0 %v557, 120
      %v1979 = vpop.permute.xlu0 %1978
      %1980 = vrot.lane.b32.xlu0 %v554, 88
      %v1981 = vpop.permute.xlu0 %1980
      %1982 = vrot.lane.b32.xlu0 %v555, 88
      %v1983 = vpop.permute.xlu0 %1982
      %1984 = vrot.lane.b32.xlu0 %v556, 88
      %v1985 = vpop.permute.xlu0 %1984
      %1986 = vrot.lane.b32.xlu0 %v557, 88
      %v1987 = vpop.permute.xlu0 %1986
      %v1989 = vsel %vm578, %v1973, 0
      %v1992 = vsel %vm578, %v1975, 0
      %v1995 = vsel %vm578, %v1977, 0
      %v1998 = vsel %vm578, %v1979, 0
      %v2001 = vsel %vm578, %v1981, 0
      %v2004 = vsel %vm578, %v1983, 0
      %v2007 = vsel %vm578, %v1985, 0
      %v2010 = vsel %vm578, %v1987, 0
      %2012 = vmatprep.subr.bf16.mxu0 0
      %2013 = vmatpush1.bf16.xpose.msra.mxu0 0
      %2014 = vmatprep.subr.bf16.mxu0 0
      %2015 = vmatpush1.bf16.xpose.msra.mxu0 0
      %2016 = vmatprep.subr.bf16.mxu0 0
      %2017 = vmatpush1.bf16.xpose.msra.mxu0 0
      %2018 = vmatprep.subr.bf16.mxu0 0
      %2019 = vmatpush1.bf16.xpose.msra.mxu0 0
      %2020 = vmatprep.subr.bf16.mxu0 0
      %2021 = vmatpush1.bf16.xpose.msra.mxu0 %v2010
      %2022 = vmatprep.subr.bf16.mxu0 0
      %2023 = vmatpush1.bf16.xpose.msra.mxu0 %v2007
      %2024 = vmatprep.subr.bf16.mxu0 0
      %2025 = vmatpush1.bf16.xpose.msra.mxu0 %v2004
      %2026 = vmatprep.subr.bf16.mxu0 0
      %2027 = vmatpush1.bf16.xpose.msra.mxu0 %v2001
      %2028 = vmatprep.subr.bf16.mxu0 0
      %2029 = vmatpush2.bf16.xpose.msra.mxu0 0
      %2030 = vmatprep.subr.bf16.mxu0 0
      %2031 = vmatpush2.bf16.xpose.msra.mxu0 0
      %2032 = vmatprep.subr.bf16.mxu0 0
      %2033 = vmatpush2.bf16.xpose.msra.mxu0 0
      %2034 = vmatprep.subr.bf16.mxu0 0
      %2035 = vmatpush2.bf16.xpose.msra.mxu0 0
      %2036 = vmatprep.subr.bf16.mxu0 0
      %2037 = vmatpush2.bf16.xpose.msra.mxu0 0
      %2038 = vmatprep.subr.bf16.mxu0 0
      %2039 = vmatpush2.bf16.xpose.msra.mxu0 0
      %2040 = vmatprep.subr.bf16.mxu0 0
      %2041 = vmatpush2.bf16.xpose.msra.mxu0 0
      %2042 = vmatprep.subr.bf16.mxu0 0
      %2043 = vmatpush2.bf16.xpose.msra.mxu0 0
      %2044 = vmatprep.mubr.bf16.mxu0 0
      %2045 = vmatmul.mubr.bf16.gmra.mxu0 %v1989
      %v2046 = vpop.f32.mrf.mxu0
      %v2047 = vadd.f32 %v1649, %v2046
      %v2048 = vpop.f32.mrf.mxu0
      %v2049 = vpop.f32.mrf.mxu0
      %v2050 = vadd.f32 %v1650, %v2049
      %v2051 = vpop.f32.mrf.mxu0
      %2052 = vmatprep.mubr.bf16.mxu0 0
      %2053 = vmatmul.mubr.bf16.gmra.mxu0 %v1992
      %v2054 = vpop.f32.mrf.mxu0
      %v2055 = vadd.f32 %v1651, %v2054
      %v2056 = vpop.f32.mrf.mxu0
      %v2057 = vpop.f32.mrf.mxu0
      %v2058 = vadd.f32 %v1652, %v2057
      %v2059 = vpop.f32.mrf.mxu0
      %2060 = vmatprep.mubr.bf16.mxu0 0
      %2061 = vmatmul.mubr.bf16.gmra.mxu0 %v1995
      %v2062 = vpop.f32.mrf.mxu0
      %v2063 = vadd.f32 %v1653, %v2062
      %v2064 = vpop.f32.mrf.mxu0
      %v2065 = vpop.f32.mrf.mxu0
      %v2066 = vadd.f32 %v1654, %v2065
      %v2067 = vpop.f32.mrf.mxu0
      %2068 = vmatprep.mubr.bf16.mxu0 0
      %2069 = vmatmul.mubr.bf16.gmra.mxu0 %v1998
      %v2070 = vpop.f32.mrf.mxu0
      %v2071 = vadd.f32 %v1655, %v2070
      %v2072 = vpop.f32.mrf.mxu0
      %v2073 = vpop.f32.mrf.mxu0
      %v2074 = vadd.f32 %v1656, %v2073
      %v2075 = vpop.f32.mrf.mxu0
      %2076 = vdwg.mxu0
      %v2077 = vsel %vm971, %v1732, -inf
      %2078 = vmax.xlane.f32.xlu0 %v2077
      %v2079 = vpop.xlane.xlu0 %2078
      %v2080 = vsel %vm971, %v1735, -inf
      %2081 = vmax.xlane.f32.xlu0 %v2080
      %v2082 = vpop.xlane.xlu0 %2081
      %v2083 = vsel %vm971, %v1740, -inf
      %2084 = vmax.xlane.f32.xlu0 %v2083
      %v2085 = vpop.xlane.xlu0 %2084
      %v2086 = vsel %vm971, %v1743, -inf
      %2087 = vmax.xlane.f32.xlu0 %v2086
      %v2088 = vpop.xlane.xlu0 %2087
      %v2089 = vsel %vm971, %v1748, -inf
      %2090 = vmax.xlane.f32.xlu0 %v2089
      %v2091 = vpop.xlane.xlu0 %2090
      %v2092 = vsel %vm971, %v1751, -inf
      %2093 = vmax.xlane.f32.xlu0 %v2092
      %v2094 = vpop.xlane.xlu0 %2093
      %v2095 = vsel %vm971, %v1756, -inf
      %2096 = vmax.xlane.f32.xlu0 %v2095
      %v2097 = vpop.xlane.xlu0 %2096
      %v2098 = vsel %vm971, %v1759, -inf
      %2099 = vmax.xlane.f32.xlu0 %v2098
      %v2100 = vpop.xlane.xlu0 %2099
      %v2101 = vsel %vm971, %v1837, -inf
      %2102 = vmax.xlane.f32.xlu0 %v2101
      %v2103 = vpop.xlane.xlu0 %2102
      %v2104 = vsel %vm971, %v1840, -inf
      %2105 = vmax.xlane.f32.xlu0 %v2104
      %v2106 = vpop.xlane.xlu0 %2105
      %v2107 = vsel %vm971, %v1845, -inf
      %2108 = vmax.xlane.f32.xlu0 %v2107
      %v2109 = vpop.xlane.xlu0 %2108
      %v2110 = vsel %vm971, %v1848, -inf
      %2111 = vmax.xlane.f32.xlu0 %v2110
      %v2112 = vpop.xlane.xlu0 %2111
      %v2113 = vsel %vm971, %v1853, -inf
      %2114 = vmax.xlane.f32.xlu0 %v2113
      %v2115 = vpop.xlane.xlu0 %2114
      %v2116 = vsel %vm971, %v1856, -inf
      %2117 = vmax.xlane.f32.xlu0 %v2116
      %v2118 = vpop.xlane.xlu0 %2117
      %v2119 = vsel %vm971, %v1861, -inf
      %2120 = vmax.xlane.f32.xlu0 %v2119
      %v2121 = vpop.xlane.xlu0 %2120
      %v2122 = vsel %vm971, %v1864, -inf
      %2123 = vmax.xlane.f32.xlu0 %v2122
      %v2124 = vpop.xlane.xlu0 %2123
      %v2125 = vsel %vm971, %v1942, -inf
      %2126 = vmax.xlane.f32.xlu0 %v2125
      %v2127 = vpop.xlane.xlu0 %2126
      %v2128 = vsel %vm971, %v1945, -inf
      %2129 = vmax.xlane.f32.xlu0 %v2128
      %v2130 = vpop.xlane.xlu0 %2129
      %v2131 = vsel %vm971, %v1950, -inf
      %2132 = vmax.xlane.f32.xlu0 %v2131
      %v2133 = vpop.xlane.xlu0 %2132
      %v2134 = vsel %vm971, %v1953, -inf
      %2135 = vmax.xlane.f32.xlu0 %v2134
      %v2136 = vpop.xlane.xlu0 %2135
      %v2137 = vsel %vm971, %v1958, -inf
      %2138 = vmax.xlane.f32.xlu0 %v2137
      %v2139 = vpop.xlane.xlu0 %2138
      %v2140 = vsel %vm971, %v1961, -inf
      %2141 = vmax.xlane.f32.xlu0 %v2140
      %v2142 = vpop.xlane.xlu0 %2141
      %v2143 = vsel %vm971, %v1966, -inf
      %2144 = vmax.xlane.f32.xlu0 %v2143
      %v2145 = vpop.xlane.xlu0 %2144
      %v2146 = vsel %vm971, %v1969, -inf
      %2147 = vmax.xlane.f32.xlu0 %v2146
      %v2148 = vpop.xlane.xlu0 %2147
      %v2149 = vsel %vm971, %v2047, -inf
      %2150 = vmax.xlane.f32.xlu0 %v2149
      %v2151 = vpop.xlane.xlu0 %2150
      %v2152 = vsel %vm971, %v2050, -inf
      %2153 = vmax.xlane.f32.xlu0 %v2152
      %v2154 = vpop.xlane.xlu0 %2153
      %v2155 = vsel %vm971, %v2055, -inf
      %2156 = vmax.xlane.f32.xlu0 %v2155
      %v2157 = vpop.xlane.xlu0 %2156
      %v2158 = vsel %vm971, %v2058, -inf
      %2159 = vmax.xlane.f32.xlu0 %v2158
      %v2160 = vpop.xlane.xlu0 %2159
      %v2161 = vsel %vm971, %v2063, -inf
      %2162 = vmax.xlane.f32.xlu0 %v2161
      %v2163 = vpop.xlane.xlu0 %2162
      %v2164 = vsel %vm971, %v2066, -inf
      %2165 = vmax.xlane.f32.xlu0 %v2164
      %v2166 = vpop.xlane.xlu0 %2165
      %v2167 = vsel %vm971, %v2071, -inf
      %2168 = vmax.xlane.f32.xlu0 %v2167
      %v2169 = vpop.xlane.xlu0 %2168
      %v2170 = vsel %vm971, %v2074, -inf
      %2171 = vmax.xlane.f32.xlu0 %v2170
      %v2172 = vpop.xlane.xlu0 %2171
      %v2173 = vsub.f32 %v1732, %v2079
      %v2174 = vsub.f32 %v1735, %v2082
      %v2175 = vsub.f32 %v1740, %v2085
      %v2176 = vsub.f32 %v1743, %v2088
      %v2177 = vsub.f32 %v1748, %v2091
      %v2178 = vsub.f32 %v1751, %v2094
      %v2179 = vsub.f32 %v1756, %v2097
      %v2180 = vsub.f32 %v1759, %v2100
      %v2181 = vsub.f32 %v1837, %v2103
      %v2182 = vsub.f32 %v1840, %v2106
      %v2183 = vsub.f32 %v1845, %v2109
      %v2184 = vsub.f32 %v1848, %v2112
      %v2185 = vsub.f32 %v1853, %v2115
      %v2186 = vsub.f32 %v1856, %v2118
      %v2187 = vsub.f32 %v1861, %v2121
      %v2188 = vsub.f32 %v1864, %v2124
      %v2189 = vsub.f32 %v1942, %v2127
      %v2190 = vsub.f32 %v1945, %v2130
      %v2191 = vsub.f32 %v1950, %v2133
      %v2192 = vsub.f32 %v1953, %v2136
      %v2193 = vsub.f32 %v1958, %v2139
      %v2194 = vsub.f32 %v1961, %v2142
      %v2195 = vsub.f32 %v1966, %v2145
      %v2196 = vsub.f32 %v1969, %v2148
      %v2197 = vsub.f32 %v2047, %v2151
      %v2198 = vsub.f32 %v2050, %v2154
      %v2199 = vsub.f32 %v2055, %v2157
      %v2200 = vsub.f32 %v2058, %v2160
      %v2201 = vsub.f32 %v2063, %v2163
      %v2202 = vsub.f32 %v2066, %v2166
      %v2203 = vsub.f32 %v2071, %v2169
      %v2204 = vsub.f32 %v2074, %v2172
      %v2205 = vmul.f32 %v2173, 1.442695
      %v2206 = vpow.pop %v2205
      %v2207 = vmul.f32 %v2174, 1.442695
      %v2208 = vpow.pop %v2207
      %v2209 = vmul.f32 %v2175, 1.442695
      %v2210 = vpow.pop %v2209
      %v2211 = vmul.f32 %v2176, 1.442695
      %v2212 = vpow.pop %v2211
      %v2213 = vmul.f32 %v2177, 1.442695
      %v2214 = vpow.pop %v2213
      %v2215 = vmul.f32 %v2178, 1.442695
      %v2216 = vpow.pop %v2215
      %v2217 = vmul.f32 %v2179, 1.442695
      %v2218 = vpow.pop %v2217
      %v2219 = vmul.f32 %v2180, 1.442695
      %v2220 = vpow.pop %v2219
      %v2221 = vmul.f32 %v2181, 1.442695
      %v2222 = vpow.pop %v2221
      %v2223 = vmul.f32 %v2182, 1.442695
      %v2224 = vpow.pop %v2223
      %v2225 = vmul.f32 %v2183, 1.442695
      %v2226 = vpow.pop %v2225
      %v2227 = vmul.f32 %v2184, 1.442695
      %v2228 = vpow.pop %v2227
      %v2229 = vmul.f32 %v2185, 1.442695
      %v2230 = vpow.pop %v2229
      %v2231 = vmul.f32 %v2186, 1.442695
      %v2232 = vpow.pop %v2231
      %v2233 = vmul.f32 %v2187, 1.442695
      %v2234 = vpow.pop %v2233
      %v2235 = vmul.f32 %v2188, 1.442695
      %v2236 = vpow.pop %v2235
      %v2237 = vmul.f32 %v2189, 1.442695
      %v2238 = vpow.pop %v2237
      %v2239 = vmul.f32 %v2190, 1.442695
      %v2240 = vpow.pop %v2239
      %v2241 = vmul.f32 %v2191, 1.442695
      %v2242 = vpow.pop %v2241
      %v2243 = vmul.f32 %v2192, 1.442695
      %v2244 = vpow.pop %v2243
      %v2245 = vmul.f32 %v2193, 1.442695
      %v2246 = vpow.pop %v2245
      %v2247 = vmul.f32 %v2194, 1.442695
      %v2248 = vpow.pop %v2247
      %v2249 = vmul.f32 %v2195, 1.442695
      %v2250 = vpow.pop %v2249
      %v2251 = vmul.f32 %v2196, 1.442695
      %v2252 = vpow.pop %v2251
      %v2253 = vmul.f32 %v2197, 1.442695
      %v2254 = vpow.pop %v2253
      %v2255 = vmul.f32 %v2198, 1.442695
      %v2256 = vpow.pop %v2255
      %v2257 = vmul.f32 %v2199, 1.442695
      %v2258 = vpow.pop %v2257
      %v2259 = vmul.f32 %v2200, 1.442695
      %v2260 = vpow.pop %v2259
      %v2261 = vmul.f32 %v2201, 1.442695
      %v2262 = vpow.pop %v2261
      %v2263 = vmul.f32 %v2202, 1.442695
      %v2264 = vpow.pop %v2263
      %v2265 = vmul.f32 %v2203, 1.442695
      %v2266 = vpow.pop %v2265
      %v2267 = vmul.f32 %v2204, 1.442695
      %v2268 = vpow.pop %v2267
      %v2269 = vsel %vm971, %v2206, 0.0
      %2270 = vadd.xlane.f32.xlu0 %v2269
      %v2271 = vpop.xlane.xlu0 %2270
      %v2272 = vsel %vm971, %v2208, 0.0
      %2273 = vadd.xlane.f32.xlu0 %v2272
      %v2274 = vpop.xlane.xlu0 %2273
      %v2275 = vsel %vm971, %v2210, 0.0
      %2276 = vadd.xlane.f32.xlu0 %v2275
      %v2277 = vpop.xlane.xlu0 %2276
      %v2278 = vsel %vm971, %v2212, 0.0
      %2279 = vadd.xlane.f32.xlu0 %v2278
      %v2280 = vpop.xlane.xlu0 %2279
      %v2281 = vsel %vm971, %v2214, 0.0
      %2282 = vadd.xlane.f32.xlu0 %v2281
      %v2283 = vpop.xlane.xlu0 %2282
      %v2284 = vsel %vm971, %v2216, 0.0
      %2285 = vadd.xlane.f32.xlu0 %v2284
      %v2286 = vpop.xlane.xlu0 %2285
      %v2287 = vsel %vm971, %v2218, 0.0
      %2288 = vadd.xlane.f32.xlu0 %v2287
      %v2289 = vpop.xlane.xlu0 %2288
      %v2290 = vsel %vm971, %v2220, 0.0
      %2291 = vadd.xlane.f32.xlu0 %v2290
      %v2292 = vpop.xlane.xlu0 %2291
      %v2293 = vsel %vm971, %v2222, 0.0
      %2294 = vadd.xlane.f32.xlu0 %v2293
      %v2295 = vpop.xlane.xlu0 %2294
      %v2296 = vsel %vm971, %v2224, 0.0
      %2297 = vadd.xlane.f32.xlu0 %v2296
      %v2298 = vpop.xlane.xlu0 %2297
      %v2299 = vsel %vm971, %v2226, 0.0
      %2300 = vadd.xlane.f32.xlu0 %v2299
      %v2301 = vpop.xlane.xlu0 %2300
      %v2302 = vsel %vm971, %v2228, 0.0
      %2303 = vadd.xlane.f32.xlu0 %v2302
      %v2304 = vpop.xlane.xlu0 %2303
      %v2305 = vsel %vm971, %v2230, 0.0
      %2306 = vadd.xlane.f32.xlu0 %v2305
      %v2307 = vpop.xlane.xlu0 %2306
      %v2308 = vsel %vm971, %v2232, 0.0
      %2309 = vadd.xlane.f32.xlu0 %v2308
      %v2310 = vpop.xlane.xlu0 %2309
      %v2311 = vsel %vm971, %v2234, 0.0
      %2312 = vadd.xlane.f32.xlu0 %v2311
      %v2313 = vpop.xlane.xlu0 %2312
      %v2314 = vsel %vm971, %v2236, 0.0
      %2315 = vadd.xlane.f32.xlu0 %v2314
      %v2316 = vpop.xlane.xlu0 %2315
      %v2317 = vsel %vm971, %v2238, 0.0
      %2318 = vadd.xlane.f32.xlu0 %v2317
      %v2319 = vpop.xlane.xlu0 %2318
      %v2320 = vsel %vm971, %v2240, 0.0
      %2321 = vadd.xlane.f32.xlu0 %v2320
      %v2322 = vpop.xlane.xlu0 %2321
      %v2323 = vsel %vm971, %v2242, 0.0
      %2324 = vadd.xlane.f32.xlu0 %v2323
      %v2325 = vpop.xlane.xlu0 %2324
      %v2326 = vsel %vm971, %v2244, 0.0
      %2327 = vadd.xlane.f32.xlu0 %v2326
      %v2328 = vpop.xlane.xlu0 %2327
      %v2329 = vsel %vm971, %v2246, 0.0
      %2330 = vadd.xlane.f32.xlu0 %v2329
      %v2331 = vpop.xlane.xlu0 %2330
      %v2332 = vsel %vm971, %v2248, 0.0
      %2333 = vadd.xlane.f32.xlu0 %v2332
      %v2334 = vpop.xlane.xlu0 %2333
      %v2335 = vsel %vm971, %v2250, 0.0
      %2336 = vadd.xlane.f32.xlu0 %v2335
      %v2337 = vpop.xlane.xlu0 %2336
      %v2338 = vsel %vm971, %v2252, 0.0
      %2339 = vadd.xlane.f32.xlu0 %v2338
      %v2340 = vpop.xlane.xlu0 %2339
      %v2341 = vsel %vm971, %v2254, 0.0
      %2342 = vadd.xlane.f32.xlu0 %v2341
      %v2343 = vpop.xlane.xlu0 %2342
      %v2344 = vsel %vm971, %v2256, 0.0
      %2345 = vadd.xlane.f32.xlu0 %v2344
      %v2346 = vpop.xlane.xlu0 %2345
      %v2347 = vsel %vm971, %v2258, 0.0
      %2348 = vadd.xlane.f32.xlu0 %v2347
      %v2349 = vpop.xlane.xlu0 %2348
      %v2350 = vsel %vm971, %v2260, 0.0
      %2351 = vadd.xlane.f32.xlu0 %v2350
      %v2352 = vpop.xlane.xlu0 %2351
      %v2353 = vsel %vm971, %v2262, 0.0
      %2354 = vadd.xlane.f32.xlu0 %v2353
      %v2355 = vpop.xlane.xlu0 %2354
      %v2356 = vsel %vm971, %v2264, 0.0
      %2357 = vadd.xlane.f32.xlu0 %v2356
      %v2358 = vpop.xlane.xlu0 %2357
      %v2359 = vsel %vm971, %v2266, 0.0
      %2360 = vadd.xlane.f32.xlu0 %v2359
      %v2361 = vpop.xlane.xlu0 %2360
      %v2362 = vsel %vm971, %v2268, 0.0
      %2363 = vadd.xlane.f32.xlu0 %v2362
      %v2364 = vpop.xlane.xlu0 %2363
      %v2365 = vrcp.pop %v2271
      %v2366 = vrcp.pop %v2274
      %v2367 = vrcp.pop %v2277
      %v2368 = vrcp.pop %v2280
      %v2369 = vrcp.pop %v2283
      %v2370 = vrcp.pop %v2286
      %v2371 = vrcp.pop %v2289
      %v2372 = vrcp.pop %v2292
      %v2373 = vrcp.pop %v2295
      %v2374 = vrcp.pop %v2298
      %v2375 = vrcp.pop %v2301
      %v2376 = vrcp.pop %v2304
      %v2377 = vrcp.pop %v2307
      %v2378 = vrcp.pop %v2310
      %v2379 = vrcp.pop %v2313
      %v2380 = vrcp.pop %v2316
      %v2381 = vrcp.pop %v2319
      %v2382 = vrcp.pop %v2322
      %v2383 = vrcp.pop %v2325
      %v2384 = vrcp.pop %v2328
      %v2385 = vrcp.pop %v2331
      %v2386 = vrcp.pop %v2334
      %v2387 = vrcp.pop %v2337
      %v2388 = vrcp.pop %v2340
      %v2389 = vrcp.pop %v2343
      %v2390 = vrcp.pop %v2346
      %v2391 = vrcp.pop %v2349
      %v2392 = vrcp.pop %v2352
      %v2393 = vrcp.pop %v2355
      %v2394 = vrcp.pop %v2358
      %v2395 = vrcp.pop %v2361
      %v2396 = vrcp.pop %v2364
      %v2397 = vmul.f32 %v2206, %v2365
      %v2398 = vmul.f32 %v2208, %v2366
      %v2399 = vmul.f32 %v2210, %v2367
      %v2400 = vmul.f32 %v2212, %v2368
      %v2401 = vmul.f32 %v2214, %v2369
      %v2402 = vmul.f32 %v2216, %v2370
      %v2403 = vmul.f32 %v2218, %v2371
      %v2404 = vmul.f32 %v2220, %v2372
      %v2405 = vmul.f32 %v2222, %v2373
      %v2406 = vmul.f32 %v2224, %v2374
      %v2407 = vmul.f32 %v2226, %v2375
      %v2408 = vmul.f32 %v2228, %v2376
      %v2409 = vmul.f32 %v2230, %v2377
      %v2410 = vmul.f32 %v2232, %v2378
      %v2411 = vmul.f32 %v2234, %v2379
      %v2412 = vmul.f32 %v2236, %v2380
      %v2413 = vmul.f32 %v2238, %v2381
      %v2414 = vmul.f32 %v2240, %v2382
      %v2415 = vmul.f32 %v2242, %v2383
      %v2416 = vmul.f32 %v2244, %v2384
      %v2417 = vmul.f32 %v2246, %v2385
      %v2418 = vmul.f32 %v2248, %v2386
      %v2419 = vmul.f32 %v2250, %v2387
      %v2420 = vmul.f32 %v2252, %v2388
      %v2421 = vmul.f32 %v2254, %v2389
      %v2422 = vmul.f32 %v2256, %v2390
      %v2423 = vmul.f32 %v2258, %v2391
      %v2424 = vmul.f32 %v2260, %v2392
      %v2425 = vmul.f32 %v2262, %v2393
      %v2426 = vmul.f32 %v2264, %v2394
      %v2427 = vmul.f32 %v2266, %v2395
      %v2428 = vmul.f32 %v2268, %v2396
      %v2429 = vpack.c.bf16 %v2398, %v2397
      %v2430 = vpack.c.bf16 %v2400, %v2399
      %v2431 = vpack.c.bf16 %v2402, %v2401
      %v2432 = vpack.c.bf16 %v2404, %v2403
      %v2433 = vpack.c.bf16 %v2406, %v2405
      %v2434 = vpack.c.bf16 %v2408, %v2407
      %v2435 = vpack.c.bf16 %v2410, %v2409
      %v2436 = vpack.c.bf16 %v2412, %v2411
      %v2437 = vpack.c.bf16 %v2414, %v2413
      %v2438 = vpack.c.bf16 %v2416, %v2415
      %v2439 = vpack.c.bf16 %v2418, %v2417
      %v2440 = vpack.c.bf16 %v2420, %v2419
      %v2441 = vpack.c.bf16 %v2422, %v2421
      %v2442 = vpack.c.bf16 %v2424, %v2423
      %v2443 = vpack.c.bf16 %v2426, %v2425
      %v2444 = vpack.c.bf16 %v2428, %v2427
      %v2446 = vsel %vm971, %v2429, 0
      %v2449 = vsel %vm971, %v2430, 0
      %v2452 = vsel %vm971, %v2431, 0
      %v2455 = vsel %vm971, %v2432, 0
      %2457 = vmatprep.subr.bf16.mxu0 0
      %2458 = vmatpush1.bf16.msra.mxu0 0
      %2459 = vmatprep.subr.bf16.mxu0 0
      %2460 = vmatpush1.bf16.msra.mxu0 0
      %2461 = vmatprep.subr.bf16.mxu0 0
      %2462 = vmatpush1.bf16.msra.mxu0 0
      %2463 = vmatprep.subr.bf16.mxu0 0
      %2464 = vmatpush1.bf16.msra.mxu0 0
      %2465 = vmatprep.subr.bf16.mxu0 0
      %2466 = vmatpush1.bf16.msra.mxu0 %v296
      %2467 = vmatprep.subr.bf16.mxu0 0
      %2468 = vmatpush1.bf16.msra.mxu0 %v295
      %2469 = vmatprep.subr.bf16.mxu0 0
      %2470 = vmatpush1.bf16.msra.mxu0 %v294
      %2471 = vmatprep.subr.bf16.mxu0 0
      %2472 = vmatpush1.bf16.msra.mxu0 %v293
      %2473 = vmatprep.subr.bf16.mxu0 0
      %2474 = vmatpush2.bf16.msra.mxu0 0
      %2475 = vmatprep.subr.bf16.mxu0 0
      %2476 = vmatpush2.bf16.msra.mxu0 0
      %2477 = vmatprep.subr.bf16.mxu0 0
      %2478 = vmatpush2.bf16.msra.mxu0 0
      %2479 = vmatprep.subr.bf16.mxu0 0
      %2480 = vmatpush2.bf16.msra.mxu0 0
      %2481 = vmatprep.subr.bf16.mxu0 0
      %2482 = vmatpush2.bf16.msra.mxu0 0
      %2483 = vmatprep.subr.bf16.mxu0 0
      %2484 = vmatpush2.bf16.msra.mxu0 0
      %2485 = vmatprep.subr.bf16.mxu0 0
      %2486 = vmatpush2.bf16.msra.mxu0 0
      %2487 = vmatprep.subr.bf16.mxu0 0
      %2488 = vmatpush2.bf16.msra.mxu0 0
      %2489 = vmatprep.mubr.bf16.mxu0 0
      %2490 = vmatmul.mubr.bf16.gmra.mxu0 %v2446
      %v2491 = vpop.f32.mrf.mxu0
      %v2492 = vadd.f32 0.0, %v2491
      %v2493 = vpop.f32.mrf.mxu0
      %v2494 = vpop.f32.mrf.mxu0
      %v2495 = vadd.f32 0.0, %v2494
      %v2496 = vpop.f32.mrf.mxu0
      %2497 = vmatprep.mubr.bf16.mxu0 0
      %2498 = vmatmul.mubr.bf16.gmra.mxu0 %v2449
      %v2499 = vpop.f32.mrf.mxu0
      %v2500 = vadd.f32 0.0, %v2499
      %v2501 = vpop.f32.mrf.mxu0
      %v2502 = vpop.f32.mrf.mxu0
      %v2503 = vadd.f32 0.0, %v2502
      %v2504 = vpop.f32.mrf.mxu0
      %2505 = vmatprep.mubr.bf16.mxu0 0
      %2506 = vmatmul.mubr.bf16.gmra.mxu0 %v2452
      %v2507 = vpop.f32.mrf.mxu0
      %v2508 = vadd.f32 0.0, %v2507
      %v2509 = vpop.f32.mrf.mxu0
      %v2510 = vpop.f32.mrf.mxu0
      %v2511 = vadd.f32 0.0, %v2510
      %v2512 = vpop.f32.mrf.mxu0
      %2513 = vmatprep.mubr.bf16.mxu0 0
      %2514 = vmatmul.mubr.bf16.gmra.mxu0 %v2455
      %v2515 = vpop.f32.mrf.mxu0
      %v2516 = vadd.f32 0.0, %v2515
      %v2517 = vpop.f32.mrf.mxu0
      %v2518 = vpop.f32.mrf.mxu0
      %v2519 = vadd.f32 0.0, %v2518
      %v2520 = vpop.f32.mrf.mxu0
      %2521 = vdwg.mxu0
      %v2523 = vsel %vm971, %v2433, 0
      %v2526 = vsel %vm971, %v2434, 0
      %v2529 = vsel %vm971, %v2435, 0
      %v2532 = vsel %vm971, %v2436, 0
      %2534 = vmatprep.subr.bf16.mxu0 0
      %2535 = vmatpush1.bf16.msra.mxu0 0
      %2536 = vmatprep.subr.bf16.mxu0 0
      %2537 = vmatpush1.bf16.msra.mxu0 0
      %2538 = vmatprep.subr.bf16.mxu0 0
      %2539 = vmatpush1.bf16.msra.mxu0 0
      %2540 = vmatprep.subr.bf16.mxu0 0
      %2541 = vmatpush1.bf16.msra.mxu0 0
      %2542 = vmatprep.subr.bf16.mxu0 0
      %2543 = vmatpush1.bf16.msra.mxu0 %v300
      %2544 = vmatprep.subr.bf16.mxu0 0
      %2545 = vmatpush1.bf16.msra.mxu0 %v299
      %2546 = vmatprep.subr.bf16.mxu0 0
      %2547 = vmatpush1.bf16.msra.mxu0 %v298
      %2548 = vmatprep.subr.bf16.mxu0 0
      %2549 = vmatpush1.bf16.msra.mxu0 %v297
      %2550 = vmatprep.subr.bf16.mxu0 0
      %2551 = vmatpush2.bf16.msra.mxu0 0
      %2552 = vmatprep.subr.bf16.mxu0 0
      %2553 = vmatpush2.bf16.msra.mxu0 0
      %2554 = vmatprep.subr.bf16.mxu0 0
      %2555 = vmatpush2.bf16.msra.mxu0 0
      %2556 = vmatprep.subr.bf16.mxu0 0
      %2557 = vmatpush2.bf16.msra.mxu0 0
      %2558 = vmatprep.subr.bf16.mxu0 0
      %2559 = vmatpush2.bf16.msra.mxu0 0
      %2560 = vmatprep.subr.bf16.mxu0 0
      %2561 = vmatpush2.bf16.msra.mxu0 0
      %2562 = vmatprep.subr.bf16.mxu0 0
      %2563 = vmatpush2.bf16.msra.mxu0 0
      %2564 = vmatprep.subr.bf16.mxu0 0
      %2565 = vmatpush2.bf16.msra.mxu0 0
      %2566 = vmatprep.mubr.bf16.mxu0 0
      %2567 = vmatmul.mubr.bf16.gmra.mxu0 %v2523
      %v2568 = vpop.f32.mrf.mxu0
      %v2569 = vadd.f32 0.0, %v2568
      %v2570 = vpop.f32.mrf.mxu0
      %v2571 = vpop.f32.mrf.mxu0
      %v2572 = vadd.f32 0.0, %v2571
      %v2573 = vpop.f32.mrf.mxu0
      %2574 = vmatprep.mubr.bf16.mxu0 0
      %2575 = vmatmul.mubr.bf16.gmra.mxu0 %v2526
      %v2576 = vpop.f32.mrf.mxu0
      %v2577 = vadd.f32 0.0, %v2576
      %v2578 = vpop.f32.mrf.mxu0
      %v2579 = vpop.f32.mrf.mxu0
      %v2580 = vadd.f32 0.0, %v2579
      %v2581 = vpop.f32.mrf.mxu0
      %2582 = vmatprep.mubr.bf16.mxu0 0
      %2583 = vmatmul.mubr.bf16.gmra.mxu0 %v2529
      %v2584 = vpop.f32.mrf.mxu0
      %v2585 = vadd.f32 0.0, %v2584
      %v2586 = vpop.f32.mrf.mxu0
      %v2587 = vpop.f32.mrf.mxu0
      %v2588 = vadd.f32 0.0, %v2587
      %v2589 = vpop.f32.mrf.mxu0
      %2590 = vmatprep.mubr.bf16.mxu0 0
      %2591 = vmatmul.mubr.bf16.gmra.mxu0 %v2532
      %v2592 = vpop.f32.mrf.mxu0
      %v2593 = vadd.f32 0.0, %v2592
      %v2594 = vpop.f32.mrf.mxu0
      %v2595 = vpop.f32.mrf.mxu0
      %v2596 = vadd.f32 0.0, %v2595
      %v2597 = vpop.f32.mrf.mxu0
      %2598 = vdwg.mxu0
      %v2600 = vsel %vm971, %v2437, 0
      %v2603 = vsel %vm971, %v2438, 0
      %v2606 = vsel %vm971, %v2439, 0
      %v2609 = vsel %vm971, %v2440, 0
      %2611 = vmatprep.subr.bf16.mxu0 0
      %2612 = vmatpush1.bf16.msra.mxu0 0
      %2613 = vmatprep.subr.bf16.mxu0 0
      %2614 = vmatpush1.bf16.msra.mxu0 0
      %2615 = vmatprep.subr.bf16.mxu0 0
      %2616 = vmatpush1.bf16.msra.mxu0 0
      %2617 = vmatprep.subr.bf16.mxu0 0
      %2618 = vmatpush1.bf16.msra.mxu0 0
      %2619 = vmatprep.subr.bf16.mxu0 0
      %2620 = vmatpush1.bf16.msra.mxu0 %v304
      %2621 = vmatprep.subr.bf16.mxu0 0
      %2622 = vmatpush1.bf16.msra.mxu0 %v303
      %2623 = vmatprep.subr.bf16.mxu0 0
      %2624 = vmatpush1.bf16.msra.mxu0 %v302
      %2625 = vmatprep.subr.bf16.mxu0 0
      %2626 = vmatpush1.bf16.msra.mxu0 %v301
      %2627 = vmatprep.subr.bf16.mxu0 0
      %2628 = vmatpush2.bf16.msra.mxu0 0
      %2629 = vmatprep.subr.bf16.mxu0 0
      %2630 = vmatpush2.bf16.msra.mxu0 0
      %2631 = vmatprep.subr.bf16.mxu0 0
      %2632 = vmatpush2.bf16.msra.mxu0 0
      %2633 = vmatprep.subr.bf16.mxu0 0
      %2634 = vmatpush2.bf16.msra.mxu0 0
      %2635 = vmatprep.subr.bf16.mxu0 0
      %2636 = vmatpush2.bf16.msra.mxu0 0
      %2637 = vmatprep.subr.bf16.mxu0 0
      %2638 = vmatpush2.bf16.msra.mxu0 0
      %2639 = vmatprep.subr.bf16.mxu0 0
      %2640 = vmatpush2.bf16.msra.mxu0 0
      %2641 = vmatprep.subr.bf16.mxu0 0
      %2642 = vmatpush2.bf16.msra.mxu0 0
      %2643 = vmatprep.mubr.bf16.mxu0 0
      %2644 = vmatmul.mubr.bf16.gmra.mxu0 %v2600
      %v2645 = vpop.f32.mrf.mxu0
      %v2646 = vadd.f32 0.0, %v2645
      %v2647 = vpop.f32.mrf.mxu0
      %v2648 = vpop.f32.mrf.mxu0
      %v2649 = vadd.f32 0.0, %v2648
      %v2650 = vpop.f32.mrf.mxu0
      %2651 = vmatprep.mubr.bf16.mxu0 0
      %2652 = vmatmul.mubr.bf16.gmra.mxu0 %v2603
      %v2653 = vpop.f32.mrf.mxu0
      %v2654 = vadd.f32 0.0, %v2653
      %v2655 = vpop.f32.mrf.mxu0
      %v2656 = vpop.f32.mrf.mxu0
      %v2657 = vadd.f32 0.0, %v2656
      %v2658 = vpop.f32.mrf.mxu0
      %2659 = vmatprep.mubr.bf16.mxu0 0
      %2660 = vmatmul.mubr.bf16.gmra.mxu0 %v2606
      %v2661 = vpop.f32.mrf.mxu0
      %v2662 = vadd.f32 0.0, %v2661
      %v2663 = vpop.f32.mrf.mxu0
      %v2664 = vpop.f32.mrf.mxu0
      %v2665 = vadd.f32 0.0, %v2664
      %v2666 = vpop.f32.mrf.mxu0
      %2667 = vmatprep.mubr.bf16.mxu0 0
      %2668 = vmatmul.mubr.bf16.gmra.mxu0 %v2609
      %v2669 = vpop.f32.mrf.mxu0
      %v2670 = vadd.f32 0.0, %v2669
      %v2671 = vpop.f32.mrf.mxu0
      %v2672 = vpop.f32.mrf.mxu0
      %v2673 = vadd.f32 0.0, %v2672
      %v2674 = vpop.f32.mrf.mxu0
      %2675 = vdwg.mxu0
      %v2677 = vsel %vm971, %v2441, 0
      %v2680 = vsel %vm971, %v2442, 0
      %v2683 = vsel %vm971, %v2443, 0
      %v2686 = vsel %vm971, %v2444, 0
      %2688 = vmatprep.subr.bf16.mxu0 0
      %2689 = vmatpush1.bf16.msra.mxu0 0
      %2690 = vmatprep.subr.bf16.mxu0 0
      %2691 = vmatpush1.bf16.msra.mxu0 0
      %2692 = vmatprep.subr.bf16.mxu0 0
      %2693 = vmatpush1.bf16.msra.mxu0 0
      %2694 = vmatprep.subr.bf16.mxu0 0
      %2695 = vmatpush1.bf16.msra.mxu0 0
      %2696 = vmatprep.subr.bf16.mxu0 0
      %2697 = vmatpush1.bf16.msra.mxu0 %v308
      %2698 = vmatprep.subr.bf16.mxu0 0
      %2699 = vmatpush1.bf16.msra.mxu0 %v307
      %2700 = vmatprep.subr.bf16.mxu0 0
      %2701 = vmatpush1.bf16.msra.mxu0 %v306
      %2702 = vmatprep.subr.bf16.mxu0 0
      %2703 = vmatpush1.bf16.msra.mxu0 %v305
      %2704 = vmatprep.subr.bf16.mxu0 0
      %2705 = vmatpush2.bf16.msra.mxu0 0
      %2706 = vmatprep.subr.bf16.mxu0 0
      %2707 = vmatpush2.bf16.msra.mxu0 0
      %2708 = vmatprep.subr.bf16.mxu0 0
      %2709 = vmatpush2.bf16.msra.mxu0 0
      %2710 = vmatprep.subr.bf16.mxu0 0
      %2711 = vmatpush2.bf16.msra.mxu0 0
      %2712 = vmatprep.subr.bf16.mxu0 0
      %2713 = vmatpush2.bf16.msra.mxu0 0
      %2714 = vmatprep.subr.bf16.mxu0 0
      %2715 = vmatpush2.bf16.msra.mxu0 0
      %2716 = vmatprep.subr.bf16.mxu0 0
      %2717 = vmatpush2.bf16.msra.mxu0 0
      %2718 = vmatprep.subr.bf16.mxu0 0
      %2719 = vmatpush2.bf16.msra.mxu0 0
      %2720 = vmatprep.mubr.bf16.mxu0 0
      %2721 = vmatmul.mubr.bf16.gmra.mxu0 %v2677
      %v2722 = vpop.f32.mrf.mxu0
      %v2723 = vadd.f32 0.0, %v2722
      %v2724 = vpop.f32.mrf.mxu0
      %v2725 = vpop.f32.mrf.mxu0
      %v2726 = vadd.f32 0.0, %v2725
      %v2727 = vpop.f32.mrf.mxu0
      %2728 = vmatprep.mubr.bf16.mxu0 0
      %2729 = vmatmul.mubr.bf16.gmra.mxu0 %v2680
      %v2730 = vpop.f32.mrf.mxu0
      %v2731 = vadd.f32 0.0, %v2730
      %v2732 = vpop.f32.mrf.mxu0
      %v2733 = vpop.f32.mrf.mxu0
      %v2734 = vadd.f32 0.0, %v2733
      %v2735 = vpop.f32.mrf.mxu0
      %2736 = vmatprep.mubr.bf16.mxu0 0
      %2737 = vmatmul.mubr.bf16.gmra.mxu0 %v2683
      %v2738 = vpop.f32.mrf.mxu0
      %v2739 = vadd.f32 0.0, %v2738
      %v2740 = vpop.f32.mrf.mxu0
      %v2741 = vpop.f32.mrf.mxu0
      %v2742 = vadd.f32 0.0, %v2741
      %v2743 = vpop.f32.mrf.mxu0
      %2744 = vmatprep.mubr.bf16.mxu0 0
      %2745 = vmatmul.mubr.bf16.gmra.mxu0 %v2686
      %v2746 = vpop.f32.mrf.mxu0
      %v2747 = vadd.f32 0.0, %v2746
      %v2748 = vpop.f32.mrf.mxu0
      %v2749 = vpop.f32.mrf.mxu0
      %v2750 = vadd.f32 0.0, %v2749
      %v2751 = vpop.f32.mrf.mxu0
      %2752 = vdwg.mxu0
      %s2753 = scalar_lea.vmem %s3, 128
      %v2754 = vld [vmem:[%s2753] sm:$0xff]
      %v2755 = vld [vmem:[%s2753 + $0x8] sm:$0xff]
      %v2756 = vld [vmem:[%s2753 + $0x10] sm:$0xff]
      %v2757 = vld [vmem:[%s2753 + $0x18] sm:$0xff]
      %v2758 = vld [vmem:[%s2753 + $0x20] sm:$0xff]
      %v2759 = vld [vmem:[%s2753 + $0x28] sm:$0xff]
      %v2760 = vld [vmem:[%s2753 + $0x30] sm:$0xff]
      %v2761 = vld [vmem:[%s2753 + $0x38] sm:$0xff]
      %2762 = vrot.lane.b32.xlu0 %v542, 112
      %v2763 = vpop.permute.xlu0 %2762
      %2764 = vrot.lane.b32.xlu0 %v543, 112
      %v2765 = vpop.permute.xlu0 %2764
      %2766 = vrot.lane.b32.xlu0 %v544, 112
      %v2767 = vpop.permute.xlu0 %2766
      %2768 = vrot.lane.b32.xlu0 %v545, 112
      %v2769 = vpop.permute.xlu0 %2768
      %2770 = vrot.lane.b32.xlu0 %v542, 80
      %v2771 = vpop.permute.xlu0 %2770
      %2772 = vrot.lane.b32.xlu0 %v543, 80
      %v2773 = vpop.permute.xlu0 %2772
      %2774 = vrot.lane.b32.xlu0 %v544, 80
      %v2775 = vpop.permute.xlu0 %2774
      %2776 = vrot.lane.b32.xlu0 %v545, 80
      %v2777 = vpop.permute.xlu0 %2776
      %v2779 = vsel %vm578, %v2763, 0
      %v2782 = vsel %vm578, %v2765, 0
      %v2785 = vsel %vm578, %v2767, 0
      %v2788 = vsel %vm578, %v2769, 0
      %v2791 = vsel %vm578, %v2771, 0
      %v2794 = vsel %vm578, %v2773, 0
      %v2797 = vsel %vm578, %v2775, 0
      %v2800 = vsel %vm578, %v2777, 0
      %2802 = vmatprep.subr.bf16.mxu0 0
      %2803 = vmatpush1.bf16.xpose.msra.mxu0 0
      %2804 = vmatprep.subr.bf16.mxu0 0
      %2805 = vmatpush1.bf16.xpose.msra.mxu0 0
      %2806 = vmatprep.subr.bf16.mxu0 0
      %2807 = vmatpush1.bf16.xpose.msra.mxu0 0
      %2808 = vmatprep.subr.bf16.mxu0 0
      %2809 = vmatpush1.bf16.xpose.msra.mxu0 0
      %2810 = vmatprep.subr.bf16.mxu0 0
      %2811 = vmatpush1.bf16.xpose.msra.mxu0 %v2800
      %2812 = vmatprep.subr.bf16.mxu0 0
      %2813 = vmatpush1.bf16.xpose.msra.mxu0 %v2797
      %2814 = vmatprep.subr.bf16.mxu0 0
      %2815 = vmatpush1.bf16.xpose.msra.mxu0 %v2794
      %2816 = vmatprep.subr.bf16.mxu0 0
      %2817 = vmatpush1.bf16.xpose.msra.mxu0 %v2791
      %2818 = vmatprep.subr.bf16.mxu0 0
      %2819 = vmatpush2.bf16.xpose.msra.mxu0 0
      %2820 = vmatprep.subr.bf16.mxu0 0
      %2821 = vmatpush2.bf16.xpose.msra.mxu0 0
      %2822 = vmatprep.subr.bf16.mxu0 0
      %2823 = vmatpush2.bf16.xpose.msra.mxu0 0
      %2824 = vmatprep.subr.bf16.mxu0 0
      %2825 = vmatpush2.bf16.xpose.msra.mxu0 0
      %2826 = vmatprep.subr.bf16.mxu0 0
      %2827 = vmatpush2.bf16.xpose.msra.mxu0 0
      %2828 = vmatprep.subr.bf16.mxu0 0
      %2829 = vmatpush2.bf16.xpose.msra.mxu0 0
      %2830 = vmatprep.subr.bf16.mxu0 0
      %2831 = vmatpush2.bf16.xpose.msra.mxu0 0
      %2832 = vmatprep.subr.bf16.mxu0 0
      %2833 = vmatpush2.bf16.xpose.msra.mxu0 0
      %2834 = vmatprep.mubr.bf16.mxu0 0
      %2835 = vmatmul.mubr.bf16.gmra.mxu0 %v2779
      %v2836 = vpop.f32.mrf.mxu0
      %v2837 = vadd.f32 %v2754, %v2836
      %v2838 = vpop.f32.mrf.mxu0
      %v2839 = vpop.f32.mrf.mxu0
      %v2840 = vadd.f32 %v2755, %v2839
      %v2841 = vpop.f32.mrf.mxu0
      %2842 = vmatprep.mubr.bf16.mxu0 0
      %2843 = vmatmul.mubr.bf16.gmra.mxu0 %v2782
      %v2844 = vpop.f32.mrf.mxu0
      %v2845 = vadd.f32 %v2756, %v2844
      %v2846 = vpop.f32.mrf.mxu0
      %v2847 = vpop.f32.mrf.mxu0
      %v2848 = vadd.f32 %v2757, %v2847
      %v2849 = vpop.f32.mrf.mxu0
      %2850 = vmatprep.mubr.bf16.mxu0 0
      %2851 = vmatmul.mubr.bf16.gmra.mxu0 %v2785
      %v2852 = vpop.f32.mrf.mxu0
      %v2853 = vadd.f32 %v2758, %v2852
      %v2854 = vpop.f32.mrf.mxu0
      %v2855 = vpop.f32.mrf.mxu0
      %v2856 = vadd.f32 %v2759, %v2855
      %v2857 = vpop.f32.mrf.mxu0
      %2858 = vmatprep.mubr.bf16.mxu0 0
      %2859 = vmatmul.mubr.bf16.gmra.mxu0 %v2788
      %v2860 = vpop.f32.mrf.mxu0
      %v2861 = vadd.f32 %v2760, %v2860
      %v2862 = vpop.f32.mrf.mxu0
      %v2863 = vpop.f32.mrf.mxu0
      %v2864 = vadd.f32 %v2761, %v2863
      %v2865 = vpop.f32.mrf.mxu0
      %2866 = vdwg.mxu0
      %2867 = vrot.lane.b32.xlu0 %v546, 112
      %v2868 = vpop.permute.xlu0 %2867
      %2869 = vrot.lane.b32.xlu0 %v547, 112
      %v2870 = vpop.permute.xlu0 %2869
      %2871 = vrot.lane.b32.xlu0 %v548, 112
      %v2872 = vpop.permute.xlu0 %2871
      %2873 = vrot.lane.b32.xlu0 %v549, 112
      %v2874 = vpop.permute.xlu0 %2873
      %2875 = vrot.lane.b32.xlu0 %v546, 80
      %v2876 = vpop.permute.xlu0 %2875
      %2877 = vrot.lane.b32.xlu0 %v547, 80
      %v2878 = vpop.permute.xlu0 %2877
      %2879 = vrot.lane.b32.xlu0 %v548, 80
      %v2880 = vpop.permute.xlu0 %2879
      %2881 = vrot.lane.b32.xlu0 %v549, 80
      %v2882 = vpop.permute.xlu0 %2881
      %v2884 = vsel %vm578, %v2868, 0
      %v2887 = vsel %vm578, %v2870, 0
      %v2890 = vsel %vm578, %v2872, 0
      %v2893 = vsel %vm578, %v2874, 0
      %v2896 = vsel %vm578, %v2876, 0
      %v2899 = vsel %vm578, %v2878, 0
      %v2902 = vsel %vm578, %v2880, 0
      %v2905 = vsel %vm578, %v2882, 0
      %2907 = vmatprep.subr.bf16.mxu0 0
      %2908 = vmatpush1.bf16.xpose.msra.mxu0 0
      %2909 = vmatprep.subr.bf16.mxu0 0
      %2910 = vmatpush1.bf16.xpose.msra.mxu0 0
      %2911 = vmatprep.subr.bf16.mxu0 0
      %2912 = vmatpush1.bf16.xpose.msra.mxu0 0
      %2913 = vmatprep.subr.bf16.mxu0 0
      %2914 = vmatpush1.bf16.xpose.msra.mxu0 0
      %2915 = vmatprep.subr.bf16.mxu0 0
      %2916 = vmatpush1.bf16.xpose.msra.mxu0 %v2905
      %2917 = vmatprep.subr.bf16.mxu0 0
      %2918 = vmatpush1.bf16.xpose.msra.mxu0 %v2902
      %2919 = vmatprep.subr.bf16.mxu0 0
      %2920 = vmatpush1.bf16.xpose.msra.mxu0 %v2899
      %2921 = vmatprep.subr.bf16.mxu0 0
      %2922 = vmatpush1.bf16.xpose.msra.mxu0 %v2896
      %2923 = vmatprep.subr.bf16.mxu0 0
      %2924 = vmatpush2.bf16.xpose.msra.mxu0 0
      %2925 = vmatprep.subr.bf16.mxu0 0
      %2926 = vmatpush2.bf16.xpose.msra.mxu0 0
      %2927 = vmatprep.subr.bf16.mxu0 0
      %2928 = vmatpush2.bf16.xpose.msra.mxu0 0
      %2929 = vmatprep.subr.bf16.mxu0 0
      %2930 = vmatpush2.bf16.xpose.msra.mxu0 0
      %2931 = vmatprep.subr.bf16.mxu0 0
      %2932 = vmatpush2.bf16.xpose.msra.mxu0 0
      %2933 = vmatprep.subr.bf16.mxu0 0
      %2934 = vmatpush2.bf16.xpose.msra.mxu0 0
      %2935 = vmatprep.subr.bf16.mxu0 0
      %2936 = vmatpush2.bf16.xpose.msra.mxu0 0
      %2937 = vmatprep.subr.bf16.mxu0 0
      %2938 = vmatpush2.bf16.xpose.msra.mxu0 0
      %2939 = vmatprep.mubr.bf16.mxu0 0
      %2940 = vmatmul.mubr.bf16.gmra.mxu0 %v2884
      %v2941 = vpop.f32.mrf.mxu0
      %v2942 = vadd.f32 %v2754, %v2941
      %v2943 = vpop.f32.mrf.mxu0
      %v2944 = vpop.f32.mrf.mxu0
      %v2945 = vadd.f32 %v2755, %v2944
      %v2946 = vpop.f32.mrf.mxu0
      %2947 = vmatprep.mubr.bf16.mxu0 0
      %2948 = vmatmul.mubr.bf16.gmra.mxu0 %v2887
      %v2949 = vpop.f32.mrf.mxu0
      %v2950 = vadd.f32 %v2756, %v2949
      %v2951 = vpop.f32.mrf.mxu0
      %v2952 = vpop.f32.mrf.mxu0
      %v2953 = vadd.f32 %v2757, %v2952
      %v2954 = vpop.f32.mrf.mxu0
      %2955 = vmatprep.mubr.bf16.mxu0 0
      %2956 = vmatmul.mubr.bf16.gmra.mxu0 %v2890
      %v2957 = vpop.f32.mrf.mxu0
      %v2958 = vadd.f32 %v2758, %v2957
      %v2959 = vpop.f32.mrf.mxu0
      %v2960 = vpop.f32.mrf.mxu0
      %v2961 = vadd.f32 %v2759, %v2960
      %v2962 = vpop.f32.mrf.mxu0
      %2963 = vmatprep.mubr.bf16.mxu0 0
      %2964 = vmatmul.mubr.bf16.gmra.mxu0 %v2893
      %v2965 = vpop.f32.mrf.mxu0
      %v2966 = vadd.f32 %v2760, %v2965
      %v2967 = vpop.f32.mrf.mxu0
      %v2968 = vpop.f32.mrf.mxu0
      %v2969 = vadd.f32 %v2761, %v2968
      %v2970 = vpop.f32.mrf.mxu0
      %2971 = vdwg.mxu0
      %2972 = vrot.lane.b32.xlu0 %v550, 112
      %v2973 = vpop.permute.xlu0 %2972
      %2974 = vrot.lane.b32.xlu0 %v551, 112
      %v2975 = vpop.permute.xlu0 %2974
      %2976 = vrot.lane.b32.xlu0 %v552, 112
      %v2977 = vpop.permute.xlu0 %2976
      %2978 = vrot.lane.b32.xlu0 %v553, 112
      %v2979 = vpop.permute.xlu0 %2978
      %2980 = vrot.lane.b32.xlu0 %v550, 80
      %v2981 = vpop.permute.xlu0 %2980
      %2982 = vrot.lane.b32.xlu0 %v551, 80
      %v2983 = vpop.permute.xlu0 %2982
      %2984 = vrot.lane.b32.xlu0 %v552, 80
      %v2985 = vpop.permute.xlu0 %2984
      %2986 = vrot.lane.b32.xlu0 %v553, 80
      %v2987 = vpop.permute.xlu0 %2986
      %v2989 = vsel %vm578, %v2973, 0
      %v2992 = vsel %vm578, %v2975, 0
      %v2995 = vsel %vm578, %v2977, 0
      %v2998 = vsel %vm578, %v2979, 0
      %v3001 = vsel %vm578, %v2981, 0
      %v3004 = vsel %vm578, %v2983, 0
      %v3007 = vsel %vm578, %v2985, 0
      %v3010 = vsel %vm578, %v2987, 0
      %3012 = vmatprep.subr.bf16.mxu0 0
      %3013 = vmatpush1.bf16.xpose.msra.mxu0 0
      %3014 = vmatprep.subr.bf16.mxu0 0
      %3015 = vmatpush1.bf16.xpose.msra.mxu0 0
      %3016 = vmatprep.subr.bf16.mxu0 0
      %3017 = vmatpush1.bf16.xpose.msra.mxu0 0
      %3018 = vmatprep.subr.bf16.mxu0 0
      %3019 = vmatpush1.bf16.xpose.msra.mxu0 0
      %3020 = vmatprep.subr.bf16.mxu0 0
      %3021 = vmatpush1.bf16.xpose.msra.mxu0 %v3010
      %3022 = vmatprep.subr.bf16.mxu0 0
      %3023 = vmatpush1.bf16.xpose.msra.mxu0 %v3007
      %3024 = vmatprep.subr.bf16.mxu0 0
      %3025 = vmatpush1.bf16.xpose.msra.mxu0 %v3004
      %3026 = vmatprep.subr.bf16.mxu0 0
      %3027 = vmatpush1.bf16.xpose.msra.mxu0 %v3001
      %3028 = vmatprep.subr.bf16.mxu0 0
      %3029 = vmatpush2.bf16.xpose.msra.mxu0 0
      %3030 = vmatprep.subr.bf16.mxu0 0
      %3031 = vmatpush2.bf16.xpose.msra.mxu0 0
      %3032 = vmatprep.subr.bf16.mxu0 0
      %3033 = vmatpush2.bf16.xpose.msra.mxu0 0
      %3034 = vmatprep.subr.bf16.mxu0 0
      %3035 = vmatpush2.bf16.xpose.msra.mxu0 0
      %3036 = vmatprep.subr.bf16.mxu0 0
      %3037 = vmatpush2.bf16.xpose.msra.mxu0 0
      %3038 = vmatprep.subr.bf16.mxu0 0
      %3039 = vmatpush2.bf16.xpose.msra.mxu0 0
      %3040 = vmatprep.subr.bf16.mxu0 0
      %3041 = vmatpush2.bf16.xpose.msra.mxu0 0
      %3042 = vmatprep.subr.bf16.mxu0 0
      %3043 = vmatpush2.bf16.xpose.msra.mxu0 0
      %3044 = vmatprep.mubr.bf16.mxu0 0
      %3045 = vmatmul.mubr.bf16.gmra.mxu0 %v2989
      %v3046 = vpop.f32.mrf.mxu0
      %v3047 = vadd.f32 %v2754, %v3046
      %v3048 = vpop.f32.mrf.mxu0
      %v3049 = vpop.f32.mrf.mxu0
      %v3050 = vadd.f32 %v2755, %v3049
      %v3051 = vpop.f32.mrf.mxu0
      %3052 = vmatprep.mubr.bf16.mxu0 0
      %3053 = vmatmul.mubr.bf16.gmra.mxu0 %v2992
      %v3054 = vpop.f32.mrf.mxu0
      %v3055 = vadd.f32 %v2756, %v3054
      %v3056 = vpop.f32.mrf.mxu0
      %v3057 = vpop.f32.mrf.mxu0
      %v3058 = vadd.f32 %v2757, %v3057
      %v3059 = vpop.f32.mrf.mxu0
      %3060 = vmatprep.mubr.bf16.mxu0 0
      %3061 = vmatmul.mubr.bf16.gmra.mxu0 %v2995
      %v3062 = vpop.f32.mrf.mxu0
      %v3063 = vadd.f32 %v2758, %v3062
      %v3064 = vpop.f32.mrf.mxu0
      %v3065 = vpop.f32.mrf.mxu0
      %v3066 = vadd.f32 %v2759, %v3065
      %v3067 = vpop.f32.mrf.mxu0
      %3068 = vmatprep.mubr.bf16.mxu0 0
      %3069 = vmatmul.mubr.bf16.gmra.mxu0 %v2998
      %v3070 = vpop.f32.mrf.mxu0
      %v3071 = vadd.f32 %v2760, %v3070
      %v3072 = vpop.f32.mrf.mxu0
      %v3073 = vpop.f32.mrf.mxu0
      %v3074 = vadd.f32 %v2761, %v3073
      %v3075 = vpop.f32.mrf.mxu0
      %3076 = vdwg.mxu0
      %3077 = vrot.lane.b32.xlu0 %v554, 112
      %v3078 = vpop.permute.xlu0 %3077
      %3079 = vrot.lane.b32.xlu0 %v555, 112
      %v3080 = vpop.permute.xlu0 %3079
      %3081 = vrot.lane.b32.xlu0 %v556, 112
      %v3082 = vpop.permute.xlu0 %3081
      %3083 = vrot.lane.b32.xlu0 %v557, 112
      %v3084 = vpop.permute.xlu0 %3083
      %3085 = vrot.lane.b32.xlu0 %v554, 80
      %v3086 = vpop.permute.xlu0 %3085
      %3087 = vrot.lane.b32.xlu0 %v555, 80
      %v3088 = vpop.permute.xlu0 %3087
      %3089 = vrot.lane.b32.xlu0 %v556, 80
      %v3090 = vpop.permute.xlu0 %3089
      %3091 = vrot.lane.b32.xlu0 %v557, 80
      %v3092 = vpop.permute.xlu0 %3091
      %v3094 = vsel %vm578, %v3078, 0
      %v3097 = vsel %vm578, %v3080, 0
      %v3100 = vsel %vm578, %v3082, 0
      %v3103 = vsel %vm578, %v3084, 0
      %v3106 = vsel %vm578, %v3086, 0
      %v3109 = vsel %vm578, %v3088, 0
      %v3112 = vsel %vm578, %v3090, 0
      %v3115 = vsel %vm578, %v3092, 0
      %3117 = vmatprep.subr.bf16.mxu0 0
      %3118 = vmatpush1.bf16.xpose.msra.mxu0 0
      %3119 = vmatprep.subr.bf16.mxu0 0
      %3120 = vmatpush1.bf16.xpose.msra.mxu0 0
      %3121 = vmatprep.subr.bf16.mxu0 0
      %3122 = vmatpush1.bf16.xpose.msra.mxu0 0
      %3123 = vmatprep.subr.bf16.mxu0 0
      %3124 = vmatpush1.bf16.xpose.msra.mxu0 0
      %3125 = vmatprep.subr.bf16.mxu0 0
      %3126 = vmatpush1.bf16.xpose.msra.mxu0 %v3115
      %3127 = vmatprep.subr.bf16.mxu0 0
      %3128 = vmatpush1.bf16.xpose.msra.mxu0 %v3112
      %3129 = vmatprep.subr.bf16.mxu0 0
      %3130 = vmatpush1.bf16.xpose.msra.mxu0 %v3109
      %3131 = vmatprep.subr.bf16.mxu0 0
      %3132 = vmatpush1.bf16.xpose.msra.mxu0 %v3106
      %3133 = vmatprep.subr.bf16.mxu0 0
      %3134 = vmatpush2.bf16.xpose.msra.mxu0 0
      %3135 = vmatprep.subr.bf16.mxu0 0
      %3136 = vmatpush2.bf16.xpose.msra.mxu0 0
      %3137 = vmatprep.subr.bf16.mxu0 0
      %3138 = vmatpush2.bf16.xpose.msra.mxu0 0
      %3139 = vmatprep.subr.bf16.mxu0 0
      %3140 = vmatpush2.bf16.xpose.msra.mxu0 0
      %3141 = vmatprep.subr.bf16.mxu0 0
      %3142 = vmatpush2.bf16.xpose.msra.mxu0 0
      %3143 = vmatprep.subr.bf16.mxu0 0
      %3144 = vmatpush2.bf16.xpose.msra.mxu0 0
      %3145 = vmatprep.subr.bf16.mxu0 0
      %3146 = vmatpush2.bf16.xpose.msra.mxu0 0
      %3147 = vmatprep.subr.bf16.mxu0 0
      %3148 = vmatpush2.bf16.xpose.msra.mxu0 0
      %3149 = vmatprep.mubr.bf16.mxu0 0
      %3150 = vmatmul.mubr.bf16.gmra.mxu0 %v3094
      %v3151 = vpop.f32.mrf.mxu0
      %v3152 = vadd.f32 %v2754, %v3151
      %v3153 = vpop.f32.mrf.mxu0
      %v3154 = vpop.f32.mrf.mxu0
      %v3155 = vadd.f32 %v2755, %v3154
      %v3156 = vpop.f32.mrf.mxu0
      %3157 = vmatprep.mubr.bf16.mxu0 0
      %3158 = vmatmul.mubr.bf16.gmra.mxu0 %v3097
      %v3159 = vpop.f32.mrf.mxu0
      %v3160 = vadd.f32 %v2756, %v3159
      %v3161 = vpop.f32.mrf.mxu0
      %v3162 = vpop.f32.mrf.mxu0
      %v3163 = vadd.f32 %v2757, %v3162
      %v3164 = vpop.f32.mrf.mxu0
      %3165 = vmatprep.mubr.bf16.mxu0 0
      %3166 = vmatmul.mubr.bf16.gmra.mxu0 %v3100
      %v3167 = vpop.f32.mrf.mxu0
      %v3168 = vadd.f32 %v2758, %v3167
      %v3169 = vpop.f32.mrf.mxu0
      %v3170 = vpop.f32.mrf.mxu0
      %v3171 = vadd.f32 %v2759, %v3170
      %v3172 = vpop.f32.mrf.mxu0
      %3173 = vmatprep.mubr.bf16.mxu0 0
      %3174 = vmatmul.mubr.bf16.gmra.mxu0 %v3103
      %v3175 = vpop.f32.mrf.mxu0
      %v3176 = vadd.f32 %v2760, %v3175
      %v3177 = vpop.f32.mrf.mxu0
      %v3178 = vpop.f32.mrf.mxu0
      %v3179 = vadd.f32 %v2761, %v3178
      %v3180 = vpop.f32.mrf.mxu0
      %3181 = vdwg.mxu0
      %v3182 = vsel %vm971, %v2837, -inf
      %3183 = vmax.xlane.f32.xlu0 %v3182
      %v3184 = vpop.xlane.xlu0 %3183
      %v3185 = vsel %vm971, %v2840, -inf
      %3186 = vmax.xlane.f32.xlu0 %v3185
      %v3187 = vpop.xlane.xlu0 %3186
      %v3188 = vsel %vm971, %v2845, -inf
      %3189 = vmax.xlane.f32.xlu0 %v3188
      %v3190 = vpop.xlane.xlu0 %3189
      %v3191 = vsel %vm971, %v2848, -inf
      %3192 = vmax.xlane.f32.xlu0 %v3191
      %v3193 = vpop.xlane.xlu0 %3192
      %v3194 = vsel %vm971, %v2853, -inf
      %3195 = vmax.xlane.f32.xlu0 %v3194
      %v3196 = vpop.xlane.xlu0 %3195
      %v3197 = vsel %vm971, %v2856, -inf
      %3198 = vmax.xlane.f32.xlu0 %v3197
      %v3199 = vpop.xlane.xlu0 %3198
      %v3200 = vsel %vm971, %v2861, -inf
      %3201 = vmax.xlane.f32.xlu0 %v3200
      %v3202 = vpop.xlane.xlu0 %3201
      %v3203 = vsel %vm971, %v2864, -inf
      %3204 = vmax.xlane.f32.xlu0 %v3203
      %v3205 = vpop.xlane.xlu0 %3204
      %v3206 = vsel %vm971, %v2942, -inf
      %3207 = vmax.xlane.f32.xlu0 %v3206
      %v3208 = vpop.xlane.xlu0 %3207
      %v3209 = vsel %vm971, %v2945, -inf
      %3210 = vmax.xlane.f32.xlu0 %v3209
      %v3211 = vpop.xlane.xlu0 %3210
      %v3212 = vsel %vm971, %v2950, -inf
      %3213 = vmax.xlane.f32.xlu0 %v3212
      %v3214 = vpop.xlane.xlu0 %3213
      %v3215 = vsel %vm971, %v2953, -inf
      %3216 = vmax.xlane.f32.xlu0 %v3215
      %v3217 = vpop.xlane.xlu0 %3216
      %v3218 = vsel %vm971, %v2958, -inf
      %3219 = vmax.xlane.f32.xlu0 %v3218
      %v3220 = vpop.xlane.xlu0 %3219
      %v3221 = vsel %vm971, %v2961, -inf
      %3222 = vmax.xlane.f32.xlu0 %v3221
      %v3223 = vpop.xlane.xlu0 %3222
      %v3224 = vsel %vm971, %v2966, -inf
      %3225 = vmax.xlane.f32.xlu0 %v3224
      %v3226 = vpop.xlane.xlu0 %3225
      %v3227 = vsel %vm971, %v2969, -inf
      %3228 = vmax.xlane.f32.xlu0 %v3227
      %v3229 = vpop.xlane.xlu0 %3228
      %v3230 = vsel %vm971, %v3047, -inf
      %3231 = vmax.xlane.f32.xlu0 %v3230
      %v3232 = vpop.xlane.xlu0 %3231
      %v3233 = vsel %vm971, %v3050, -inf
      %3234 = vmax.xlane.f32.xlu0 %v3233
      %v3235 = vpop.xlane.xlu0 %3234
      %v3236 = vsel %vm971, %v3055, -inf
      %3237 = vmax.xlane.f32.xlu0 %v3236
      %v3238 = vpop.xlane.xlu0 %3237
      %v3239 = vsel %vm971, %v3058, -inf
      %3240 = vmax.xlane.f32.xlu0 %v3239
      %v3241 = vpop.xlane.xlu0 %3240
      %v3242 = vsel %vm971, %v3063, -inf
      %3243 = vmax.xlane.f32.xlu0 %v3242
      %v3244 = vpop.xlane.xlu0 %3243
      %v3245 = vsel %vm971, %v3066, -inf
      %3246 = vmax.xlane.f32.xlu0 %v3245
      %v3247 = vpop.xlane.xlu0 %3246
      %v3248 = vsel %vm971, %v3071, -inf
      %3249 = vmax.xlane.f32.xlu0 %v3248
      %v3250 = vpop.xlane.xlu0 %3249
      %v3251 = vsel %vm971, %v3074, -inf
      %3252 = vmax.xlane.f32.xlu0 %v3251
      %v3253 = vpop.xlane.xlu0 %3252
      %v3254 = vsel %vm971, %v3152, -inf
      %3255 = vmax.xlane.f32.xlu0 %v3254
      %v3256 = vpop.xlane.xlu0 %3255
      %v3257 = vsel %vm971, %v3155, -inf
      %3258 = vmax.xlane.f32.xlu0 %v3257
      %v3259 = vpop.xlane.xlu0 %3258
      %v3260 = vsel %vm971, %v3160, -inf
      %3261 = vmax.xlane.f32.xlu0 %v3260
      %v3262 = vpop.xlane.xlu0 %3261
      %v3263 = vsel %vm971, %v3163, -inf
      %3264 = vmax.xlane.f32.xlu0 %v3263
      %v3265 = vpop.xlane.xlu0 %3264
      %v3266 = vsel %vm971, %v3168, -inf
      %3267 = vmax.xlane.f32.xlu0 %v3266
      %v3268 = vpop.xlane.xlu0 %3267
      %v3269 = vsel %vm971, %v3171, -inf
      %3270 = vmax.xlane.f32.xlu0 %v3269
      %v3271 = vpop.xlane.xlu0 %3270
      %v3272 = vsel %vm971, %v3176, -inf
      %3273 = vmax.xlane.f32.xlu0 %v3272
      %v3274 = vpop.xlane.xlu0 %3273
      %v3275 = vsel %vm971, %v3179, -inf
      %3276 = vmax.xlane.f32.xlu0 %v3275
      %v3277 = vpop.xlane.xlu0 %3276
      %v3278 = vsub.f32 %v2837, %v3184
      %v3279 = vsub.f32 %v2840, %v3187
      %v3280 = vsub.f32 %v2845, %v3190
      %v3281 = vsub.f32 %v2848, %v3193
      %v3282 = vsub.f32 %v2853, %v3196
      %v3283 = vsub.f32 %v2856, %v3199
      %v3284 = vsub.f32 %v2861, %v3202
      %v3285 = vsub.f32 %v2864, %v3205
      %v3286 = vsub.f32 %v2942, %v3208
      %v3287 = vsub.f32 %v2945, %v3211
      %v3288 = vsub.f32 %v2950, %v3214
      %v3289 = vsub.f32 %v2953, %v3217
      %v3290 = vsub.f32 %v2958, %v3220
      %v3291 = vsub.f32 %v2961, %v3223
      %v3292 = vsub.f32 %v2966, %v3226
      %v3293 = vsub.f32 %v2969, %v3229
      %v3294 = vsub.f32 %v3047, %v3232
      %v3295 = vsub.f32 %v3050, %v3235
      %v3296 = vsub.f32 %v3055, %v3238
      %v3297 = vsub.f32 %v3058, %v3241
      %v3298 = vsub.f32 %v3063, %v3244
      %v3299 = vsub.f32 %v3066, %v3247
      %v3300 = vsub.f32 %v3071, %v3250
      %v3301 = vsub.f32 %v3074, %v3253
      %v3302 = vsub.f32 %v3152, %v3256
      %v3303 = vsub.f32 %v3155, %v3259
      %v3304 = vsub.f32 %v3160, %v3262
      %v3305 = vsub.f32 %v3163, %v3265
      %v3306 = vsub.f32 %v3168, %v3268
      %v3307 = vsub.f32 %v3171, %v3271
      %v3308 = vsub.f32 %v3176, %v3274
      %v3309 = vsub.f32 %v3179, %v3277
      %v3310 = vmul.f32 %v3278, 1.442695
      %v3311 = vpow.pop %v3310
      %v3312 = vmul.f32 %v3279, 1.442695
      %v3313 = vpow.pop %v3312
      %v3314 = vmul.f32 %v3280, 1.442695
      %v3315 = vpow.pop %v3314
      %v3316 = vmul.f32 %v3281, 1.442695
      %v3317 = vpow.pop %v3316
      %v3318 = vmul.f32 %v3282, 1.442695
      %v3319 = vpow.pop %v3318
      %v3320 = vmul.f32 %v3283, 1.442695
      %v3321 = vpow.pop %v3320
      %v3322 = vmul.f32 %v3284, 1.442695
      %v3323 = vpow.pop %v3322
      %v3324 = vmul.f32 %v3285, 1.442695
      %v3325 = vpow.pop %v3324
      %v3326 = vmul.f32 %v3286, 1.442695
      %v3327 = vpow.pop %v3326
      %v3328 = vmul.f32 %v3287, 1.442695
      %v3329 = vpow.pop %v3328
      %v3330 = vmul.f32 %v3288, 1.442695
      %v3331 = vpow.pop %v3330
      %v3332 = vmul.f32 %v3289, 1.442695
      %v3333 = vpow.pop %v3332
      %v3334 = vmul.f32 %v3290, 1.442695
      %v3335 = vpow.pop %v3334
      %v3336 = vmul.f32 %v3291, 1.442695
      %v3337 = vpow.pop %v3336
      %v3338 = vmul.f32 %v3292, 1.442695
      %v3339 = vpow.pop %v3338
      %v3340 = vmul.f32 %v3293, 1.442695
      %v3341 = vpow.pop %v3340
      %v3342 = vmul.f32 %v3294, 1.442695
      %v3343 = vpow.pop %v3342
      %v3344 = vmul.f32 %v3295, 1.442695
      %v3345 = vpow.pop %v3344
      %v3346 = vmul.f32 %v3296, 1.442695
      %v3347 = vpow.pop %v3346
      %v3348 = vmul.f32 %v3297, 1.442695
      %v3349 = vpow.pop %v3348
      %v3350 = vmul.f32 %v3298, 1.442695
      %v3351 = vpow.pop %v3350
      %v3352 = vmul.f32 %v3299, 1.442695
      %v3353 = vpow.pop %v3352
      %v3354 = vmul.f32 %v3300, 1.442695
      %v3355 = vpow.pop %v3354
      %v3356 = vmul.f32 %v3301, 1.442695
      %v3357 = vpow.pop %v3356
      %v3358 = vmul.f32 %v3302, 1.442695
      %v3359 = vpow.pop %v3358
      %v3360 = vmul.f32 %v3303, 1.442695
      %v3361 = vpow.pop %v3360
      %v3362 = vmul.f32 %v3304, 1.442695
      %v3363 = vpow.pop %v3362
      %v3364 = vmul.f32 %v3305, 1.442695
      %v3365 = vpow.pop %v3364
      %v3366 = vmul.f32 %v3306, 1.442695
      %v3367 = vpow.pop %v3366
      %v3368 = vmul.f32 %v3307, 1.442695
      %v3369 = vpow.pop %v3368
      %v3370 = vmul.f32 %v3308, 1.442695
      %v3371 = vpow.pop %v3370
      %v3372 = vmul.f32 %v3309, 1.442695
      %v3373 = vpow.pop %v3372
      %v3374 = vsel %vm971, %v3311, 0.0
      %3375 = vadd.xlane.f32.xlu0 %v3374
      %v3376 = vpop.xlane.xlu0 %3375
      %v3377 = vsel %vm971, %v3313, 0.0
      %3378 = vadd.xlane.f32.xlu0 %v3377
      %v3379 = vpop.xlane.xlu0 %3378
      %v3380 = vsel %vm971, %v3315, 0.0
      %3381 = vadd.xlane.f32.xlu0 %v3380
      %v3382 = vpop.xlane.xlu0 %3381
      %v3383 = vsel %vm971, %v3317, 0.0
      %3384 = vadd.xlane.f32.xlu0 %v3383
      %v3385 = vpop.xlane.xlu0 %3384
      %v3386 = vsel %vm971, %v3319, 0.0
      %3387 = vadd.xlane.f32.xlu0 %v3386
      %v3388 = vpop.xlane.xlu0 %3387
      %v3389 = vsel %vm971, %v3321, 0.0
      %3390 = vadd.xlane.f32.xlu0 %v3389
      %v3391 = vpop.xlane.xlu0 %3390
      %v3392 = vsel %vm971, %v3323, 0.0
      %3393 = vadd.xlane.f32.xlu0 %v3392
      %v3394 = vpop.xlane.xlu0 %3393
      %v3395 = vsel %vm971, %v3325, 0.0
      %3396 = vadd.xlane.f32.xlu0 %v3395
      %v3397 = vpop.xlane.xlu0 %3396
      %v3398 = vsel %vm971, %v3327, 0.0
      %3399 = vadd.xlane.f32.xlu0 %v3398
      %v3400 = vpop.xlane.xlu0 %3399
      %v3401 = vsel %vm971, %v3329, 0.0
      %3402 = vadd.xlane.f32.xlu0 %v3401
      %v3403 = vpop.xlane.xlu0 %3402
      %v3404 = vsel %vm971, %v3331, 0.0
      %3405 = vadd.xlane.f32.xlu0 %v3404
      %v3406 = vpop.xlane.xlu0 %3405
      %v3407 = vsel %vm971, %v3333, 0.0
      %3408 = vadd.xlane.f32.xlu0 %v3407
      %v3409 = vpop.xlane.xlu0 %3408
      %v3410 = vsel %vm971, %v3335, 0.0
      %3411 = vadd.xlane.f32.xlu0 %v3410
      %v3412 = vpop.xlane.xlu0 %3411
      %v3413 = vsel %vm971, %v3337, 0.0
      %3414 = vadd.xlane.f32.xlu0 %v3413
      %v3415 = vpop.xlane.xlu0 %3414
      %v3416 = vsel %vm971, %v3339, 0.0
      %3417 = vadd.xlane.f32.xlu0 %v3416
      %v3418 = vpop.xlane.xlu0 %3417
      %v3419 = vsel %vm971, %v3341, 0.0
      %3420 = vadd.xlane.f32.xlu0 %v3419
      %v3421 = vpop.xlane.xlu0 %3420
      %v3422 = vsel %vm971, %v3343, 0.0
      %3423 = vadd.xlane.f32.xlu0 %v3422
      %v3424 = vpop.xlane.xlu0 %3423
      %v3425 = vsel %vm971, %v3345, 0.0
      %3426 = vadd.xlane.f32.xlu0 %v3425
      %v3427 = vpop.xlane.xlu0 %3426
      %v3428 = vsel %vm971, %v3347, 0.0
      %3429 = vadd.xlane.f32.xlu0 %v3428
      %v3430 = vpop.xlane.xlu0 %3429
      %v3431 = vsel %vm971, %v3349, 0.0
      %3432 = vadd.xlane.f32.xlu0 %v3431
      %v3433 = vpop.xlane.xlu0 %3432
      %v3434 = vsel %vm971, %v3351, 0.0
      %3435 = vadd.xlane.f32.xlu0 %v3434
      %v3436 = vpop.xlane.xlu0 %3435
      %v3437 = vsel %vm971, %v3353, 0.0
      %3438 = vadd.xlane.f32.xlu0 %v3437
      %v3439 = vpop.xlane.xlu0 %3438
      %v3440 = vsel %vm971, %v3355, 0.0
      %3441 = vadd.xlane.f32.xlu0 %v3440
      %v3442 = vpop.xlane.xlu0 %3441
      %v3443 = vsel %vm971, %v3357, 0.0
      %3444 = vadd.xlane.f32.xlu0 %v3443
      %v3445 = vpop.xlane.xlu0 %3444
      %v3446 = vsel %vm971, %v3359, 0.0
      %3447 = vadd.xlane.f32.xlu0 %v3446
      %v3448 = vpop.xlane.xlu0 %3447
      %v3449 = vsel %vm971, %v3361, 0.0
      %3450 = vadd.xlane.f32.xlu0 %v3449
      %v3451 = vpop.xlane.xlu0 %3450
      %v3452 = vsel %vm971, %v3363, 0.0
      %3453 = vadd.xlane.f32.xlu0 %v3452
      %v3454 = vpop.xlane.xlu0 %3453
      %v3455 = vsel %vm971, %v3365, 0.0
      %3456 = vadd.xlane.f32.xlu0 %v3455
      %v3457 = vpop.xlane.xlu0 %3456
      %v3458 = vsel %vm971, %v3367, 0.0
      %3459 = vadd.xlane.f32.xlu0 %v3458
      %v3460 = vpop.xlane.xlu0 %3459
      %v3461 = vsel %vm971, %v3369, 0.0
      %3462 = vadd.xlane.f32.xlu0 %v3461
      %v3463 = vpop.xlane.xlu0 %3462
      %v3464 = vsel %vm971, %v3371, 0.0
      %3465 = vadd.xlane.f32.xlu0 %v3464
      %v3466 = vpop.xlane.xlu0 %3465
      %v3467 = vsel %vm971, %v3373, 0.0
      %3468 = vadd.xlane.f32.xlu0 %v3467
      %v3469 = vpop.xlane.xlu0 %3468
      %v3470 = vrcp.pop %v3376
      %v3471 = vrcp.pop %v3379
      %v3472 = vrcp.pop %v3382
      %v3473 = vrcp.pop %v3385
      %v3474 = vrcp.pop %v3388
      %v3475 = vrcp.pop %v3391
      %v3476 = vrcp.pop %v3394
      %v3477 = vrcp.pop %v3397
      %v3478 = vrcp.pop %v3400
      %v3479 = vrcp.pop %v3403
      %v3480 = vrcp.pop %v3406
      %v3481 = vrcp.pop %v3409
      %v3482 = vrcp.pop %v3412
      %v3483 = vrcp.pop %v3415
      %v3484 = vrcp.pop %v3418
      %v3485 = vrcp.pop %v3421
      %v3486 = vrcp.pop %v3424
      %v3487 = vrcp.pop %v3427
      %v3488 = vrcp.pop %v3430
      %v3489 = vrcp.pop %v3433
      %v3490 = vrcp.pop %v3436
      %v3491 = vrcp.pop %v3439
      %v3492 = vrcp.pop %v3442
      %v3493 = vrcp.pop %v3445
      %v3494 = vrcp.pop %v3448
      %v3495 = vrcp.pop %v3451
      %v3496 = vrcp.pop %v3454
      %v3497 = vrcp.pop %v3457
      %v3498 = vrcp.pop %v3460
      %v3499 = vrcp.pop %v3463
      %v3500 = vrcp.pop %v3466
      %v3501 = vrcp.pop %v3469
      %v3502 = vmul.f32 %v3311, %v3470
      %v3503 = vmul.f32 %v3313, %v3471
      %v3504 = vmul.f32 %v3315, %v3472
      %v3505 = vmul.f32 %v3317, %v3473
      %v3506 = vmul.f32 %v3319, %v3474
      %v3507 = vmul.f32 %v3321, %v3475
      %v3508 = vmul.f32 %v3323, %v3476
      %v3509 = vmul.f32 %v3325, %v3477
      %v3510 = vmul.f32 %v3327, %v3478
      %v3511 = vmul.f32 %v3329, %v3479
      %v3512 = vmul.f32 %v3331, %v3480
      %v3513 = vmul.f32 %v3333, %v3481
      %v3514 = vmul.f32 %v3335, %v3482
      %v3515 = vmul.f32 %v3337, %v3483
      %v3516 = vmul.f32 %v3339, %v3484
      %v3517 = vmul.f32 %v3341, %v3485
      %v3518 = vmul.f32 %v3343, %v3486
      %v3519 = vmul.f32 %v3345, %v3487
      %v3520 = vmul.f32 %v3347, %v3488
      %v3521 = vmul.f32 %v3349, %v3489
      %v3522 = vmul.f32 %v3351, %v3490
      %v3523 = vmul.f32 %v3353, %v3491
      %v3524 = vmul.f32 %v3355, %v3492
      %v3525 = vmul.f32 %v3357, %v3493
      %v3526 = vmul.f32 %v3359, %v3494
      %v3527 = vmul.f32 %v3361, %v3495
      %v3528 = vmul.f32 %v3363, %v3496
      %v3529 = vmul.f32 %v3365, %v3497
      %v3530 = vmul.f32 %v3367, %v3498
      %v3531 = vmul.f32 %v3369, %v3499
      %v3532 = vmul.f32 %v3371, %v3500
      %v3533 = vmul.f32 %v3373, %v3501
      %v3534 = vpack.c.bf16 %v3503, %v3502
      %v3535 = vpack.c.bf16 %v3505, %v3504
      %v3536 = vpack.c.bf16 %v3507, %v3506
      %v3537 = vpack.c.bf16 %v3509, %v3508
      %v3538 = vpack.c.bf16 %v3511, %v3510
      %v3539 = vpack.c.bf16 %v3513, %v3512
      %v3540 = vpack.c.bf16 %v3515, %v3514
      %v3541 = vpack.c.bf16 %v3517, %v3516
      %v3542 = vpack.c.bf16 %v3519, %v3518
      %v3543 = vpack.c.bf16 %v3521, %v3520
      %v3544 = vpack.c.bf16 %v3523, %v3522
      %v3545 = vpack.c.bf16 %v3525, %v3524
      %v3546 = vpack.c.bf16 %v3527, %v3526
      %v3547 = vpack.c.bf16 %v3529, %v3528
      %v3548 = vpack.c.bf16 %v3531, %v3530
      %v3549 = vpack.c.bf16 %v3533, %v3532
      %v3551 = vsel %vm971, %v3534, 0
      %v3554 = vsel %vm971, %v3535, 0
      %v3557 = vsel %vm971, %v3536, 0
      %v3560 = vsel %vm971, %v3537, 0
      %3562 = vmatprep.subr.bf16.mxu0 0
      %3563 = vmatpush1.bf16.msra.mxu0 0
      %3564 = vmatprep.subr.bf16.mxu0 0
      %3565 = vmatpush1.bf16.msra.mxu0 0
      %3566 = vmatprep.subr.bf16.mxu0 0
      %3567 = vmatpush1.bf16.msra.mxu0 0
      %3568 = vmatprep.subr.bf16.mxu0 0
      %3569 = vmatpush1.bf16.msra.mxu0 0
      %3570 = vmatprep.subr.bf16.mxu0 0
      %3571 = vmatpush1.bf16.msra.mxu0 %v296
      %3572 = vmatprep.subr.bf16.mxu0 0
      %3573 = vmatpush1.bf16.msra.mxu0 %v295
      %3574 = vmatprep.subr.bf16.mxu0 0
      %3575 = vmatpush1.bf16.msra.mxu0 %v294
      %3576 = vmatprep.subr.bf16.mxu0 0
      %3577 = vmatpush1.bf16.msra.mxu0 %v293
      %3578 = vmatprep.subr.bf16.mxu0 0
      %3579 = vmatpush2.bf16.msra.mxu0 0
      %3580 = vmatprep.subr.bf16.mxu0 0
      %3581 = vmatpush2.bf16.msra.mxu0 0
      %3582 = vmatprep.subr.bf16.mxu0 0
      %3583 = vmatpush2.bf16.msra.mxu0 0
      %3584 = vmatprep.subr.bf16.mxu0 0
      %3585 = vmatpush2.bf16.msra.mxu0 0
      %3586 = vmatprep.subr.bf16.mxu0 0
      %3587 = vmatpush2.bf16.msra.mxu0 0
      %3588 = vmatprep.subr.bf16.mxu0 0
      %3589 = vmatpush2.bf16.msra.mxu0 0
      %3590 = vmatprep.subr.bf16.mxu0 0
      %3591 = vmatpush2.bf16.msra.mxu0 0
      %3592 = vmatprep.subr.bf16.mxu0 0
      %3593 = vmatpush2.bf16.msra.mxu0 0
      %3594 = vmatprep.mubr.bf16.mxu0 0
      %3595 = vmatmul.mubr.bf16.gmra.mxu0 %v3551
      %v3596 = vpop.f32.mrf.mxu0
      %v3597 = vadd.f32 0.0, %v3596
      %v3598 = vpop.f32.mrf.mxu0
      %v3599 = vpop.f32.mrf.mxu0
      %v3600 = vadd.f32 0.0, %v3599
      %v3601 = vpop.f32.mrf.mxu0
      %3602 = vmatprep.mubr.bf16.mxu0 0
      %3603 = vmatmul.mubr.bf16.gmra.mxu0 %v3554
      %v3604 = vpop.f32.mrf.mxu0
      %v3605 = vadd.f32 0.0, %v3604
      %v3606 = vpop.f32.mrf.mxu0
      %v3607 = vpop.f32.mrf.mxu0
      %v3608 = vadd.f32 0.0, %v3607
      %v3609 = vpop.f32.mrf.mxu0
      %3610 = vmatprep.mubr.bf16.mxu0 0
      %3611 = vmatmul.mubr.bf16.gmra.mxu0 %v3557
      %v3612 = vpop.f32.mrf.mxu0
      %v3613 = vadd.f32 0.0, %v3612
      %v3614 = vpop.f32.mrf.mxu0
      %v3615 = vpop.f32.mrf.mxu0
      %v3616 = vadd.f32 0.0, %v3615
      %v3617 = vpop.f32.mrf.mxu0
      %3618 = vmatprep.mubr.bf16.mxu0 0
      %3619 = vmatmul.mubr.bf16.gmra.mxu0 %v3560
      %v3620 = vpop.f32.mrf.mxu0
      %v3621 = vadd.f32 0.0, %v3620
      %v3622 = vpop.f32.mrf.mxu0
      %v3623 = vpop.f32.mrf.mxu0
      %v3624 = vadd.f32 0.0, %v3623
      %v3625 = vpop.f32.mrf.mxu0
      %3626 = vdwg.mxu0
      %v3628 = vsel %vm971, %v3538, 0
      %v3631 = vsel %vm971, %v3539, 0
      %v3634 = vsel %vm971, %v3540, 0
      %v3637 = vsel %vm971, %v3541, 0
      %3639 = vmatprep.subr.bf16.mxu0 0
      %3640 = vmatpush1.bf16.msra.mxu0 0
      %3641 = vmatprep.subr.bf16.mxu0 0
      %3642 = vmatpush1.bf16.msra.mxu0 0
      %3643 = vmatprep.subr.bf16.mxu0 0
      %3644 = vmatpush1.bf16.msra.mxu0 0
      %3645 = vmatprep.subr.bf16.mxu0 0
      %3646 = vmatpush1.bf16.msra.mxu0 0
      %3647 = vmatprep.subr.bf16.mxu0 0
      %3648 = vmatpush1.bf16.msra.mxu0 %v300
      %3649 = vmatprep.subr.bf16.mxu0 0
      %3650 = vmatpush1.bf16.msra.mxu0 %v299
      %3651 = vmatprep.subr.bf16.mxu0 0
      %3652 = vmatpush1.bf16.msra.mxu0 %v298
      %3653 = vmatprep.subr.bf16.mxu0 0
      %3654 = vmatpush1.bf16.msra.mxu0 %v297
      %3655 = vmatprep.subr.bf16.mxu0 0
      %3656 = vmatpush2.bf16.msra.mxu0 0
      %3657 = vmatprep.subr.bf16.mxu0 0
      %3658 = vmatpush2.bf16.msra.mxu0 0
      %3659 = vmatprep.subr.bf16.mxu0 0
      %3660 = vmatpush2.bf16.msra.mxu0 0
      %3661 = vmatprep.subr.bf16.mxu0 0
      %3662 = vmatpush2.bf16.msra.mxu0 0
      %3663 = vmatprep.subr.bf16.mxu0 0
      %3664 = vmatpush2.bf16.msra.mxu0 0
      %3665 = vmatprep.subr.bf16.mxu0 0
      %3666 = vmatpush2.bf16.msra.mxu0 0
      %3667 = vmatprep.subr.bf16.mxu0 0
      %3668 = vmatpush2.bf16.msra.mxu0 0
      %3669 = vmatprep.subr.bf16.mxu0 0
      %3670 = vmatpush2.bf16.msra.mxu0 0
      %3671 = vmatprep.mubr.bf16.mxu0 0
      %3672 = vmatmul.mubr.bf16.gmra.mxu0 %v3628
      %v3673 = vpop.f32.mrf.mxu0
      %v3674 = vadd.f32 0.0, %v3673
      %v3675 = vpop.f32.mrf.mxu0
      %v3676 = vpop.f32.mrf.mxu0
      %v3677 = vadd.f32 0.0, %v3676
      %v3678 = vpop.f32.mrf.mxu0
      %3679 = vmatprep.mubr.bf16.mxu0 0
      %3680 = vmatmul.mubr.bf16.gmra.mxu0 %v3631
      %v3681 = vpop.f32.mrf.mxu0
      %v3682 = vadd.f32 0.0, %v3681
      %v3683 = vpop.f32.mrf.mxu0
      %v3684 = vpop.f32.mrf.mxu0
      %v3685 = vadd.f32 0.0, %v3684
      %v3686 = vpop.f32.mrf.mxu0
      %3687 = vmatprep.mubr.bf16.mxu0 0
      %3688 = vmatmul.mubr.bf16.gmra.mxu0 %v3634
      %v3689 = vpop.f32.mrf.mxu0
      %v3690 = vadd.f32 0.0, %v3689
      %v3691 = vpop.f32.mrf.mxu0
      %v3692 = vpop.f32.mrf.mxu0
      %v3693 = vadd.f32 0.0, %v3692
      %v3694 = vpop.f32.mrf.mxu0
      %3695 = vmatprep.mubr.bf16.mxu0 0
      %3696 = vmatmul.mubr.bf16.gmra.mxu0 %v3637
      %v3697 = vpop.f32.mrf.mxu0
      %v3698 = vadd.f32 0.0, %v3697
      %v3699 = vpop.f32.mrf.mxu0
      %v3700 = vpop.f32.mrf.mxu0
      %v3701 = vadd.f32 0.0, %v3700
      %v3702 = vpop.f32.mrf.mxu0
      %3703 = vdwg.mxu0
      %v3705 = vsel %vm971, %v3542, 0
      %v3708 = vsel %vm971, %v3543, 0
      %v3711 = vsel %vm971, %v3544, 0
      %v3714 = vsel %vm971, %v3545, 0
      %3716 = vmatprep.subr.bf16.mxu0 0
      %3717 = vmatpush1.bf16.msra.mxu0 0
      %3718 = vmatprep.subr.bf16.mxu0 0
      %3719 = vmatpush1.bf16.msra.mxu0 0
      %3720 = vmatprep.subr.bf16.mxu0 0
      %3721 = vmatpush1.bf16.msra.mxu0 0
      %3722 = vmatprep.subr.bf16.mxu0 0
      %3723 = vmatpush1.bf16.msra.mxu0 0
      %3724 = vmatprep.subr.bf16.mxu0 0
      %3725 = vmatpush1.bf16.msra.mxu0 %v304
      %3726 = vmatprep.subr.bf16.mxu0 0
      %3727 = vmatpush1.bf16.msra.mxu0 %v303
      %3728 = vmatprep.subr.bf16.mxu0 0
      %3729 = vmatpush1.bf16.msra.mxu0 %v302
      %3730 = vmatprep.subr.bf16.mxu0 0
      %3731 = vmatpush1.bf16.msra.mxu0 %v301
      %3732 = vmatprep.subr.bf16.mxu0 0
      %3733 = vmatpush2.bf16.msra.mxu0 0
      %3734 = vmatprep.subr.bf16.mxu0 0
      %3735 = vmatpush2.bf16.msra.mxu0 0
      %3736 = vmatprep.subr.bf16.mxu0 0
      %3737 = vmatpush2.bf16.msra.mxu0 0
      %3738 = vmatprep.subr.bf16.mxu0 0
      %3739 = vmatpush2.bf16.msra.mxu0 0
      %3740 = vmatprep.subr.bf16.mxu0 0
      %3741 = vmatpush2.bf16.msra.mxu0 0
      %3742 = vmatprep.subr.bf16.mxu0 0
      %3743 = vmatpush2.bf16.msra.mxu0 0
      %3744 = vmatprep.subr.bf16.mxu0 0
      %3745 = vmatpush2.bf16.msra.mxu0 0
      %3746 = vmatprep.subr.bf16.mxu0 0
      %3747 = vmatpush2.bf16.msra.mxu0 0
      %3748 = vmatprep.mubr.bf16.mxu0 0
      %3749 = vmatmul.mubr.bf16.gmra.mxu0 %v3705
      %v3750 = vpop.f32.mrf.mxu0
      %v3751 = vadd.f32 0.0, %v3750
      %v3752 = vpop.f32.mrf.mxu0
      %v3753 = vpop.f32.mrf.mxu0
      %v3754 = vadd.f32 0.0, %v3753
      %v3755 = vpop.f32.mrf.mxu0
      %3756 = vmatprep.mubr.bf16.mxu0 0
      %3757 = vmatmul.mubr.bf16.gmra.mxu0 %v3708
      %v3758 = vpop.f32.mrf.mxu0
      %v3759 = vadd.f32 0.0, %v3758
      %v3760 = vpop.f32.mrf.mxu0
      %v3761 = vpop.f32.mrf.mxu0
      %v3762 = vadd.f32 0.0, %v3761
      %v3763 = vpop.f32.mrf.mxu0
      %3764 = vmatprep.mubr.bf16.mxu0 0
      %3765 = vmatmul.mubr.bf16.gmra.mxu0 %v3711
      %v3766 = vpop.f32.mrf.mxu0
      %v3767 = vadd.f32 0.0, %v3766
      %v3768 = vpop.f32.mrf.mxu0
      %v3769 = vpop.f32.mrf.mxu0
      %v3770 = vadd.f32 0.0, %v3769
      %v3771 = vpop.f32.mrf.mxu0
      %3772 = vmatprep.mubr.bf16.mxu0 0
      %3773 = vmatmul.mubr.bf16.gmra.mxu0 %v3714
      %v3774 = vpop.f32.mrf.mxu0
      %v3775 = vadd.f32 0.0, %v3774
      %v3776 = vpop.f32.mrf.mxu0
      %v3777 = vpop.f32.mrf.mxu0
      %v3778 = vadd.f32 0.0, %v3777
      %v3779 = vpop.f32.mrf.mxu0
      %3780 = vdwg.mxu0
      %v3782 = vsel %vm971, %v3546, 0
      %v3785 = vsel %vm971, %v3547, 0
      %v3788 = vsel %vm971, %v3548, 0
      %v3791 = vsel %vm971, %v3549, 0
      %3793 = vmatprep.subr.bf16.mxu0 0
      %3794 = vmatpush1.bf16.msra.mxu0 0
      %3795 = vmatprep.subr.bf16.mxu0 0
      %3796 = vmatpush1.bf16.msra.mxu0 0
      %3797 = vmatprep.subr.bf16.mxu0 0
      %3798 = vmatpush1.bf16.msra.mxu0 0
      %3799 = vmatprep.subr.bf16.mxu0 0
      %3800 = vmatpush1.bf16.msra.mxu0 0
      %3801 = vmatprep.subr.bf16.mxu0 0
      %3802 = vmatpush1.bf16.msra.mxu0 %v308
      %3803 = vmatprep.subr.bf16.mxu0 0
      %3804 = vmatpush1.bf16.msra.mxu0 %v307
      %3805 = vmatprep.subr.bf16.mxu0 0
      %3806 = vmatpush1.bf16.msra.mxu0 %v306
      %3807 = vmatprep.subr.bf16.mxu0 0
      %3808 = vmatpush1.bf16.msra.mxu0 %v305
      %3809 = vmatprep.subr.bf16.mxu0 0
      %3810 = vmatpush2.bf16.msra.mxu0 0
      %3811 = vmatprep.subr.bf16.mxu0 0
      %3812 = vmatpush2.bf16.msra.mxu0 0
      %3813 = vmatprep.subr.bf16.mxu0 0
      %3814 = vmatpush2.bf16.msra.mxu0 0
      %3815 = vmatprep.subr.bf16.mxu0 0
      %3816 = vmatpush2.bf16.msra.mxu0 0
      %3817 = vmatprep.subr.bf16.mxu0 0
      %3818 = vmatpush2.bf16.msra.mxu0 0
      %3819 = vmatprep.subr.bf16.mxu0 0
      %3820 = vmatpush2.bf16.msra.mxu0 0
      %3821 = vmatprep.subr.bf16.mxu0 0
      %3822 = vmatpush2.bf16.msra.mxu0 0
      %3823 = vmatprep.subr.bf16.mxu0 0
      %3824 = vmatpush2.bf16.msra.mxu0 0
      %3825 = vmatprep.mubr.bf16.mxu0 0
      %3826 = vmatmul.mubr.bf16.gmra.mxu0 %v3782
      %v3827 = vpop.f32.mrf.mxu0
      %v3828 = vadd.f32 0.0, %v3827
      %v3829 = vpop.f32.mrf.mxu0
      %v3830 = vpop.f32.mrf.mxu0
      %v3831 = vadd.f32 0.0, %v3830
      %v3832 = vpop.f32.mrf.mxu0
      %3833 = vmatprep.mubr.bf16.mxu0 0
      %3834 = vmatmul.mubr.bf16.gmra.mxu0 %v3785
      %v3835 = vpop.f32.mrf.mxu0
      %v3836 = vadd.f32 0.0, %v3835
      %v3837 = vpop.f32.mrf.mxu0
      %v3838 = vpop.f32.mrf.mxu0
      %v3839 = vadd.f32 0.0, %v3838
      %v3840 = vpop.f32.mrf.mxu0
      %3841 = vmatprep.mubr.bf16.mxu0 0
      %3842 = vmatmul.mubr.bf16.gmra.mxu0 %v3788
      %v3843 = vpop.f32.mrf.mxu0
      %v3844 = vadd.f32 0.0, %v3843
      %v3845 = vpop.f32.mrf.mxu0
      %v3846 = vpop.f32.mrf.mxu0
      %v3847 = vadd.f32 0.0, %v3846
      %v3848 = vpop.f32.mrf.mxu0
      %3849 = vmatprep.mubr.bf16.mxu0 0
      %3850 = vmatmul.mubr.bf16.gmra.mxu0 %v3791
      %v3851 = vpop.f32.mrf.mxu0
      %v3852 = vadd.f32 0.0, %v3851
      %v3853 = vpop.f32.mrf.mxu0
      %v3854 = vpop.f32.mrf.mxu0
      %v3855 = vadd.f32 0.0, %v3854
      %v3856 = vpop.f32.mrf.mxu0
      %3857 = vdwg.mxu0
      %s3858 = scalar_lea.vmem %s3, 192
      %v3859 = vld [vmem:[%s3858] sm:$0xff]
      %v3860 = vld [vmem:[%s3858 + $0x8] sm:$0xff]
      %v3861 = vld [vmem:[%s3858 + $0x10] sm:$0xff]
      %v3862 = vld [vmem:[%s3858 + $0x18] sm:$0xff]
      %v3863 = vld [vmem:[%s3858 + $0x20] sm:$0xff]
      %v3864 = vld [vmem:[%s3858 + $0x28] sm:$0xff]
      %v3865 = vld [vmem:[%s3858 + $0x30] sm:$0xff]
      %v3866 = vld [vmem:[%s3858 + $0x38] sm:$0xff]
      %3867 = vrot.lane.b32.xlu0 %v542, 104
      %v3868 = vpop.permute.xlu0 %3867
      %3869 = vrot.lane.b32.xlu0 %v543, 104
      %v3870 = vpop.permute.xlu0 %3869
      %3871 = vrot.lane.b32.xlu0 %v544, 104
      %v3872 = vpop.permute.xlu0 %3871
      %3873 = vrot.lane.b32.xlu0 %v545, 104
      %v3874 = vpop.permute.xlu0 %3873
      %3875 = vrot.lane.b32.xlu0 %v542, 72
      %v3876 = vpop.permute.xlu0 %3875
      %3877 = vrot.lane.b32.xlu0 %v543, 72
      %v3878 = vpop.permute.xlu0 %3877
      %3879 = vrot.lane.b32.xlu0 %v544, 72
      %v3880 = vpop.permute.xlu0 %3879
      %3881 = vrot.lane.b32.xlu0 %v545, 72
      %v3882 = vpop.permute.xlu0 %3881
      %v3884 = vsel %vm578, %v3868, 0
      %v3887 = vsel %vm578, %v3870, 0
      %v3890 = vsel %vm578, %v3872, 0
      %v3893 = vsel %vm578, %v3874, 0
      %v3896 = vsel %vm578, %v3876, 0
      %v3899 = vsel %vm578, %v3878, 0
      %v3902 = vsel %vm578, %v3880, 0
      %v3905 = vsel %vm578, %v3882, 0
      %3907 = vmatprep.subr.bf16.mxu0 0
      %3908 = vmatpush1.bf16.xpose.msra.mxu0 0
      %3909 = vmatprep.subr.bf16.mxu0 0
      %3910 = vmatpush1.bf16.xpose.msra.mxu0 0
      %3911 = vmatprep.subr.bf16.mxu0 0
      %3912 = vmatpush1.bf16.xpose.msra.mxu0 0
      %3913 = vmatprep.subr.bf16.mxu0 0
      %3914 = vmatpush1.bf16.xpose.msra.mxu0 0
      %3915 = vmatprep.subr.bf16.mxu0 0
      %3916 = vmatpush1.bf16.xpose.msra.mxu0 %v3905
      %3917 = vmatprep.subr.bf16.mxu0 0
      %3918 = vmatpush1.bf16.xpose.msra.mxu0 %v3902
      %3919 = vmatprep.subr.bf16.mxu0 0
      %3920 = vmatpush1.bf16.xpose.msra.mxu0 %v3899
      %3921 = vmatprep.subr.bf16.mxu0 0
      %3922 = vmatpush1.bf16.xpose.msra.mxu0 %v3896
      %3923 = vmatprep.subr.bf16.mxu0 0
      %3924 = vmatpush2.bf16.xpose.msra.mxu0 0
      %3925 = vmatprep.subr.bf16.mxu0 0
      %3926 = vmatpush2.bf16.xpose.msra.mxu0 0
      %3927 = vmatprep.subr.bf16.mxu0 0
      %3928 = vmatpush2.bf16.xpose.msra.mxu0 0
      %3929 = vmatprep.subr.bf16.mxu0 0
      %3930 = vmatpush2.bf16.xpose.msra.mxu0 0
      %3931 = vmatprep.subr.bf16.mxu0 0
      %3932 = vmatpush2.bf16.xpose.msra.mxu0 0
      %3933 = vmatprep.subr.bf16.mxu0 0
      %3934 = vmatpush2.bf16.xpose.msra.mxu0 0
      %3935 = vmatprep.subr.bf16.mxu0 0
      %3936 = vmatpush2.bf16.xpose.msra.mxu0 0
      %3937 = vmatprep.subr.bf16.mxu0 0
      %3938 = vmatpush2.bf16.xpose.msra.mxu0 0
      %3939 = vmatprep.mubr.bf16.mxu0 0
      %3940 = vmatmul.mubr.bf16.gmra.mxu0 %v3884
      %v3941 = vpop.f32.mrf.mxu0
      %v3942 = vadd.f32 %v3859, %v3941
      %v3943 = vpop.f32.mrf.mxu0
      %v3944 = vpop.f32.mrf.mxu0
      %v3945 = vadd.f32 %v3860, %v3944
      %v3946 = vpop.f32.mrf.mxu0
      %3947 = vmatprep.mubr.bf16.mxu0 0
      %3948 = vmatmul.mubr.bf16.gmra.mxu0 %v3887
      %v3949 = vpop.f32.mrf.mxu0
      %v3950 = vadd.f32 %v3861, %v3949
      %v3951 = vpop.f32.mrf.mxu0
      %v3952 = vpop.f32.mrf.mxu0
      %v3953 = vadd.f32 %v3862, %v3952
      %v3954 = vpop.f32.mrf.mxu0
      %3955 = vmatprep.mubr.bf16.mxu0 0
      %3956 = vmatmul.mubr.bf16.gmra.mxu0 %v3890
      %v3957 = vpop.f32.mrf.mxu0
      %v3958 = vadd.f32 %v3863, %v3957
      %v3959 = vpop.f32.mrf.mxu0
      %v3960 = vpop.f32.mrf.mxu0
      %v3961 = vadd.f32 %v3864, %v3960
      %v3962 = vpop.f32.mrf.mxu0
      %3963 = vmatprep.mubr.bf16.mxu0 0
      %3964 = vmatmul.mubr.bf16.gmra.mxu0 %v3893
      %v3965 = vpop.f32.mrf.mxu0
      %v3966 = vadd.f32 %v3865, %v3965
      %v3967 = vpop.f32.mrf.mxu0
      %v3968 = vpop.f32.mrf.mxu0
      %v3969 = vadd.f32 %v3866, %v3968
      %v3970 = vpop.f32.mrf.mxu0
      %3971 = vdwg.mxu0
      %3972 = vrot.lane.b32.xlu0 %v546, 104
      %v3973 = vpop.permute.xlu0 %3972
      %3974 = vrot.lane.b32.xlu0 %v547, 104
      %v3975 = vpop.permute.xlu0 %3974
      %3976 = vrot.lane.b32.xlu0 %v548, 104
      %v3977 = vpop.permute.xlu0 %3976
      %3978 = vrot.lane.b32.xlu0 %v549, 104
      %v3979 = vpop.permute.xlu0 %3978
      %3980 = vrot.lane.b32.xlu0 %v546, 72
      %v3981 = vpop.permute.xlu0 %3980
      %3982 = vrot.lane.b32.xlu0 %v547, 72
      %v3983 = vpop.permute.xlu0 %3982
      %3984 = vrot.lane.b32.xlu0 %v548, 72
      %v3985 = vpop.permute.xlu0 %3984
      %3986 = vrot.lane.b32.xlu0 %v549, 72
      %v3987 = vpop.permute.xlu0 %3986
      %v3989 = vsel %vm578, %v3973, 0
      %v3992 = vsel %vm578, %v3975, 0
      %v3995 = vsel %vm578, %v3977, 0
      %v3998 = vsel %vm578, %v3979, 0
      %v4001 = vsel %vm578, %v3981, 0
      %v4004 = vsel %vm578, %v3983, 0
      %v4007 = vsel %vm578, %v3985, 0
      %v4010 = vsel %vm578, %v3987, 0
      %4012 = vmatprep.subr.bf16.mxu0 0
      %4013 = vmatpush1.bf16.xpose.msra.mxu0 0
      %4014 = vmatprep.subr.bf16.mxu0 0
      %4015 = vmatpush1.bf16.xpose.msra.mxu0 0
      %4016 = vmatprep.subr.bf16.mxu0 0
      %4017 = vmatpush1.bf16.xpose.msra.mxu0 0
      %4018 = vmatprep.subr.bf16.mxu0 0
      %4019 = vmatpush1.bf16.xpose.msra.mxu0 0
      %4020 = vmatprep.subr.bf16.mxu0 0
      %4021 = vmatpush1.bf16.xpose.msra.mxu0 %v4010
      %4022 = vmatprep.subr.bf16.mxu0 0
      %4023 = vmatpush1.bf16.xpose.msra.mxu0 %v4007
      %4024 = vmatprep.subr.bf16.mxu0 0
      %4025 = vmatpush1.bf16.xpose.msra.mxu0 %v4004
      %4026 = vmatprep.subr.bf16.mxu0 0
      %4027 = vmatpush1.bf16.xpose.msra.mxu0 %v4001
      %4028 = vmatprep.subr.bf16.mxu0 0
      %4029 = vmatpush2.bf16.xpose.msra.mxu0 0
      %4030 = vmatprep.subr.bf16.mxu0 0
      %4031 = vmatpush2.bf16.xpose.msra.mxu0 0
      %4032 = vmatprep.subr.bf16.mxu0 0
      %4033 = vmatpush2.bf16.xpose.msra.mxu0 0
      %4034 = vmatprep.subr.bf16.mxu0 0
      %4035 = vmatpush2.bf16.xpose.msra.mxu0 0
      %4036 = vmatprep.subr.bf16.mxu0 0
      %4037 = vmatpush2.bf16.xpose.msra.mxu0 0
      %4038 = vmatprep.subr.bf16.mxu0 0
      %4039 = vmatpush2.bf16.xpose.msra.mxu0 0
      %4040 = vmatprep.subr.bf16.mxu0 0
      %4041 = vmatpush2.bf16.xpose.msra.mxu0 0
      %4042 = vmatprep.subr.bf16.mxu0 0
      %4043 = vmatpush2.bf16.xpose.msra.mxu0 0
      %4044 = vmatprep.mubr.bf16.mxu0 0
      %4045 = vmatmul.mubr.bf16.gmra.mxu0 %v3989
      %v4046 = vpop.f32.mrf.mxu0
      %v4047 = vadd.f32 %v3859, %v4046
      %v4048 = vpop.f32.mrf.mxu0
      %v4049 = vpop.f32.mrf.mxu0
      %v4050 = vadd.f32 %v3860, %v4049
      %v4051 = vpop.f32.mrf.mxu0
      %4052 = vmatprep.mubr.bf16.mxu0 0
      %4053 = vmatmul.mubr.bf16.gmra.mxu0 %v3992
      %v4054 = vpop.f32.mrf.mxu0
      %v4055 = vadd.f32 %v3861, %v4054
      %v4056 = vpop.f32.mrf.mxu0
      %v4057 = vpop.f32.mrf.mxu0
      %v4058 = vadd.f32 %v3862, %v4057
      %v4059 = vpop.f32.mrf.mxu0
      %4060 = vmatprep.mubr.bf16.mxu0 0
      %4061 = vmatmul.mubr.bf16.gmra.mxu0 %v3995
      %v4062 = vpop.f32.mrf.mxu0
      %v4063 = vadd.f32 %v3863, %v4062
      %v4064 = vpop.f32.mrf.mxu0
      %v4065 = vpop.f32.mrf.mxu0
      %v4066 = vadd.f32 %v3864, %v4065
      %v4067 = vpop.f32.mrf.mxu0
      %4068 = vmatprep.mubr.bf16.mxu0 0
      %4069 = vmatmul.mubr.bf16.gmra.mxu0 %v3998
      %v4070 = vpop.f32.mrf.mxu0
      %v4071 = vadd.f32 %v3865, %v4070
      %v4072 = vpop.f32.mrf.mxu0
      %v4073 = vpop.f32.mrf.mxu0
      %v4074 = vadd.f32 %v3866, %v4073
      %v4075 = vpop.f32.mrf.mxu0
      %4076 = vdwg.mxu0
      %4077 = vrot.lane.b32.xlu0 %v550, 104
      %v4078 = vpop.permute.xlu0 %4077
      %4079 = vrot.lane.b32.xlu0 %v551, 104
      %v4080 = vpop.permute.xlu0 %4079
      %4081 = vrot.lane.b32.xlu0 %v552, 104
      %v4082 = vpop.permute.xlu0 %4081
      %4083 = vrot.lane.b32.xlu0 %v553, 104
      %v4084 = vpop.permute.xlu0 %4083
      %4085 = vrot.lane.b32.xlu0 %v550, 72
      %v4086 = vpop.permute.xlu0 %4085
      %4087 = vrot.lane.b32.xlu0 %v551, 72
      %v4088 = vpop.permute.xlu0 %4087
      %4089 = vrot.lane.b32.xlu0 %v552, 72
      %v4090 = vpop.permute.xlu0 %4089
      %4091 = vrot.lane.b32.xlu0 %v553, 72
      %v4092 = vpop.permute.xlu0 %4091
      %v4094 = vsel %vm578, %v4078, 0
      %v4097 = vsel %vm578, %v4080, 0
      %v4100 = vsel %vm578, %v4082, 0
      %v4103 = vsel %vm578, %v4084, 0
      %v4106 = vsel %vm578, %v4086, 0
      %v4109 = vsel %vm578, %v4088, 0
      %v4112 = vsel %vm578, %v4090, 0
      %v4115 = vsel %vm578, %v4092, 0
      %4117 = vmatprep.subr.bf16.mxu0 0
      %4118 = vmatpush1.bf16.xpose.msra.mxu0 0
      %4119 = vmatprep.subr.bf16.mxu0 0
      %4120 = vmatpush1.bf16.xpose.msra.mxu0 0
      %4121 = vmatprep.subr.bf16.mxu0 0
      %4122 = vmatpush1.bf16.xpose.msra.mxu0 0
      %4123 = vmatprep.subr.bf16.mxu0 0
      %4124 = vmatpush1.bf16.xpose.msra.mxu0 0
      %4125 = vmatprep.subr.bf16.mxu0 0
      %4126 = vmatpush1.bf16.xpose.msra.mxu0 %v4115
      %4127 = vmatprep.subr.bf16.mxu0 0
      %4128 = vmatpush1.bf16.xpose.msra.mxu0 %v4112
      %4129 = vmatprep.subr.bf16.mxu0 0
      %4130 = vmatpush1.bf16.xpose.msra.mxu0 %v4109
      %4131 = vmatprep.subr.bf16.mxu0 0
      %4132 = vmatpush1.bf16.xpose.msra.mxu0 %v4106
      %4133 = vmatprep.subr.bf16.mxu0 0
      %4134 = vmatpush2.bf16.xpose.msra.mxu0 0
      %4135 = vmatprep.subr.bf16.mxu0 0
      %4136 = vmatpush2.bf16.xpose.msra.mxu0 0
      %4137 = vmatprep.subr.bf16.mxu0 0
      %4138 = vmatpush2.bf16.xpose.msra.mxu0 0
      %4139 = vmatprep.subr.bf16.mxu0 0
      %4140 = vmatpush2.bf16.xpose.msra.mxu0 0
      %4141 = vmatprep.subr.bf16.mxu0 0
      %4142 = vmatpush2.bf16.xpose.msra.mxu0 0
      %4143 = vmatprep.subr.bf16.mxu0 0
      %4144 = vmatpush2.bf16.xpose.msra.mxu0 0
      %4145 = vmatprep.subr.bf16.mxu0 0
      %4146 = vmatpush2.bf16.xpose.msra.mxu0 0
      %4147 = vmatprep.subr.bf16.mxu0 0
      %4148 = vmatpush2.bf16.xpose.msra.mxu0 0
      %4149 = vmatprep.mubr.bf16.mxu0 0
      %4150 = vmatmul.mubr.bf16.gmra.mxu0 %v4094
      %v4151 = vpop.f32.mrf.mxu0
      %v4152 = vadd.f32 %v3859, %v4151
      %v4153 = vpop.f32.mrf.mxu0
      %v4154 = vpop.f32.mrf.mxu0
      %v4155 = vadd.f32 %v3860, %v4154
      %v4156 = vpop.f32.mrf.mxu0
      %4157 = vmatprep.mubr.bf16.mxu0 0
      %4158 = vmatmul.mubr.bf16.gmra.mxu0 %v4097
      %v4159 = vpop.f32.mrf.mxu0
      %v4160 = vadd.f32 %v3861, %v4159
      %v4161 = vpop.f32.mrf.mxu0
      %v4162 = vpop.f32.mrf.mxu0
      %v4163 = vadd.f32 %v3862, %v4162
      %v4164 = vpop.f32.mrf.mxu0
      %4165 = vmatprep.mubr.bf16.mxu0 0
      %4166 = vmatmul.mubr.bf16.gmra.mxu0 %v4100
      %v4167 = vpop.f32.mrf.mxu0
      %v4168 = vadd.f32 %v3863, %v4167
      %v4169 = vpop.f32.mrf.mxu0
      %v4170 = vpop.f32.mrf.mxu0
      %v4171 = vadd.f32 %v3864, %v4170
      %v4172 = vpop.f32.mrf.mxu0
      %4173 = vmatprep.mubr.bf16.mxu0 0
      %4174 = vmatmul.mubr.bf16.gmra.mxu0 %v4103
      %v4175 = vpop.f32.mrf.mxu0
      %v4176 = vadd.f32 %v3865, %v4175
      %v4177 = vpop.f32.mrf.mxu0
      %v4178 = vpop.f32.mrf.mxu0
      %v4179 = vadd.f32 %v3866, %v4178
      %v4180 = vpop.f32.mrf.mxu0
      %4181 = vdwg.mxu0
      %4182 = vrot.lane.b32.xlu0 %v554, 104
      %v4183 = vpop.permute.xlu0 %4182
      %4184 = vrot.lane.b32.xlu0 %v555, 104
      %v4185 = vpop.permute.xlu0 %4184
      %4186 = vrot.lane.b32.xlu0 %v556, 104
      %v4187 = vpop.permute.xlu0 %4186
      %4188 = vrot.lane.b32.xlu0 %v557, 104
      %v4189 = vpop.permute.xlu0 %4188
      %4190 = vrot.lane.b32.xlu0 %v554, 72
      %v4191 = vpop.permute.xlu0 %4190
      %4192 = vrot.lane.b32.xlu0 %v555, 72
      %v4193 = vpop.permute.xlu0 %4192
      %4194 = vrot.lane.b32.xlu0 %v556, 72
      %v4195 = vpop.permute.xlu0 %4194
      %4196 = vrot.lane.b32.xlu0 %v557, 72
      %v4197 = vpop.permute.xlu0 %4196
      %v4199 = vsel %vm578, %v4183, 0
      %v4202 = vsel %vm578, %v4185, 0
      %v4205 = vsel %vm578, %v4187, 0
      %v4208 = vsel %vm578, %v4189, 0
      %v4211 = vsel %vm578, %v4191, 0
      %v4214 = vsel %vm578, %v4193, 0
      %v4217 = vsel %vm578, %v4195, 0
      %v4220 = vsel %vm578, %v4197, 0
      %4222 = vmatprep.subr.bf16.mxu0 0
      %4223 = vmatpush1.bf16.xpose.msra.mxu0 0
      %4224 = vmatprep.subr.bf16.mxu0 0
      %4225 = vmatpush1.bf16.xpose.msra.mxu0 0
      %4226 = vmatprep.subr.bf16.mxu0 0
      %4227 = vmatpush1.bf16.xpose.msra.mxu0 0
      %4228 = vmatprep.subr.bf16.mxu0 0
      %4229 = vmatpush1.bf16.xpose.msra.mxu0 0
      %4230 = vmatprep.subr.bf16.mxu0 0
      %4231 = vmatpush1.bf16.xpose.msra.mxu0 %v4220
      %4232 = vmatprep.subr.bf16.mxu0 0
      %4233 = vmatpush1.bf16.xpose.msra.mxu0 %v4217
      %4234 = vmatprep.subr.bf16.mxu0 0
      %4235 = vmatpush1.bf16.xpose.msra.mxu0 %v4214
      %4236 = vmatprep.subr.bf16.mxu0 0
      %4237 = vmatpush1.bf16.xpose.msra.mxu0 %v4211
      %4238 = vmatprep.subr.bf16.mxu0 0
      %4239 = vmatpush2.bf16.xpose.msra.mxu0 0
      %4240 = vmatprep.subr.bf16.mxu0 0
      %4241 = vmatpush2.bf16.xpose.msra.mxu0 0
      %4242 = vmatprep.subr.bf16.mxu0 0
      %4243 = vmatpush2.bf16.xpose.msra.mxu0 0
      %4244 = vmatprep.subr.bf16.mxu0 0
      %4245 = vmatpush2.bf16.xpose.msra.mxu0 0
      %4246 = vmatprep.subr.bf16.mxu0 0
      %4247 = vmatpush2.bf16.xpose.msra.mxu0 0
      %4248 = vmatprep.subr.bf16.mxu0 0
      %4249 = vmatpush2.bf16.xpose.msra.mxu0 0
      %4250 = vmatprep.subr.bf16.mxu0 0
      %4251 = vmatpush2.bf16.xpose.msra.mxu0 0
      %4252 = vmatprep.subr.bf16.mxu0 0
      %4253 = vmatpush2.bf16.xpose.msra.mxu0 0
      %4254 = vmatprep.mubr.bf16.mxu0 0
      %4255 = vmatmul.mubr.bf16.gmra.mxu0 %v4199
      %v4256 = vpop.f32.mrf.mxu0
      %v4257 = vadd.f32 %v3859, %v4256
      %v4258 = vpop.f32.mrf.mxu0
      %v4259 = vpop.f32.mrf.mxu0
      %v4260 = vadd.f32 %v3860, %v4259
      %v4261 = vpop.f32.mrf.mxu0
      %4262 = vmatprep.mubr.bf16.mxu0 0
      %4263 = vmatmul.mubr.bf16.gmra.mxu0 %v4202
      %v4264 = vpop.f32.mrf.mxu0
      %v4265 = vadd.f32 %v3861, %v4264
      %v4266 = vpop.f32.mrf.mxu0
      %v4267 = vpop.f32.mrf.mxu0
      %v4268 = vadd.f32 %v3862, %v4267
      %v4269 = vpop.f32.mrf.mxu0
      %4270 = vmatprep.mubr.bf16.mxu0 0
      %4271 = vmatmul.mubr.bf16.gmra.mxu0 %v4205
      %v4272 = vpop.f32.mrf.mxu0
      %v4273 = vadd.f32 %v3863, %v4272
      %v4274 = vpop.f32.mrf.mxu0
      %v4275 = vpop.f32.mrf.mxu0
      %v4276 = vadd.f32 %v3864, %v4275
      %v4277 = vpop.f32.mrf.mxu0
      %4278 = vmatprep.mubr.bf16.mxu0 0
      %4279 = vmatmul.mubr.bf16.gmra.mxu0 %v4208
      %v4280 = vpop.f32.mrf.mxu0
      %v4281 = vadd.f32 %v3865, %v4280
      %v4282 = vpop.f32.mrf.mxu0
      %v4283 = vpop.f32.mrf.mxu0
      %v4284 = vadd.f32 %v3866, %v4283
      %v4285 = vpop.f32.mrf.mxu0
      %4286 = vdwg.mxu0
      %v4287 = vsel %vm971, %v3942, -inf
      %4288 = vmax.xlane.f32.xlu0 %v4287
      %v4289 = vpop.xlane.xlu0 %4288
      %v4290 = vsel %vm971, %v3945, -inf
      %4291 = vmax.xlane.f32.xlu0 %v4290
      %v4292 = vpop.xlane.xlu0 %4291
      %v4293 = vsel %vm971, %v3950, -inf
      %4294 = vmax.xlane.f32.xlu0 %v4293
      %v4295 = vpop.xlane.xlu0 %4294
      %v4296 = vsel %vm971, %v3953, -inf
      %4297 = vmax.xlane.f32.xlu0 %v4296
      %v4298 = vpop.xlane.xlu0 %4297
      %v4299 = vsel %vm971, %v3958, -inf
      %4300 = vmax.xlane.f32.xlu0 %v4299
      %v4301 = vpop.xlane.xlu0 %4300
      %v4302 = vsel %vm971, %v3961, -inf
      %4303 = vmax.xlane.f32.xlu0 %v4302
      %v4304 = vpop.xlane.xlu0 %4303
      %v4305 = vsel %vm971, %v3966, -inf
      %4306 = vmax.xlane.f32.xlu0 %v4305
      %v4307 = vpop.xlane.xlu0 %4306
      %v4308 = vsel %vm971, %v3969, -inf
      %4309 = vmax.xlane.f32.xlu0 %v4308
      %v4310 = vpop.xlane.xlu0 %4309
      %v4311 = vsel %vm971, %v4047, -inf
      %4312 = vmax.xlane.f32.xlu0 %v4311
      %v4313 = vpop.xlane.xlu0 %4312
      %v4314 = vsel %vm971, %v4050, -inf
      %4315 = vmax.xlane.f32.xlu0 %v4314
      %v4316 = vpop.xlane.xlu0 %4315
      %v4317 = vsel %vm971, %v4055, -inf
      %4318 = vmax.xlane.f32.xlu0 %v4317
      %v4319 = vpop.xlane.xlu0 %4318
      %v4320 = vsel %vm971, %v4058, -inf
      %4321 = vmax.xlane.f32.xlu0 %v4320
      %v4322 = vpop.xlane.xlu0 %4321
      %v4323 = vsel %vm971, %v4063, -inf
      %4324 = vmax.xlane.f32.xlu0 %v4323
      %v4325 = vpop.xlane.xlu0 %4324
      %v4326 = vsel %vm971, %v4066, -inf
      %4327 = vmax.xlane.f32.xlu0 %v4326
      %v4328 = vpop.xlane.xlu0 %4327
      %v4329 = vsel %vm971, %v4071, -inf
      %4330 = vmax.xlane.f32.xlu0 %v4329
      %v4331 = vpop.xlane.xlu0 %4330
      %v4332 = vsel %vm971, %v4074, -inf
      %4333 = vmax.xlane.f32.xlu0 %v4332
      %v4334 = vpop.xlane.xlu0 %4333
      %v4335 = vsel %vm971, %v4152, -inf
      %4336 = vmax.xlane.f32.xlu0 %v4335
      %v4337 = vpop.xlane.xlu0 %4336
      %v4338 = vsel %vm971, %v4155, -inf
      %4339 = vmax.xlane.f32.xlu0 %v4338
      %v4340 = vpop.xlane.xlu0 %4339
      %v4341 = vsel %vm971, %v4160, -inf
      %4342 = vmax.xlane.f32.xlu0 %v4341
      %v4343 = vpop.xlane.xlu0 %4342
      %v4344 = vsel %vm971, %v4163, -inf
      %4345 = vmax.xlane.f32.xlu0 %v4344
      %v4346 = vpop.xlane.xlu0 %4345
      %v4347 = vsel %vm971, %v4168, -inf
      %4348 = vmax.xlane.f32.xlu0 %v4347
      %v4349 = vpop.xlane.xlu0 %4348
      %v4350 = vsel %vm971, %v4171, -inf
      %4351 = vmax.xlane.f32.xlu0 %v4350
      %v4352 = vpop.xlane.xlu0 %4351
      %v4353 = vsel %vm971, %v4176, -inf
      %4354 = vmax.xlane.f32.xlu0 %v4353
      %v4355 = vpop.xlane.xlu0 %4354
      %v4356 = vsel %vm971, %v4179, -inf
      %4357 = vmax.xlane.f32.xlu0 %v4356
      %v4358 = vpop.xlane.xlu0 %4357
      %v4359 = vsel %vm971, %v4257, -inf
      %4360 = vmax.xlane.f32.xlu0 %v4359
      %v4361 = vpop.xlane.xlu0 %4360
      %v4362 = vsel %vm971, %v4260, -inf
      %4363 = vmax.xlane.f32.xlu0 %v4362
      %v4364 = vpop.xlane.xlu0 %4363
      %v4365 = vsel %vm971, %v4265, -inf
      %4366 = vmax.xlane.f32.xlu0 %v4365
      %v4367 = vpop.xlane.xlu0 %4366
      %v4368 = vsel %vm971, %v4268, -inf
      %4369 = vmax.xlane.f32.xlu0 %v4368
      %v4370 = vpop.xlane.xlu0 %4369
      %v4371 = vsel %vm971, %v4273, -inf
      %4372 = vmax.xlane.f32.xlu0 %v4371
      %v4373 = vpop.xlane.xlu0 %4372
      %v4374 = vsel %vm971, %v4276, -inf
      %4375 = vmax.xlane.f32.xlu0 %v4374
      %v4376 = vpop.xlane.xlu0 %4375
      %v4377 = vsel %vm971, %v4281, -inf
      %4378 = vmax.xlane.f32.xlu0 %v4377
      %v4379 = vpop.xlane.xlu0 %4378
      %v4380 = vsel %vm971, %v4284, -inf
      %4381 = vmax.xlane.f32.xlu0 %v4380
      %v4382 = vpop.xlane.xlu0 %4381
      %v4383 = vsub.f32 %v3942, %v4289
      %v4384 = vsub.f32 %v3945, %v4292
      %v4385 = vsub.f32 %v3950, %v4295
      %v4386 = vsub.f32 %v3953, %v4298
      %v4387 = vsub.f32 %v3958, %v4301
      %v4388 = vsub.f32 %v3961, %v4304
      %v4389 = vsub.f32 %v3966, %v4307
      %v4390 = vsub.f32 %v3969, %v4310
      %v4391 = vsub.f32 %v4047, %v4313
      %v4392 = vsub.f32 %v4050, %v4316
      %v4393 = vsub.f32 %v4055, %v4319
      %v4394 = vsub.f32 %v4058, %v4322
      %v4395 = vsub.f32 %v4063, %v4325
      %v4396 = vsub.f32 %v4066, %v4328
      %v4397 = vsub.f32 %v4071, %v4331
      %v4398 = vsub.f32 %v4074, %v4334
      %v4399 = vsub.f32 %v4152, %v4337
      %v4400 = vsub.f32 %v4155, %v4340
      %v4401 = vsub.f32 %v4160, %v4343
      %v4402 = vsub.f32 %v4163, %v4346
      %v4403 = vsub.f32 %v4168, %v4349
      %v4404 = vsub.f32 %v4171, %v4352
      %v4405 = vsub.f32 %v4176, %v4355
      %v4406 = vsub.f32 %v4179, %v4358
      %v4407 = vsub.f32 %v4257, %v4361
      %v4408 = vsub.f32 %v4260, %v4364
      %v4409 = vsub.f32 %v4265, %v4367
      %v4410 = vsub.f32 %v4268, %v4370
      %v4411 = vsub.f32 %v4273, %v4373
      %v4412 = vsub.f32 %v4276, %v4376
      %v4413 = vsub.f32 %v4281, %v4379
      %v4414 = vsub.f32 %v4284, %v4382
      %v4415 = vmul.f32 %v4383, 1.442695
      %v4416 = vpow.pop %v4415
      %v4417 = vmul.f32 %v4384, 1.442695
      %v4418 = vpow.pop %v4417
      %v4419 = vmul.f32 %v4385, 1.442695
      %v4420 = vpow.pop %v4419
      %v4421 = vmul.f32 %v4386, 1.442695
      %v4422 = vpow.pop %v4421
      %v4423 = vmul.f32 %v4387, 1.442695
      %v4424 = vpow.pop %v4423
      %v4425 = vmul.f32 %v4388, 1.442695
      %v4426 = vpow.pop %v4425
      %v4427 = vmul.f32 %v4389, 1.442695
      %v4428 = vpow.pop %v4427
      %v4429 = vmul.f32 %v4390, 1.442695
      %v4430 = vpow.pop %v4429
      %v4431 = vmul.f32 %v4391, 1.442695
      %v4432 = vpow.pop %v4431
      %v4433 = vmul.f32 %v4392, 1.442695
      %v4434 = vpow.pop %v4433
      %v4435 = vmul.f32 %v4393, 1.442695
      %v4436 = vpow.pop %v4435
      %v4437 = vmul.f32 %v4394, 1.442695
      %v4438 = vpow.pop %v4437
      %v4439 = vmul.f32 %v4395, 1.442695
      %v4440 = vpow.pop %v4439
      %v4441 = vmul.f32 %v4396, 1.442695
      %v4442 = vpow.pop %v4441
      %v4443 = vmul.f32 %v4397, 1.442695
      %v4444 = vpow.pop %v4443
      %v4445 = vmul.f32 %v4398, 1.442695
      %v4446 = vpow.pop %v4445
      %v4447 = vmul.f32 %v4399, 1.442695
      %v4448 = vpow.pop %v4447
      %v4449 = vmul.f32 %v4400, 1.442695
      %v4450 = vpow.pop %v4449
      %v4451 = vmul.f32 %v4401, 1.442695
      %v4452 = vpow.pop %v4451
      %v4453 = vmul.f32 %v4402, 1.442695
      %v4454 = vpow.pop %v4453
      %v4455 = vmul.f32 %v4403, 1.442695
      %v4456 = vpow.pop %v4455
      %v4457 = vmul.f32 %v4404, 1.442695
      %v4458 = vpow.pop %v4457
      %v4459 = vmul.f32 %v4405, 1.442695
      %v4460 = vpow.pop %v4459
      %v4461 = vmul.f32 %v4406, 1.442695
      %v4462 = vpow.pop %v4461
      %v4463 = vmul.f32 %v4407, 1.442695
      %v4464 = vpow.pop %v4463
      %v4465 = vmul.f32 %v4408, 1.442695
      %v4466 = vpow.pop %v4465
      %v4467 = vmul.f32 %v4409, 1.442695
      %v4468 = vpow.pop %v4467
      %v4469 = vmul.f32 %v4410, 1.442695
      %v4470 = vpow.pop %v4469
      %v4471 = vmul.f32 %v4411, 1.442695
      %v4472 = vpow.pop %v4471
      %v4473 = vmul.f32 %v4412, 1.442695
      %v4474 = vpow.pop %v4473
      %v4475 = vmul.f32 %v4413, 1.442695
      %v4476 = vpow.pop %v4475
      %v4477 = vmul.f32 %v4414, 1.442695
      %v4478 = vpow.pop %v4477
      %v4479 = vsel %vm971, %v4416, 0.0
      %4480 = vadd.xlane.f32.xlu0 %v4479
      %v4481 = vpop.xlane.xlu0 %4480
      %v4482 = vsel %vm971, %v4418, 0.0
      %4483 = vadd.xlane.f32.xlu0 %v4482
      %v4484 = vpop.xlane.xlu0 %4483
      %v4485 = vsel %vm971, %v4420, 0.0
      %4486 = vadd.xlane.f32.xlu0 %v4485
      %v4487 = vpop.xlane.xlu0 %4486
      %v4488 = vsel %vm971, %v4422, 0.0
      %4489 = vadd.xlane.f32.xlu0 %v4488
      %v4490 = vpop.xlane.xlu0 %4489
      %v4491 = vsel %vm971, %v4424, 0.0
      %4492 = vadd.xlane.f32.xlu0 %v4491
      %v4493 = vpop.xlane.xlu0 %4492
      %v4494 = vsel %vm971, %v4426, 0.0
      %4495 = vadd.xlane.f32.xlu0 %v4494
      %v4496 = vpop.xlane.xlu0 %4495
      %v4497 = vsel %vm971, %v4428, 0.0
      %4498 = vadd.xlane.f32.xlu0 %v4497
      %v4499 = vpop.xlane.xlu0 %4498
      %v4500 = vsel %vm971, %v4430, 0.0
      %4501 = vadd.xlane.f32.xlu0 %v4500
      %v4502 = vpop.xlane.xlu0 %4501
      %v4503 = vsel %vm971, %v4432, 0.0
      %4504 = vadd.xlane.f32.xlu0 %v4503
      %v4505 = vpop.xlane.xlu0 %4504
      %v4506 = vsel %vm971, %v4434, 0.0
      %4507 = vadd.xlane.f32.xlu0 %v4506
      %v4508 = vpop.xlane.xlu0 %4507
      %v4509 = vsel %vm971, %v4436, 0.0
      %4510 = vadd.xlane.f32.xlu0 %v4509
      %v4511 = vpop.xlane.xlu0 %4510
      %v4512 = vsel %vm971, %v4438, 0.0
      %4513 = vadd.xlane.f32.xlu0 %v4512
      %v4514 = vpop.xlane.xlu0 %4513
      %v4515 = vsel %vm971, %v4440, 0.0
      %4516 = vadd.xlane.f32.xlu0 %v4515
      %v4517 = vpop.xlane.xlu0 %4516
      %v4518 = vsel %vm971, %v4442, 0.0
      %4519 = vadd.xlane.f32.xlu0 %v4518
      %v4520 = vpop.xlane.xlu0 %4519
      %v4521 = vsel %vm971, %v4444, 0.0
      %4522 = vadd.xlane.f32.xlu0 %v4521
      %v4523 = vpop.xlane.xlu0 %4522
      %v4524 = vsel %vm971, %v4446, 0.0
      %4525 = vadd.xlane.f32.xlu0 %v4524
      %v4526 = vpop.xlane.xlu0 %4525
      %v4527 = vsel %vm971, %v4448, 0.0
      %4528 = vadd.xlane.f32.xlu0 %v4527
      %v4529 = vpop.xlane.xlu0 %4528
      %v4530 = vsel %vm971, %v4450, 0.0
      %4531 = vadd.xlane.f32.xlu0 %v4530
      %v4532 = vpop.xlane.xlu0 %4531
      %v4533 = vsel %vm971, %v4452, 0.0
      %4534 = vadd.xlane.f32.xlu0 %v4533
      %v4535 = vpop.xlane.xlu0 %4534
      %v4536 = vsel %vm971, %v4454, 0.0
      %4537 = vadd.xlane.f32.xlu0 %v4536
      %v4538 = vpop.xlane.xlu0 %4537
      %v4539 = vsel %vm971, %v4456, 0.0
      %4540 = vadd.xlane.f32.xlu0 %v4539
      %v4541 = vpop.xlane.xlu0 %4540
      %v4542 = vsel %vm971, %v4458, 0.0
      %4543 = vadd.xlane.f32.xlu0 %v4542
      %v4544 = vpop.xlane.xlu0 %4543
      %v4545 = vsel %vm971, %v4460, 0.0
      %4546 = vadd.xlane.f32.xlu0 %v4545
      %v4547 = vpop.xlane.xlu0 %4546
      %v4548 = vsel %vm971, %v4462, 0.0
      %4549 = vadd.xlane.f32.xlu0 %v4548
      %v4550 = vpop.xlane.xlu0 %4549
      %v4551 = vsel %vm971, %v4464, 0.0
      %4552 = vadd.xlane.f32.xlu0 %v4551
      %v4553 = vpop.xlane.xlu0 %4552
      %v4554 = vsel %vm971, %v4466, 0.0
      %4555 = vadd.xlane.f32.xlu0 %v4554
      %v4556 = vpop.xlane.xlu0 %4555
      %v4557 = vsel %vm971, %v4468, 0.0
      %4558 = vadd.xlane.f32.xlu0 %v4557
      %v4559 = vpop.xlane.xlu0 %4558
      %v4560 = vsel %vm971, %v4470, 0.0
      %4561 = vadd.xlane.f32.xlu0 %v4560
      %v4562 = vpop.xlane.xlu0 %4561
      %v4563 = vsel %vm971, %v4472, 0.0
      %4564 = vadd.xlane.f32.xlu0 %v4563
      %v4565 = vpop.xlane.xlu0 %4564
      %v4566 = vsel %vm971, %v4474, 0.0
      %4567 = vadd.xlane.f32.xlu0 %v4566
      %v4568 = vpop.xlane.xlu0 %4567
      %v4569 = vsel %vm971, %v4476, 0.0
      %4570 = vadd.xlane.f32.xlu0 %v4569
      %v4571 = vpop.xlane.xlu0 %4570
      %v4572 = vsel %vm971, %v4478, 0.0
      %4573 = vadd.xlane.f32.xlu0 %v4572
      %v4574 = vpop.xlane.xlu0 %4573
      %v4575 = vrcp.pop %v4481
      %v4576 = vrcp.pop %v4484
      %v4577 = vrcp.pop %v4487
      %v4578 = vrcp.pop %v4490
      %v4579 = vrcp.pop %v4493
      %v4580 = vrcp.pop %v4496
      %v4581 = vrcp.pop %v4499
      %v4582 = vrcp.pop %v4502
      %v4583 = vrcp.pop %v4505
      %v4584 = vrcp.pop %v4508
      %v4585 = vrcp.pop %v4511
      %v4586 = vrcp.pop %v4514
      %v4587 = vrcp.pop %v4517
      %v4588 = vrcp.pop %v4520
      %v4589 = vrcp.pop %v4523
      %v4590 = vrcp.pop %v4526
      %v4591 = vrcp.pop %v4529
      %v4592 = vrcp.pop %v4532
      %v4593 = vrcp.pop %v4535
      %v4594 = vrcp.pop %v4538
      %v4595 = vrcp.pop %v4541
      %v4596 = vrcp.pop %v4544
      %v4597 = vrcp.pop %v4547
      %v4598 = vrcp.pop %v4550
      %v4599 = vrcp.pop %v4553
      %v4600 = vrcp.pop %v4556
      %v4601 = vrcp.pop %v4559
      %v4602 = vrcp.pop %v4562
      %v4603 = vrcp.pop %v4565
      %v4604 = vrcp.pop %v4568
      %v4605 = vrcp.pop %v4571
      %v4606 = vrcp.pop %v4574
      %v4607 = vmul.f32 %v4416, %v4575
      %v4608 = vmul.f32 %v4418, %v4576
      %v4609 = vmul.f32 %v4420, %v4577
      %v4610 = vmul.f32 %v4422, %v4578
      %v4611 = vmul.f32 %v4424, %v4579
      %v4612 = vmul.f32 %v4426, %v4580
      %v4613 = vmul.f32 %v4428, %v4581
      %v4614 = vmul.f32 %v4430, %v4582
      %v4615 = vmul.f32 %v4432, %v4583
      %v4616 = vmul.f32 %v4434, %v4584
      %v4617 = vmul.f32 %v4436, %v4585
      %v4618 = vmul.f32 %v4438, %v4586
      %v4619 = vmul.f32 %v4440, %v4587
      %v4620 = vmul.f32 %v4442, %v4588
      %v4621 = vmul.f32 %v4444, %v4589
      %v4622 = vmul.f32 %v4446, %v4590
      %v4623 = vmul.f32 %v4448, %v4591
      %v4624 = vmul.f32 %v4450, %v4592
      %v4625 = vmul.f32 %v4452, %v4593
      %v4626 = vmul.f32 %v4454, %v4594
      %v4627 = vmul.f32 %v4456, %v4595
      %v4628 = vmul.f32 %v4458, %v4596
      %v4629 = vmul.f32 %v4460, %v4597
      %v4630 = vmul.f32 %v4462, %v4598
      %v4631 = vmul.f32 %v4464, %v4599
      %v4632 = vmul.f32 %v4466, %v4600
      %v4633 = vmul.f32 %v4468, %v4601
      %v4634 = vmul.f32 %v4470, %v4602
      %v4635 = vmul.f32 %v4472, %v4603
      %v4636 = vmul.f32 %v4474, %v4604
      %v4637 = vmul.f32 %v4476, %v4605
      %v4638 = vmul.f32 %v4478, %v4606
      %v4639 = vpack.c.bf16 %v4608, %v4607
      %v4640 = vpack.c.bf16 %v4610, %v4609
      %v4641 = vpack.c.bf16 %v4612, %v4611
      %v4642 = vpack.c.bf16 %v4614, %v4613
      %v4643 = vpack.c.bf16 %v4616, %v4615
      %v4644 = vpack.c.bf16 %v4618, %v4617
      %v4645 = vpack.c.bf16 %v4620, %v4619
      %v4646 = vpack.c.bf16 %v4622, %v4621
      %v4647 = vpack.c.bf16 %v4624, %v4623
      %v4648 = vpack.c.bf16 %v4626, %v4625
      %v4649 = vpack.c.bf16 %v4628, %v4627
      %v4650 = vpack.c.bf16 %v4630, %v4629
      %v4651 = vpack.c.bf16 %v4632, %v4631
      %v4652 = vpack.c.bf16 %v4634, %v4633
      %v4653 = vpack.c.bf16 %v4636, %v4635
      %v4654 = vpack.c.bf16 %v4638, %v4637
      %v4656 = vsel %vm971, %v4639, 0
      %v4659 = vsel %vm971, %v4640, 0
      %v4662 = vsel %vm971, %v4641, 0
      %v4665 = vsel %vm971, %v4642, 0
      %4667 = vmatprep.subr.bf16.mxu0 0
      %4668 = vmatpush1.bf16.msra.mxu0 0
      %4669 = vmatprep.subr.bf16.mxu0 0
      %4670 = vmatpush1.bf16.msra.mxu0 0
      %4671 = vmatprep.subr.bf16.mxu0 0
      %4672 = vmatpush1.bf16.msra.mxu0 0
      %4673 = vmatprep.subr.bf16.mxu0 0
      %4674 = vmatpush1.bf16.msra.mxu0 0
      %4675 = vmatprep.subr.bf16.mxu0 0
      %4676 = vmatpush1.bf16.msra.mxu0 %v296
      %4677 = vmatprep.subr.bf16.mxu0 0
      %4678 = vmatpush1.bf16.msra.mxu0 %v295
      %4679 = vmatprep.subr.bf16.mxu0 0
      %4680 = vmatpush1.bf16.msra.mxu0 %v294
      %4681 = vmatprep.subr.bf16.mxu0 0
      %4682 = vmatpush1.bf16.msra.mxu0 %v293
      %4683 = vmatprep.subr.bf16.mxu0 0
      %4684 = vmatpush2.bf16.msra.mxu0 0
      %4685 = vmatprep.subr.bf16.mxu0 0
      %4686 = vmatpush2.bf16.msra.mxu0 0
      %4687 = vmatprep.subr.bf16.mxu0 0
      %4688 = vmatpush2.bf16.msra.mxu0 0
      %4689 = vmatprep.subr.bf16.mxu0 0
      %4690 = vmatpush2.bf16.msra.mxu0 0
      %4691 = vmatprep.subr.bf16.mxu0 0
      %4692 = vmatpush2.bf16.msra.mxu0 0
      %4693 = vmatprep.subr.bf16.mxu0 0
      %4694 = vmatpush2.bf16.msra.mxu0 0
      %4695 = vmatprep.subr.bf16.mxu0 0
      %4696 = vmatpush2.bf16.msra.mxu0 0
      %4697 = vmatprep.subr.bf16.mxu0 0
      %4698 = vmatpush2.bf16.msra.mxu0 0
      %4699 = vmatprep.mubr.bf16.mxu0 0
      %4700 = vmatmul.mubr.bf16.gmra.mxu0 %v4656
      %v4701 = vpop.f32.mrf.mxu0
      %v4702 = vadd.f32 0.0, %v4701
      %v4703 = vpop.f32.mrf.mxu0
      %v4704 = vpop.f32.mrf.mxu0
      %v4705 = vadd.f32 0.0, %v4704
      %v4706 = vpop.f32.mrf.mxu0
      %4707 = vmatprep.mubr.bf16.mxu0 0
      %4708 = vmatmul.mubr.bf16.gmra.mxu0 %v4659
      %v4709 = vpop.f32.mrf.mxu0
      %v4710 = vadd.f32 0.0, %v4709
      %v4711 = vpop.f32.mrf.mxu0
      %v4712 = vpop.f32.mrf.mxu0
      %v4713 = vadd.f32 0.0, %v4712
      %v4714 = vpop.f32.mrf.mxu0
      %4715 = vmatprep.mubr.bf16.mxu0 0
      %4716 = vmatmul.mubr.bf16.gmra.mxu0 %v4662
      %v4717 = vpop.f32.mrf.mxu0
      %v4718 = vadd.f32 0.0, %v4717
      %v4719 = vpop.f32.mrf.mxu0
      %v4720 = vpop.f32.mrf.mxu0
      %v4721 = vadd.f32 0.0, %v4720
      %v4722 = vpop.f32.mrf.mxu0
      %4723 = vmatprep.mubr.bf16.mxu0 0
      %4724 = vmatmul.mubr.bf16.gmra.mxu0 %v4665
      %v4725 = vpop.f32.mrf.mxu0
      %v4726 = vadd.f32 0.0, %v4725
      %v4727 = vpop.f32.mrf.mxu0
      %v4728 = vpop.f32.mrf.mxu0
      %v4729 = vadd.f32 0.0, %v4728
      %v4730 = vpop.f32.mrf.mxu0
      %4731 = vdwg.mxu0
      %v4733 = vsel %vm971, %v4643, 0
      %v4736 = vsel %vm971, %v4644, 0
      %v4739 = vsel %vm971, %v4645, 0
      %v4742 = vsel %vm971, %v4646, 0
      %4744 = vmatprep.subr.bf16.mxu0 0
      %4745 = vmatpush1.bf16.msra.mxu0 0
      %4746 = vmatprep.subr.bf16.mxu0 0
      %4747 = vmatpush1.bf16.msra.mxu0 0
      %4748 = vmatprep.subr.bf16.mxu0 0
      %4749 = vmatpush1.bf16.msra.mxu0 0
      %4750 = vmatprep.subr.bf16.mxu0 0
      %4751 = vmatpush1.bf16.msra.mxu0 0
      %4752 = vmatprep.subr.bf16.mxu0 0
      %4753 = vmatpush1.bf16.msra.mxu0 %v300
      %4754 = vmatprep.subr.bf16.mxu0 0
      %4755 = vmatpush1.bf16.msra.mxu0 %v299
      %4756 = vmatprep.subr.bf16.mxu0 0
      %4757 = vmatpush1.bf16.msra.mxu0 %v298
      %4758 = vmatprep.subr.bf16.mxu0 0
      %4759 = vmatpush1.bf16.msra.mxu0 %v297
      %4760 = vmatprep.subr.bf16.mxu0 0
      %4761 = vmatpush2.bf16.msra.mxu0 0
      %4762 = vmatprep.subr.bf16.mxu0 0
      %4763 = vmatpush2.bf16.msra.mxu0 0
      %4764 = vmatprep.subr.bf16.mxu0 0
      %4765 = vmatpush2.bf16.msra.mxu0 0
      %4766 = vmatprep.subr.bf16.mxu0 0
      %4767 = vmatpush2.bf16.msra.mxu0 0
      %4768 = vmatprep.subr.bf16.mxu0 0
      %4769 = vmatpush2.bf16.msra.mxu0 0
      %4770 = vmatprep.subr.bf16.mxu0 0
      %4771 = vmatpush2.bf16.msra.mxu0 0
      %4772 = vmatprep.subr.bf16.mxu0 0
      %4773 = vmatpush2.bf16.msra.mxu0 0
      %4774 = vmatprep.subr.bf16.mxu0 0
      %4775 = vmatpush2.bf16.msra.mxu0 0
      %4776 = vmatprep.mubr.bf16.mxu0 0
      %4777 = vmatmul.mubr.bf16.gmra.mxu0 %v4733
      %v4778 = vpop.f32.mrf.mxu0
      %v4779 = vadd.f32 0.0, %v4778
      %v4780 = vpop.f32.mrf.mxu0
      %v4781 = vpop.f32.mrf.mxu0
      %v4782 = vadd.f32 0.0, %v4781
      %v4783 = vpop.f32.mrf.mxu0
      %4784 = vmatprep.mubr.bf16.mxu0 0
      %4785 = vmatmul.mubr.bf16.gmra.mxu0 %v4736
      %v4786 = vpop.f32.mrf.mxu0
      %v4787 = vadd.f32 0.0, %v4786
      %v4788 = vpop.f32.mrf.mxu0
      %v4789 = vpop.f32.mrf.mxu0
      %v4790 = vadd.f32 0.0, %v4789
      %v4791 = vpop.f32.mrf.mxu0
      %4792 = vmatprep.mubr.bf16.mxu0 0
      %4793 = vmatmul.mubr.bf16.gmra.mxu0 %v4739
      %v4794 = vpop.f32.mrf.mxu0
      %v4795 = vadd.f32 0.0, %v4794
      %v4796 = vpop.f32.mrf.mxu0
      %v4797 = vpop.f32.mrf.mxu0
      %v4798 = vadd.f32 0.0, %v4797
      %v4799 = vpop.f32.mrf.mxu0
      %4800 = vmatprep.mubr.bf16.mxu0 0
      %4801 = vmatmul.mubr.bf16.gmra.mxu0 %v4742
      %v4802 = vpop.f32.mrf.mxu0
      %v4803 = vadd.f32 0.0, %v4802
      %v4804 = vpop.f32.mrf.mxu0
      %v4805 = vpop.f32.mrf.mxu0
      %v4806 = vadd.f32 0.0, %v4805
      %v4807 = vpop.f32.mrf.mxu0
      %4808 = vdwg.mxu0
      %v4810 = vsel %vm971, %v4647, 0
      %v4813 = vsel %vm971, %v4648, 0
      %v4816 = vsel %vm971, %v4649, 0
      %v4819 = vsel %vm971, %v4650, 0
      %4821 = vmatprep.subr.bf16.mxu0 0
      %4822 = vmatpush1.bf16.msra.mxu0 0
      %4823 = vmatprep.subr.bf16.mxu0 0
      %4824 = vmatpush1.bf16.msra.mxu0 0
      %4825 = vmatprep.subr.bf16.mxu0 0
      %4826 = vmatpush1.bf16.msra.mxu0 0
      %4827 = vmatprep.subr.bf16.mxu0 0
      %4828 = vmatpush1.bf16.msra.mxu0 0
      %4829 = vmatprep.subr.bf16.mxu0 0
      %4830 = vmatpush1.bf16.msra.mxu0 %v304
      %4831 = vmatprep.subr.bf16.mxu0 0
      %4832 = vmatpush1.bf16.msra.mxu0 %v303
      %4833 = vmatprep.subr.bf16.mxu0 0
      %4834 = vmatpush1.bf16.msra.mxu0 %v302
      %4835 = vmatprep.subr.bf16.mxu0 0
      %4836 = vmatpush1.bf16.msra.mxu0 %v301
      %4837 = vmatprep.subr.bf16.mxu0 0
      %4838 = vmatpush2.bf16.msra.mxu0 0
      %4839 = vmatprep.subr.bf16.mxu0 0
      %4840 = vmatpush2.bf16.msra.mxu0 0
      %4841 = vmatprep.subr.bf16.mxu0 0
      %4842 = vmatpush2.bf16.msra.mxu0 0
      %4843 = vmatprep.subr.bf16.mxu0 0
      %4844 = vmatpush2.bf16.msra.mxu0 0
      %4845 = vmatprep.subr.bf16.mxu0 0
      %4846 = vmatpush2.bf16.msra.mxu0 0
      %4847 = vmatprep.subr.bf16.mxu0 0
      %4848 = vmatpush2.bf16.msra.mxu0 0
      %4849 = vmatprep.subr.bf16.mxu0 0
      %4850 = vmatpush2.bf16.msra.mxu0 0
      %4851 = vmatprep.subr.bf16.mxu0 0
      %4852 = vmatpush2.bf16.msra.mxu0 0
      %4853 = vmatprep.mubr.bf16.mxu0 0
      %4854 = vmatmul.mubr.bf16.gmra.mxu0 %v4810
      %v4855 = vpop.f32.mrf.mxu0
      %v4856 = vadd.f32 0.0, %v4855
      %v4857 = vpop.f32.mrf.mxu0
      %v4858 = vpop.f32.mrf.mxu0
      %v4859 = vadd.f32 0.0, %v4858
      %v4860 = vpop.f32.mrf.mxu0
      %4861 = vmatprep.mubr.bf16.mxu0 0
      %4862 = vmatmul.mubr.bf16.gmra.mxu0 %v4813
      %v4863 = vpop.f32.mrf.mxu0
      %v4864 = vadd.f32 0.0, %v4863
      %v4865 = vpop.f32.mrf.mxu0
      %v4866 = vpop.f32.mrf.mxu0
      %v4867 = vadd.f32 0.0, %v4866
      %v4868 = vpop.f32.mrf.mxu0
      %4869 = vmatprep.mubr.bf16.mxu0 0
      %4870 = vmatmul.mubr.bf16.gmra.mxu0 %v4816
      %v4871 = vpop.f32.mrf.mxu0
      %v4872 = vadd.f32 0.0, %v4871
      %v4873 = vpop.f32.mrf.mxu0
      %v4874 = vpop.f32.mrf.mxu0
      %v4875 = vadd.f32 0.0, %v4874
      %v4876 = vpop.f32.mrf.mxu0
      %4877 = vmatprep.mubr.bf16.mxu0 0
      %4878 = vmatmul.mubr.bf16.gmra.mxu0 %v4819
      %v4879 = vpop.f32.mrf.mxu0
      %v4880 = vadd.f32 0.0, %v4879
      %v4881 = vpop.f32.mrf.mxu0
      %v4882 = vpop.f32.mrf.mxu0
      %v4883 = vadd.f32 0.0, %v4882
      %v4884 = vpop.f32.mrf.mxu0
      %4885 = vdwg.mxu0
      %v4887 = vsel %vm971, %v4651, 0
      %v4890 = vsel %vm971, %v4652, 0
      %v4893 = vsel %vm971, %v4653, 0
      %v4896 = vsel %vm971, %v4654, 0
      %4898 = vmatprep.subr.bf16.mxu0 0
      %4899 = vmatpush1.bf16.msra.mxu0 0
      %4900 = vmatprep.subr.bf16.mxu0 0
      %4901 = vmatpush1.bf16.msra.mxu0 0
      %4902 = vmatprep.subr.bf16.mxu0 0
      %4903 = vmatpush1.bf16.msra.mxu0 0
      %4904 = vmatprep.subr.bf16.mxu0 0
      %4905 = vmatpush1.bf16.msra.mxu0 0
      %4906 = vmatprep.subr.bf16.mxu0 0
      %4907 = vmatpush1.bf16.msra.mxu0 %v308
      %4908 = vmatprep.subr.bf16.mxu0 0
      %4909 = vmatpush1.bf16.msra.mxu0 %v307
      %4910 = vmatprep.subr.bf16.mxu0 0
      %4911 = vmatpush1.bf16.msra.mxu0 %v306
      %4912 = vmatprep.subr.bf16.mxu0 0
      %4913 = vmatpush1.bf16.msra.mxu0 %v305
      %4914 = vmatprep.subr.bf16.mxu0 0
      %4915 = vmatpush2.bf16.msra.mxu0 0
      %4916 = vmatprep.subr.bf16.mxu0 0
      %4917 = vmatpush2.bf16.msra.mxu0 0
      %4918 = vmatprep.subr.bf16.mxu0 0
      %4919 = vmatpush2.bf16.msra.mxu0 0
      %4920 = vmatprep.subr.bf16.mxu0 0
      %4921 = vmatpush2.bf16.msra.mxu0 0
      %4922 = vmatprep.subr.bf16.mxu0 0
      %4923 = vmatpush2.bf16.msra.mxu0 0
      %4924 = vmatprep.subr.bf16.mxu0 0
      %4925 = vmatpush2.bf16.msra.mxu0 0
      %4926 = vmatprep.subr.bf16.mxu0 0
      %4927 = vmatpush2.bf16.msra.mxu0 0
      %4928 = vmatprep.subr.bf16.mxu0 0
      %4929 = vmatpush2.bf16.msra.mxu0 0
      %4930 = vmatprep.mubr.bf16.mxu0 0
      %4931 = vmatmul.mubr.bf16.gmra.mxu0 %v4887
      %v4932 = vpop.f32.mrf.mxu0
      %v4933 = vadd.f32 0.0, %v4932
      %v4934 = vpop.f32.mrf.mxu0
      %v4935 = vpop.f32.mrf.mxu0
      %v4936 = vadd.f32 0.0, %v4935
      %v4937 = vpop.f32.mrf.mxu0
      %4938 = vmatprep.mubr.bf16.mxu0 0
      %4939 = vmatmul.mubr.bf16.gmra.mxu0 %v4890
      %v4940 = vpop.f32.mrf.mxu0
      %v4941 = vadd.f32 0.0, %v4940
      %v4942 = vpop.f32.mrf.mxu0
      %v4943 = vpop.f32.mrf.mxu0
      %v4944 = vadd.f32 0.0, %v4943
      %v4945 = vpop.f32.mrf.mxu0
      %4946 = vmatprep.mubr.bf16.mxu0 0
      %4947 = vmatmul.mubr.bf16.gmra.mxu0 %v4893
      %v4948 = vpop.f32.mrf.mxu0
      %v4949 = vadd.f32 0.0, %v4948
      %v4950 = vpop.f32.mrf.mxu0
      %v4951 = vpop.f32.mrf.mxu0
      %v4952 = vadd.f32 0.0, %v4951
      %v4953 = vpop.f32.mrf.mxu0
      %4954 = vmatprep.mubr.bf16.mxu0 0
      %4955 = vmatmul.mubr.bf16.gmra.mxu0 %v4896
      %v4956 = vpop.f32.mrf.mxu0
      %v4957 = vadd.f32 0.0, %v4956
      %v4958 = vpop.f32.mrf.mxu0
      %v4959 = vpop.f32.mrf.mxu0
      %v4960 = vadd.f32 0.0, %v4959
      %v4961 = vpop.f32.mrf.mxu0
      %4962 = vdwg.mxu0
      %4995 = vrot.lane.b32.xlu0 %v2492, 32
      %v4996 = vpop.permute.xlu0 %4995
      %4997 = vrot.lane.b32.xlu0 %v2495, 32
      %v4998 = vpop.permute.xlu0 %4997
      %4999 = vrot.lane.b32.xlu0 %v2500, 32
      %v5000 = vpop.permute.xlu0 %4999
      %5001 = vrot.lane.b32.xlu0 %v2503, 32
      %v5002 = vpop.permute.xlu0 %5001
      %5003 = vrot.lane.b32.xlu0 %v2508, 32
      %v5004 = vpop.permute.xlu0 %5003
      %5005 = vrot.lane.b32.xlu0 %v2511, 32
      %v5006 = vpop.permute.xlu0 %5005
      %5007 = vrot.lane.b32.xlu0 %v2516, 32
      %v5008 = vpop.permute.xlu0 %5007
      %5009 = vrot.lane.b32.xlu0 %v2519, 32
      %v5010 = vpop.permute.xlu0 %5009
      %5011 = vrot.lane.b32.xlu0 %v2569, 32
      %v5012 = vpop.permute.xlu0 %5011
      %5013 = vrot.lane.b32.xlu0 %v2572, 32
      %v5014 = vpop.permute.xlu0 %5013
      %5015 = vrot.lane.b32.xlu0 %v2577, 32
      %v5016 = vpop.permute.xlu0 %5015
      %5017 = vrot.lane.b32.xlu0 %v2580, 32
      %v5018 = vpop.permute.xlu0 %5017
      %5019 = vrot.lane.b32.xlu0 %v2585, 32
      %v5020 = vpop.permute.xlu0 %5019
      %5021 = vrot.lane.b32.xlu0 %v2588, 32
      %v5022 = vpop.permute.xlu0 %5021
      %5023 = vrot.lane.b32.xlu0 %v2593, 32
      %v5024 = vpop.permute.xlu0 %5023
      %5025 = vrot.lane.b32.xlu0 %v2596, 32
      %v5026 = vpop.permute.xlu0 %5025
      %5027 = vrot.lane.b32.xlu0 %v2646, 32
      %v5028 = vpop.permute.xlu0 %5027
      %5029 = vrot.lane.b32.xlu0 %v2649, 32
      %v5030 = vpop.permute.xlu0 %5029
      %5031 = vrot.lane.b32.xlu0 %v2654, 32
      %v5032 = vpop.permute.xlu0 %5031
      %5033 = vrot.lane.b32.xlu0 %v2657, 32
      %v5034 = vpop.permute.xlu0 %5033
      %5035 = vrot.lane.b32.xlu0 %v2662, 32
      %v5036 = vpop.permute.xlu0 %5035
      %5037 = vrot.lane.b32.xlu0 %v2665, 32
      %v5038 = vpop.permute.xlu0 %5037
      %5039 = vrot.lane.b32.xlu0 %v2670, 32
      %v5040 = vpop.permute.xlu0 %5039
      %5041 = vrot.lane.b32.xlu0 %v2673, 32
      %v5042 = vpop.permute.xlu0 %5041
      %5043 = vrot.lane.b32.xlu0 %v2723, 32
      %v5044 = vpop.permute.xlu0 %5043
      %5045 = vrot.lane.b32.xlu0 %v2726, 32
      %v5046 = vpop.permute.xlu0 %5045
      %5047 = vrot.lane.b32.xlu0 %v2731, 32
      %v5048 = vpop.permute.xlu0 %5047
      %5049 = vrot.lane.b32.xlu0 %v2734, 32
      %v5050 = vpop.permute.xlu0 %5049
      %5051 = vrot.lane.b32.xlu0 %v2739, 32
      %v5052 = vpop.permute.xlu0 %5051
      %5053 = vrot.lane.b32.xlu0 %v2742, 32
      %v5054 = vpop.permute.xlu0 %5053
      %5055 = vrot.lane.b32.xlu0 %v2747, 32
      %v5056 = vpop.permute.xlu0 %5055
      %5057 = vrot.lane.b32.xlu0 %v2750, 32
      %v5058 = vpop.permute.xlu0 %5057
      %5123 = vrot.lane.b32.xlu0 %v3597, 64
      %v5124 = vpop.permute.xlu0 %5123
      %5125 = vrot.lane.b32.xlu0 %v3600, 64
      %v5126 = vpop.permute.xlu0 %5125
      %5127 = vrot.lane.b32.xlu0 %v3605, 64
      %v5128 = vpop.permute.xlu0 %5127
      %5129 = vrot.lane.b32.xlu0 %v3608, 64
      %v5130 = vpop.permute.xlu0 %5129
      %5131 = vrot.lane.b32.xlu0 %v3613, 64
      %v5132 = vpop.permute.xlu0 %5131
      %5133 = vrot.lane.b32.xlu0 %v3616, 64
      %v5134 = vpop.permute.xlu0 %5133
      %5135 = vrot.lane.b32.xlu0 %v3621, 64
      %v5136 = vpop.permute.xlu0 %5135
      %5137 = vrot.lane.b32.xlu0 %v3624, 64
      %v5138 = vpop.permute.xlu0 %5137
      %5139 = vrot.lane.b32.xlu0 %v3674, 64
      %v5140 = vpop.permute.xlu0 %5139
      %5141 = vrot.lane.b32.xlu0 %v3677, 64
      %v5142 = vpop.permute.xlu0 %5141
      %5143 = vrot.lane.b32.xlu0 %v3682, 64
      %v5144 = vpop.permute.xlu0 %5143
      %5145 = vrot.lane.b32.xlu0 %v3685, 64
      %v5146 = vpop.permute.xlu0 %5145
      %5147 = vrot.lane.b32.xlu0 %v3690, 64
      %v5148 = vpop.permute.xlu0 %5147
      %5149 = vrot.lane.b32.xlu0 %v3693, 64
      %v5150 = vpop.permute.xlu0 %5149
      %5151 = vrot.lane.b32.xlu0 %v3698, 64
      %v5152 = vpop.permute.xlu0 %5151
      %5153 = vrot.lane.b32.xlu0 %v3701, 64
      %v5154 = vpop.permute.xlu0 %5153
      %5155 = vrot.lane.b32.xlu0 %v3751, 64
      %v5156 = vpop.permute.xlu0 %5155
      %5157 = vrot.lane.b32.xlu0 %v3754, 64
      %v5158 = vpop.permute.xlu0 %5157
      %5159 = vrot.lane.b32.xlu0 %v3759, 64
      %v5160 = vpop.permute.xlu0 %5159
      %5161 = vrot.lane.b32.xlu0 %v3762, 64
      %v5162 = vpop.permute.xlu0 %5161
      %5163 = vrot.lane.b32.xlu0 %v3767, 64
      %v5164 = vpop.permute.xlu0 %5163
      %5165 = vrot.lane.b32.xlu0 %v3770, 64
      %v5166 = vpop.permute.xlu0 %5165
      %5167 = vrot.lane.b32.xlu0 %v3775, 64
      %v5168 = vpop.permute.xlu0 %5167
      %5169 = vrot.lane.b32.xlu0 %v3778, 64
      %v5170 = vpop.permute.xlu0 %5169
      %5171 = vrot.lane.b32.xlu0 %v3828, 64
      %v5172 = vpop.permute.xlu0 %5171
      %5173 = vrot.lane.b32.xlu0 %v3831, 64
      %v5174 = vpop.permute.xlu0 %5173
      %5175 = vrot.lane.b32.xlu0 %v3836, 64
      %v5176 = vpop.permute.xlu0 %5175
      %5177 = vrot.lane.b32.xlu0 %v3839, 64
      %v5178 = vpop.permute.xlu0 %5177
      %5179 = vrot.lane.b32.xlu0 %v3844, 64
      %v5180 = vpop.permute.xlu0 %5179
      %5181 = vrot.lane.b32.xlu0 %v3847, 64
      %v5182 = vpop.permute.xlu0 %5181
      %5183 = vrot.lane.b32.xlu0 %v3852, 64
      %v5184 = vpop.permute.xlu0 %5183
      %5185 = vrot.lane.b32.xlu0 %v3855, 64
      %v5186 = vpop.permute.xlu0 %5185
      %5251 = vrot.lane.b32.xlu0 %v4702, 96
      %v5252 = vpop.permute.xlu0 %5251
      %5253 = vrot.lane.b32.xlu0 %v4705, 96
      %v5254 = vpop.permute.xlu0 %5253
      %5255 = vrot.lane.b32.xlu0 %v4710, 96
      %v5256 = vpop.permute.xlu0 %5255
      %5257 = vrot.lane.b32.xlu0 %v4713, 96
      %v5258 = vpop.permute.xlu0 %5257
      %5259 = vrot.lane.b32.xlu0 %v4718, 96
      %v5260 = vpop.permute.xlu0 %5259
      %5261 = vrot.lane.b32.xlu0 %v4721, 96
      %v5262 = vpop.permute.xlu0 %5261
      %5263 = vrot.lane.b32.xlu0 %v4726, 96
      %v5264 = vpop.permute.xlu0 %5263
      %5265 = vrot.lane.b32.xlu0 %v4729, 96
      %v5266 = vpop.permute.xlu0 %5265
      %5267 = vrot.lane.b32.xlu0 %v4779, 96
      %v5268 = vpop.permute.xlu0 %5267
      %5269 = vrot.lane.b32.xlu0 %v4782, 96
      %v5270 = vpop.permute.xlu0 %5269
      %5271 = vrot.lane.b32.xlu0 %v4787, 96
      %v5272 = vpop.permute.xlu0 %5271
      %5273 = vrot.lane.b32.xlu0 %v4790, 96
      %v5274 = vpop.permute.xlu0 %5273
      %5275 = vrot.lane.b32.xlu0 %v4795, 96
      %v5276 = vpop.permute.xlu0 %5275
      %5277 = vrot.lane.b32.xlu0 %v4798, 96
      %v5278 = vpop.permute.xlu0 %5277
      %5279 = vrot.lane.b32.xlu0 %v4803, 96
      %v5280 = vpop.permute.xlu0 %5279
      %5281 = vrot.lane.b32.xlu0 %v4806, 96
      %v5282 = vpop.permute.xlu0 %5281
      %5283 = vrot.lane.b32.xlu0 %v4856, 96
      %v5284 = vpop.permute.xlu0 %5283
      %5285 = vrot.lane.b32.xlu0 %v4859, 96
      %v5286 = vpop.permute.xlu0 %5285
      %5287 = vrot.lane.b32.xlu0 %v4864, 96
      %v5288 = vpop.permute.xlu0 %5287
      %5289 = vrot.lane.b32.xlu0 %v4867, 96
      %v5290 = vpop.permute.xlu0 %5289
      %5291 = vrot.lane.b32.xlu0 %v4872, 96
      %v5292 = vpop.permute.xlu0 %5291
      %5293 = vrot.lane.b32.xlu0 %v4875, 96
      %v5294 = vpop.permute.xlu0 %5293
      %5295 = vrot.lane.b32.xlu0 %v4880, 96
      %v5296 = vpop.permute.xlu0 %5295
      %5297 = vrot.lane.b32.xlu0 %v4883, 96
      %v5298 = vpop.permute.xlu0 %5297
      %5299 = vrot.lane.b32.xlu0 %v4933, 96
      %v5300 = vpop.permute.xlu0 %5299
      %5301 = vrot.lane.b32.xlu0 %v4936, 96
      %v5302 = vpop.permute.xlu0 %5301
      %5303 = vrot.lane.b32.xlu0 %v4941, 96
      %v5304 = vpop.permute.xlu0 %5303
      %5305 = vrot.lane.b32.xlu0 %v4944, 96
      %v5306 = vpop.permute.xlu0 %5305
      %5307 = vrot.lane.b32.xlu0 %v4949, 96
      %v5308 = vpop.permute.xlu0 %5307
      %5309 = vrot.lane.b32.xlu0 %v4952, 96
      %v5310 = vpop.permute.xlu0 %5309
      %5311 = vrot.lane.b32.xlu0 %v4957, 96
      %v5312 = vpop.permute.xlu0 %5311
      %5313 = vrot.lane.b32.xlu0 %v4960, 96
      %v5314 = vpop.permute.xlu0 %5313
      %v5347 = vsel %vm332, %v1387, %v4996
      %v5348 = vsel %vm332, %v1390, %v4998
      %v5349 = vsel %vm332, %v1395, %v5000
      %v5350 = vsel %vm332, %v1398, %v5002
      %v5351 = vsel %vm332, %v1403, %v5004
      %v5352 = vsel %vm332, %v1406, %v5006
      %v5353 = vsel %vm332, %v1411, %v5008
      %v5354 = vsel %vm332, %v1414, %v5010
      %v5355 = vsel %vm332, %v1464, %v5012
      %v5356 = vsel %vm332, %v1467, %v5014
      %v5357 = vsel %vm332, %v1472, %v5016
      %v5358 = vsel %vm332, %v1475, %v5018
      %v5359 = vsel %vm332, %v1480, %v5020
      %v5360 = vsel %vm332, %v1483, %v5022
      %v5361 = vsel %vm332, %v1488, %v5024
      %v5362 = vsel %vm332, %v1491, %v5026
      %v5363 = vsel %vm332, %v1541, %v5028
      %v5364 = vsel %vm332, %v1544, %v5030
      %v5365 = vsel %vm332, %v1549, %v5032
      %v5366 = vsel %vm332, %v1552, %v5034
      %v5367 = vsel %vm332, %v1557, %v5036
      %v5368 = vsel %vm332, %v1560, %v5038
      %v5369 = vsel %vm332, %v1565, %v5040
      %v5370 = vsel %vm332, %v1568, %v5042
      %v5371 = vsel %vm332, %v1618, %v5044
      %v5372 = vsel %vm332, %v1621, %v5046
      %v5373 = vsel %vm332, %v1626, %v5048
      %v5374 = vsel %vm332, %v1629, %v5050
      %v5375 = vsel %vm332, %v1634, %v5052
      %v5376 = vsel %vm332, %v1637, %v5054
      %v5377 = vsel %vm332, %v1642, %v5056
      %v5378 = vsel %vm332, %v1645, %v5058
      %v5379 = vsel %vm971, %v5347, %v5124
      %v5380 = vsel %vm971, %v5348, %v5126
      %v5381 = vsel %vm971, %v5349, %v5128
      %v5382 = vsel %vm971, %v5350, %v5130
      %v5383 = vsel %vm971, %v5351, %v5132
      %v5384 = vsel %vm971, %v5352, %v5134
      %v5385 = vsel %vm971, %v5353, %v5136
      %v5386 = vsel %vm971, %v5354, %v5138
      %v5387 = vsel %vm971, %v5355, %v5140
      %v5388 = vsel %vm971, %v5356, %v5142
      %v5389 = vsel %vm971, %v5357, %v5144
      %v5390 = vsel %vm971, %v5358, %v5146
      %v5391 = vsel %vm971, %v5359, %v5148
      %v5392 = vsel %vm971, %v5360, %v5150
      %v5393 = vsel %vm971, %v5361, %v5152
      %v5394 = vsel %vm971, %v5362, %v5154
      %v5395 = vsel %vm971, %v5363, %v5156
      %v5396 = vsel %vm971, %v5364, %v5158
      %v5397 = vsel %vm971, %v5365, %v5160
      %v5398 = vsel %vm971, %v5366, %v5162
      %v5399 = vsel %vm971, %v5367, %v5164
      %v5400 = vsel %vm971, %v5368, %v5166
      %v5401 = vsel %vm971, %v5369, %v5168
      %v5402 = vsel %vm971, %v5370, %v5170
      %v5403 = vsel %vm971, %v5371, %v5172
      %v5404 = vsel %vm971, %v5372, %v5174
      %v5405 = vsel %vm971, %v5373, %v5176
      %v5406 = vsel %vm971, %v5374, %v5178
      %v5407 = vsel %vm971, %v5375, %v5180
      %v5408 = vsel %vm971, %v5376, %v5182
      %v5409 = vsel %vm971, %v5377, %v5184
      %v5410 = vsel %vm971, %v5378, %v5186
      %vm5411 = vcmask 785408
      %v5412 = vsel %vm5411, %v5379, %v5252
      %v5413 = vsel %vm5411, %v5380, %v5254
      %v5414 = vsel %vm5411, %v5381, %v5256
      %v5415 = vsel %vm5411, %v5382, %v5258
      %v5416 = vsel %vm5411, %v5383, %v5260
      %v5417 = vsel %vm5411, %v5384, %v5262
      %v5418 = vsel %vm5411, %v5385, %v5264
      %v5419 = vsel %vm5411, %v5386, %v5266
      %v5420 = vsel %vm5411, %v5387, %v5268
      %v5421 = vsel %vm5411, %v5388, %v5270
      %v5422 = vsel %vm5411, %v5389, %v5272
      %v5423 = vsel %vm5411, %v5390, %v5274
      %v5424 = vsel %vm5411, %v5391, %v5276
      %v5425 = vsel %vm5411, %v5392, %v5278
      %v5426 = vsel %vm5411, %v5393, %v5280
      %v5427 = vsel %vm5411, %v5394, %v5282
      %v5428 = vsel %vm5411, %v5395, %v5284
      %v5429 = vsel %vm5411, %v5396, %v5286
      %v5430 = vsel %vm5411, %v5397, %v5288
      %v5431 = vsel %vm5411, %v5398, %v5290
      %v5432 = vsel %vm5411, %v5399, %v5292
      %v5433 = vsel %vm5411, %v5400, %v5294
      %v5434 = vsel %vm5411, %v5401, %v5296
      %v5435 = vsel %vm5411, %v5402, %v5298
      %v5436 = vsel %vm5411, %v5403, %v5300
      %v5437 = vsel %vm5411, %v5404, %v5302
      %v5438 = vsel %vm5411, %v5405, %v5304
      %v5439 = vsel %vm5411, %v5406, %v5306
      %v5440 = vsel %vm5411, %v5407, %v5308
      %v5441 = vsel %vm5411, %v5408, %v5310
      %v5442 = vsel %vm5411, %v5409, %v5312
      %v5443 = vsel %vm5411, %v5410, %v5314
      %v5444 = vpack.c.bf16 %v5413, %v5412
      %v5445 = vpack.c.bf16 %v5415, %v5414
      %v5446 = vpack.c.bf16 %v5417, %v5416
      %v5447 = vpack.c.bf16 %v5419, %v5418
      %v5448 = vpack.c.bf16 %v5421, %v5420
      %v5449 = vpack.c.bf16 %v5423, %v5422
      %v5450 = vpack.c.bf16 %v5425, %v5424
      %v5451 = vpack.c.bf16 %v5427, %v5426
      %v5452 = vpack.c.bf16 %v5429, %v5428
      %v5453 = vpack.c.bf16 %v5431, %v5430
      %v5454 = vpack.c.bf16 %v5433, %v5432
      %v5455 = vpack.c.bf16 %v5435, %v5434
      %v5456 = vpack.c.bf16 %v5437, %v5436
      %v5457 = vpack.c.bf16 %v5439, %v5438
      %v5458 = vpack.c.bf16 %v5441, %v5440
      %v5459 = vpack.c.bf16 %v5443, %v5442
      %v5460 = vld [vmem:[%s4] sm:$0xf]
      %v5461 = vld [vmem:[%s4 + $0x4] sm:$0xf]
      %v5462 = vld [vmem:[%s4 + $0x8] sm:$0xf]
      %v5463 = vld [vmem:[%s4 + $0xc] sm:$0xf]
      %v5464 = vld [vmem:[%s4 + $0x10] sm:$0xf]
      %v5465 = vld [vmem:[%s4 + $0x14] sm:$0xf]
      %v5466 = vld [vmem:[%s4 + $0x18] sm:$0xf]
      %v5467 = vld [vmem:[%s4 + $0x1c] sm:$0xf]
      %v5468 = vld [vmem:[%s4 + $0x20] sm:$0xf]
      %v5469 = vld [vmem:[%s4 + $0x24] sm:$0xf]
      %v5470 = vld [vmem:[%s4 + $0x28] sm:$0xf]
      %v5471 = vld [vmem:[%s4 + $0x2c] sm:$0xf]
      %v5472 = vld [vmem:[%s4 + $0x30] sm:$0xf]
      %v5473 = vld [vmem:[%s4 + $0x34] sm:$0xf]
      %v5474 = vld [vmem:[%s4 + $0x38] sm:$0xf]
      %v5475 = vld [vmem:[%s4 + $0x3c] sm:$0xf]
      %v5476 = vld [vmem:[%s5] sm:$0x1]
      %v5478 = vlaneseq
      %v5479 = vshrl.u32 %v5478, 7
      %v5480 = vsub.s32 0, %v5479
      %v5481 = vrot.slane %v5476, %v5480
      %v5499 = vunpack.c.l.b16 %v5460
      %v5500 = vunpack.c.l.b16 %v5461
      %v5501 = vunpack.c.l.b16 %v5462
      %v5502 = vunpack.c.l.b16 %v5463
      %v5503 = vunpack.c.l.b16 %v5464
      %v5504 = vunpack.c.l.b16 %v5465
      %v5505 = vunpack.c.l.b16 %v5466
      %v5506 = vunpack.c.l.b16 %v5467
      %v5507 = vunpack.c.l.b16 %v5468
      %v5508 = vunpack.c.l.b16 %v5469
      %v5509 = vunpack.c.l.b16 %v5470
      %v5510 = vunpack.c.l.b16 %v5471
      %v5511 = vunpack.c.l.b16 %v5472
      %v5512 = vunpack.c.l.b16 %v5473
      %v5513 = vunpack.c.l.b16 %v5474
      %v5514 = vunpack.c.l.b16 %v5475
      %v5515 = vpack.c.b16 %v5500, %v5499
      %v5516 = vpack.c.b16 %v5502, %v5501
      %v5517 = vpack.c.b16 %v5504, %v5503
      %v5518 = vpack.c.b16 %v5506, %v5505
      %v5519 = vpack.c.b16 %v5508, %v5507
      %v5520 = vpack.c.b16 %v5510, %v5509
      %v5521 = vpack.c.b16 %v5512, %v5511
      %v5522 = vpack.c.b16 %v5514, %v5513
      %5531 = vmatprep.subr.bf16.mxu0 0
      %5532 = vmatpush1.bf16.msra.mxu0 %v5522
      %5533 = vmatprep.subr.bf16.mxu0 0
      %5534 = vmatpush1.bf16.msra.mxu0 %v5521
      %5535 = vmatprep.subr.bf16.mxu0 0
      %5536 = vmatpush1.bf16.msra.mxu0 %v5520
      %5537 = vmatprep.subr.bf16.mxu0 0
      %5538 = vmatpush1.bf16.msra.mxu0 %v5519
      %5539 = vmatprep.subr.bf16.mxu0 0
      %5540 = vmatpush1.bf16.msra.mxu0 %v5518
      %5541 = vmatprep.subr.bf16.mxu0 0
      %5542 = vmatpush1.bf16.msra.mxu0 %v5517
      %5543 = vmatprep.subr.bf16.mxu0 0
      %5544 = vmatpush1.bf16.msra.mxu0 %v5516
      %5545 = vmatprep.subr.bf16.mxu0 0
      %5546 = vmatpush1.bf16.msra.mxu0 %v5515
      %5547 = vmatprep.subr.bf16.mxu0 0
      %5548 = vmatpush2.bf16.msra.mxu0 0
      %5549 = vmatprep.subr.bf16.mxu0 0
      %5550 = vmatpush2.bf16.msra.mxu0 0
      %5551 = vmatprep.subr.bf16.mxu0 0
      %5552 = vmatpush2.bf16.msra.mxu0 0
      %5553 = vmatprep.subr.bf16.mxu0 0
      %5554 = vmatpush2.bf16.msra.mxu0 0
      %5555 = vmatprep.subr.bf16.mxu0 0
      %5556 = vmatpush2.bf16.msra.mxu0 0
      %5557 = vmatprep.subr.bf16.mxu0 0
      %5558 = vmatpush2.bf16.msra.mxu0 0
      %5559 = vmatprep.subr.bf16.mxu0 0
      %5560 = vmatpush2.bf16.msra.mxu0 0
      %5561 = vmatprep.subr.bf16.mxu0 0
      %5562 = vmatpush2.bf16.msra.mxu0 0
      %5563 = vmatprep.mubr.bf16.mxu0 0
      %5564 = vmatmul.mubr.bf16.gmra.mxu0 %v5444
      %v5565 = vpop.f32.mrf.mxu0
      %v5566 = vadd.f32 %v5481, %v5565
      %v5567 = vpop.f32.mrf.mxu0
      %v5568 = vpop.f32.mrf.mxu0
      %v5569 = vadd.f32 %v5481, %v5568
      %v5570 = vpop.f32.mrf.mxu0
      %5571 = vmatprep.mubr.bf16.mxu0 0
      %5572 = vmatmul.mubr.bf16.gmra.mxu0 %v5445
      %v5573 = vpop.f32.mrf.mxu0
      %v5574 = vadd.f32 %v5481, %v5573
      %v5575 = vpop.f32.mrf.mxu0
      %v5576 = vpop.f32.mrf.mxu0
      %v5577 = vadd.f32 %v5481, %v5576
      %v5578 = vpop.f32.mrf.mxu0
      %5579 = vmatprep.mubr.bf16.mxu0 0
      %5580 = vmatmul.mubr.bf16.gmra.mxu0 %v5446
      %v5581 = vpop.f32.mrf.mxu0
      %v5582 = vadd.f32 %v5481, %v5581
      %v5583 = vpop.f32.mrf.mxu0
      %v5584 = vpop.f32.mrf.mxu0
      %v5585 = vadd.f32 %v5481, %v5584
      %v5586 = vpop.f32.mrf.mxu0
      %5587 = vmatprep.mubr.bf16.mxu0 0
      %5588 = vmatmul.mubr.bf16.gmra.mxu0 %v5447
      %v5589 = vpop.f32.mrf.mxu0
      %v5590 = vadd.f32 %v5481, %v5589
      %v5591 = vpop.f32.mrf.mxu0
      %v5592 = vpop.f32.mrf.mxu0
      %v5593 = vadd.f32 %v5481, %v5592
      %v5594 = vpop.f32.mrf.mxu0
      %5595 = vmatprep.mubr.bf16.mxu0 0
      %5596 = vmatmul.mubr.bf16.gmra.mxu0 %v5448
      %v5597 = vpop.f32.mrf.mxu0
      %v5598 = vadd.f32 %v5481, %v5597
      %v5599 = vpop.f32.mrf.mxu0
      %v5600 = vpop.f32.mrf.mxu0
      %v5601 = vadd.f32 %v5481, %v5600
      %v5602 = vpop.f32.mrf.mxu0
      %5603 = vmatprep.mubr.bf16.mxu0 0
      %5604 = vmatmul.mubr.bf16.gmra.mxu0 %v5449
      %v5605 = vpop.f32.mrf.mxu0
      %v5606 = vadd.f32 %v5481, %v5605
      %v5607 = vpop.f32.mrf.mxu0
      %v5608 = vpop.f32.mrf.mxu0
      %v5609 = vadd.f32 %v5481, %v5608
      %v5610 = vpop.f32.mrf.mxu0
      %5611 = vmatprep.mubr.bf16.mxu0 0
      %5612 = vmatmul.mubr.bf16.gmra.mxu0 %v5450
      %v5613 = vpop.f32.mrf.mxu0
      %v5614 = vadd.f32 %v5481, %v5613
      %v5615 = vpop.f32.mrf.mxu0
      %v5616 = vpop.f32.mrf.mxu0
      %v5617 = vadd.f32 %v5481, %v5616
      %v5618 = vpop.f32.mrf.mxu0
      %5619 = vmatprep.mubr.bf16.mxu0 0
      %5620 = vmatmul.mubr.bf16.gmra.mxu0 %v5451
      %v5621 = vpop.f32.mrf.mxu0
      %v5622 = vadd.f32 %v5481, %v5621
      %v5623 = vpop.f32.mrf.mxu0
      %v5624 = vpop.f32.mrf.mxu0
      %v5625 = vadd.f32 %v5481, %v5624
      %v5626 = vpop.f32.mrf.mxu0
      %5627 = vmatprep.mubr.bf16.mxu0 0
      %5628 = vmatmul.mubr.bf16.gmra.mxu0 %v5452
      %v5629 = vpop.f32.mrf.mxu0
      %v5630 = vadd.f32 %v5481, %v5629
      %v5631 = vpop.f32.mrf.mxu0
      %v5632 = vpop.f32.mrf.mxu0
      %v5633 = vadd.f32 %v5481, %v5632
      %v5634 = vpop.f32.mrf.mxu0
      %5635 = vmatprep.mubr.bf16.mxu0 0
      %5636 = vmatmul.mubr.bf16.gmra.mxu0 %v5453
      %v5637 = vpop.f32.mrf.mxu0
      %v5638 = vadd.f32 %v5481, %v5637
      %v5639 = vpop.f32.mrf.mxu0
      %v5640 = vpop.f32.mrf.mxu0
      %v5641 = vadd.f32 %v5481, %v5640
      %v5642 = vpop.f32.mrf.mxu0
      %5643 = vmatprep.mubr.bf16.mxu0 0
      %5644 = vmatmul.mubr.bf16.gmra.mxu0 %v5454
      %v5645 = vpop.f32.mrf.mxu0
      %v5646 = vadd.f32 %v5481, %v5645
      %v5647 = vpop.f32.mrf.mxu0
      %v5648 = vpop.f32.mrf.mxu0
      %v5649 = vadd.f32 %v5481, %v5648
      %v5650 = vpop.f32.mrf.mxu0
      %5651 = vmatprep.mubr.bf16.mxu0 0
      %5652 = vmatmul.mubr.bf16.gmra.mxu0 %v5455
      %v5653 = vpop.f32.mrf.mxu0
      %v5654 = vadd.f32 %v5481, %v5653
      %v5655 = vpop.f32.mrf.mxu0
      %v5656 = vpop.f32.mrf.mxu0
      %v5657 = vadd.f32 %v5481, %v5656
      %v5658 = vpop.f32.mrf.mxu0
      %5659 = vmatprep.mubr.bf16.mxu0 0
      %5660 = vmatmul.mubr.bf16.gmra.mxu0 %v5456
      %v5661 = vpop.f32.mrf.mxu0
      %v5662 = vadd.f32 %v5481, %v5661
      %v5663 = vpop.f32.mrf.mxu0
      %v5664 = vpop.f32.mrf.mxu0
      %v5665 = vadd.f32 %v5481, %v5664
      %v5666 = vpop.f32.mrf.mxu0
      %5667 = vmatprep.mubr.bf16.mxu0 0
      %5668 = vmatmul.mubr.bf16.gmra.mxu0 %v5457
      %v5669 = vpop.f32.mrf.mxu0
      %v5670 = vadd.f32 %v5481, %v5669
      %v5671 = vpop.f32.mrf.mxu0
      %v5672 = vpop.f32.mrf.mxu0
      %v5673 = vadd.f32 %v5481, %v5672
      %v5674 = vpop.f32.mrf.mxu0
      %5675 = vmatprep.mubr.bf16.mxu0 0
      %5676 = vmatmul.mubr.bf16.gmra.mxu0 %v5458
      %v5677 = vpop.f32.mrf.mxu0
      %v5678 = vadd.f32 %v5481, %v5677
      %v5679 = vpop.f32.mrf.mxu0
      %v5680 = vpop.f32.mrf.mxu0
      %v5681 = vadd.f32 %v5481, %v5680
      %v5682 = vpop.f32.mrf.mxu0
      %5683 = vmatprep.mubr.bf16.mxu0 0
      %5684 = vmatmul.mubr.bf16.gmra.mxu0 %v5459
      %v5685 = vpop.f32.mrf.mxu0
      %v5686 = vadd.f32 %v5481, %v5685
      %v5687 = vpop.f32.mrf.mxu0
      %v5688 = vpop.f32.mrf.mxu0
      %v5689 = vadd.f32 %v5481, %v5688
      %v5690 = vpop.f32.mrf.mxu0
      %5691 = vdwg.mxu0
      %5692 = vst.msk [vmem:[%s258] sm:$0xff] %vm332, %v5566
      %5693 = vst.msk [vmem:[%s258 + $0x8] sm:$0xff] %vm332, %v5569
      %5694 = vst.msk [vmem:[%s258 + $0x10] sm:$0xff] %vm332, %v5574
      %5695 = vst.msk [vmem:[%s258 + $0x18] sm:$0xff] %vm332, %v5577
      %5696 = vst.msk [vmem:[%s258 + $0x20] sm:$0xff] %vm332, %v5582
      %5697 = vst.msk [vmem:[%s258 + $0x28] sm:$0xff] %vm332, %v5585
      %5698 = vst.msk [vmem:[%s258 + $0x30] sm:$0xff] %vm332, %v5590
      %5699 = vst.msk [vmem:[%s258 + $0x38] sm:$0xff] %vm332, %v5593
      %5700 = vst.msk [vmem:[%s258 + $0x40] sm:$0xff] %vm332, %v5598
      %5701 = vst.msk [vmem:[%s258 + $0x48] sm:$0xff] %vm332, %v5601
      %5702 = vst.msk [vmem:[%s258 + $0x50] sm:$0xff] %vm332, %v5606
      %5703 = vst.msk [vmem:[%s258 + $0x58] sm:$0xff] %vm332, %v5609
      %5704 = vst.msk [vmem:[%s258 + $0x60] sm:$0xff] %vm332, %v5614
      %5705 = vst.msk [vmem:[%s258 + $0x68] sm:$0xff] %vm332, %v5617
      %5706 = vst.msk [vmem:[%s258 + $0x70] sm:$0xff] %vm332, %v5622
      %5707 = vst.msk [vmem:[%s258 + $0x78] sm:$0xff] %vm332, %v5625
      %5708 = vst.msk [vmem:[%s258 + $0x80] sm:$0xff] %vm332, %v5630
      %5709 = vst.msk [vmem:[%s258 + $0x88] sm:$0xff] %vm332, %v5633
      %5710 = vst.msk [vmem:[%s258 + $0x90] sm:$0xff] %vm332, %v5638
      %5711 = vst.msk [vmem:[%s258 + $0x98] sm:$0xff] %vm332, %v5641
      %5712 = vst.msk [vmem:[%s258 + $0xa0] sm:$0xff] %vm332, %v5646
      %5713 = vst.msk [vmem:[%s258 + $0xa8] sm:$0xff] %vm332, %v5649
      %5714 = vst.msk [vmem:[%s258 + $0xb0] sm:$0xff] %vm332, %v5654
      %5715 = vst.msk [vmem:[%s258 + $0xb8] sm:$0xff] %vm332, %v5657
      %5716 = vst.msk [vmem:[%s258 + $0xc0] sm:$0xff] %vm332, %v5662
      %5717 = vst.msk [vmem:[%s258 + $0xc8] sm:$0xff] %vm332, %v5665
      %5718 = vst.msk [vmem:[%s258 + $0xd0] sm:$0xff] %vm332, %v5670
      %5719 = vst.msk [vmem:[%s258 + $0xd8] sm:$0xff] %vm332, %v5673
      %5720 = vst.msk [vmem:[%s258 + $0xe0] sm:$0xff] %vm332, %v5678
      %5721 = vst.msk [vmem:[%s258 + $0xe8] sm:$0xff] %vm332, %v5681
      %5722 = vst.msk [vmem:[%s258 + $0xf0] sm:$0xff] %vm332, %v5686
      %5723 = vst.msk [vmem:[%s258 + $0xf8] sm:$0xff] %vm332, %v5689
      %s5724 = smul.u32 4, %s17
      %p5725 = scmp.lt.s32.totalorder %s5724, 7
      %s5726 = scalar_select %p5725, %s5724, 7
      %s5727 = smul.addr %s5726, 8
      %s5728 = smul.addr %s5727, 8
      %s5729 = scalar_lea.vmem %s6, %s5728
      // Predicated region
      $region45: #{efficient_window_attention_3d.1} parent=43 // pred_check
        %p5730 = pneg %p166
      $region46: #{efficient_window_attention_3d.1} parent=43 // pred_check_branch
        %5732 = sbr.rel (%p5730) target = $region48
      $region47: #{efficient_window_attention_3d.1} parent=43 // pred_region
        %s5733 = smul.u32 4, %s17
      $region48: #{efficient_window_attention_3d.1} parent=43 // pred_fallthru
        _
    $region44: #{efficient_window_attention_3d.1} parent=5 // pred_fallthru
      _
    %p5734 = scmp.le.s32.totalorder 2, %s12
    // Predicated region
    $region49: #{efficient_window_attention_3d.1} parent=5 // pred_check
      %p5735 = pneg %p5734
    $region50: #{efficient_window_attention_3d.1} parent=5 // pred_check_branch
      %5737 = sbr.rel (%p5735) target = $region52
    $region51: #{efficient_window_attention_3d.1} parent=5 // pred_region
      %s5738 = ssub.s32 %s12, 2
      // Predicated region
      $region53: #{efficient_window_attention_3d.1} parent=51 // pred_check
        %p5739 = pneg %p172
      $region54: #{efficient_window_attention_3d.1} parent=51 // pred_check_branch
        %5741 = sbr.rel (%p5739) target = $region56
      $region55: #{efficient_window_attention_3d.1} parent=51 // pred_region
        %s5742 = smul.u32 4, %s18
        %p5743 = scmp.lt.s32.totalorder %s5742, 7
        %s5744 = scalar_select %p5743, %s5742, 7
        %s5745 = smul.addr %s5744, 8
        %s5746 = smul.addr %s5745, 8
        %s5747 = scalar_lea.vmem %s6, %s5746
      $region56: #{efficient_window_attention_3d.1} parent=51 // pred_fallthru
        _
    $region52: #{efficient_window_attention_3d.1} parent=5 // pred_fallthru
      _
  $region6: #{efficient_window_attention_3d.1} parent=0 // loop_footer
    %s16 = sadd.s32 1, %s12
  $region7: #{efficient_window_attention_3d.1} parent=0 // loop_footer_branch
    %11 = sbr.rel target = $region3
  $region8: #{efficient_window_attention_3d.1} parent=0 // loop_exit
    _

</llo_original>
